<compile_context>
chip_gen: v6e
topology: v6e:2x2x1
jax: 0.10.0
libtpu: 0.0.40
codegen_flags: <defaults>
</compile_context>

<pallas_src>
import functools

import jax
import jax.numpy as jnp
from jax.experimental import pallas as pl
from jax.experimental.pallas import tpu as pltpu

EPS = 1e-6  # matches the vnn reference EPS


# ---------------------------------------------------------------------------
# In-kernel Vector-Neuron primitives on a [C, 3*N] tile (3-vector on the lane axis,
# component-major: lanes [d*N:(d+1)*N] hold vector component d).
# ---------------------------------------------------------------------------
def _vn_leaky_relu(w_dir, x, n_pts, negative_slope):
    """Vector-Neuron LeakyReLU (share_nonlinearity=False)."""
    d = jnp.dot(w_dir, x, preferred_element_type=jnp.float32)        # [C, 3N]
    x0, x1, x2 = x[:, :n_pts], x[:, n_pts:2 * n_pts], x[:, 2 * n_pts:]
    d0, d1, d2 = d[:, :n_pts], d[:, n_pts:2 * n_pts], d[:, 2 * n_pts:]
    dot = x0 * d0 + x1 * d1 + x2 * d2                                 # [C, N]
    dsq = d0 * d0 + d1 * d1 + d2 * d2 + EPS                           # [C, N]
    # where(dot>=0, x, x - (dot/dsq)*d)  ==  x - coef*d  with coef = dot/dsq gated on dot<0.
    coef = jnp.where(dot < 0, dot * pl.reciprocal(dsq, approx=False), 0.0)
    coef3 = jnp.concatenate([coef, coef, coef], axis=1)               # [C, 3N]
    out = x - coef3 * d
    if negative_slope != 0.0:
        out = negative_slope * x + (1.0 - negative_slope) * out
    return out


def _vn_resnet_block(x, wa0, wf0, wa1, wf1, wsc, n_pts, negative_slope):
    net = _vn_leaky_relu(wa0, x, n_pts, negative_slope)                   # actvn0
    net = jnp.dot(wf0, net, preferred_element_type=jnp.float32)           # fc0
    net = _vn_leaky_relu(wa1, net, n_pts, negative_slope)                 # actvn1
    dx = jnp.dot(wf1, net, preferred_element_type=jnp.float32)            # fc1
    x_s = (jnp.dot(wsc, x, preferred_element_type=jnp.float32)
           if wsc is not None else x)                                     # shortcut
    return x_s + dx


def _mean_pool_cat(net, n_pts):
    """torch: pooled = mean over points (keepdim) expanded; cat([net, pooled], dim=1)."""
    c = net.shape[0]
    m0 = jnp.mean(net[:, :n_pts], axis=1, keepdims=True)
    m1 = jnp.mean(net[:, n_pts:2 * n_pts], axis=1, keepdims=True)
    m2 = jnp.mean(net[:, 2 * n_pts:], axis=1, keepdims=True)
    pooled = jnp.concatenate([jnp.broadcast_to(m0, (c, n_pts)),
                              jnp.broadcast_to(m1, (c, n_pts)),
                              jnp.broadcast_to(m2, (c, n_pts))], axis=1)
    return jnp.concatenate([net, pooled], axis=0)                      # channels: [net | pooled]


# ---------------------------------------------------------------------------
# One fused kernel: the whole VNResnetPointnet forward for one batch element.
# ---------------------------------------------------------------------------
def _fused_forward_kernel(has_shortcut, negative_slope, n_pts, x_ref, *refs):
    o_ref = refs[-1]
    w_refs = refs[:-1]
    net = x_ref[...].astype(jnp.float32)                              # [C_in, 3N]
    wi = 0
    n_blocks = len(has_shortcut)
    for i, has_sc in enumerate(has_shortcut):                         # unrolled at trace time
        wa0 = w_refs[wi][...]
        wf0 = w_refs[wi + 1][...]
        wa1 = w_refs[wi + 2][...]
        wf1 = w_refs[wi + 3][...]
        wi += 4
        wsc = None
        if has_sc:
            wsc = w_refs[wi][...]
            wi += 1
        net = _vn_resnet_block(net, wa0, wf0, wa1, wf1, wsc, n_pts, negative_slope)
        if i < n_blocks - 1:
            net = _mean_pool_cat(net, n_pts)
    o_ref[...] = net.astype(o_ref.dtype)


def vn_resnet_pointnet_forward(params, x, *, negative_slope=0.0):
    """x: PyTorch layout [B, 2*channels[0], 3, N] -> [B, channels[-1], 3, N]."""
    B, c_in, three, N = x.shape
    assert three == 3
    x_flat = x.reshape(B, c_in, 3 * N)   # free reshape: 3-vector flattened onto lanes

    weights, has_sc = [], []
    for p in params:
        weights += [p["wa0"], p["wf0"], p["wa1"], p["wf1"]]
        if p["wsc"] is not None:
            weights.append(p["wsc"])
        has_sc.append(p["wsc"] is not None)
    c_out = params[-1]["wf1"].shape[0]

    # TODO(synk): for very large point clouds (full-N activations no longer VMEM-resident
    # per batch element), tile the point axis and carry the per-block pooled mean across
    # grid steps instead of holding the whole point cloud in one block.
    out_flat = pl.pallas_call(
        functools.partial(_fused_forward_kernel, tuple(has_sc), negative_slope, N),
        out_shape=jax.ShapeDtypeStruct((B, c_out, 3 * N), x.dtype),
        grid=(B,),
        in_specs=[pl.BlockSpec((None, c_in, 3 * N), lambda b: (b, 0, 0))]
                + [pl.BlockSpec(w.shape, lambda b: (0, 0)) for w in weights],
        out_specs=pl.BlockSpec((None, c_out, 3 * N), lambda b: (b, 0, 0)),
        compiler_params=pltpu.CompilerParams(dimension_semantics=("parallel",)),
    )(x_flat, *weights)
    return out_flat.reshape(B, c_out, 3, N)


# ---------------------------------------------------------------------------
# Parameters (deterministic, synthetic). zero_init_fc1=True matches the PyTorch
# nn.init.zeros_(fc1.map_to_feat.weight) at-init behavior.
# ---------------------------------------------------------------------------
def init_vn_resnet_pointnet_params(key, channels, *, zero_init_fc1=True):
    params = []
    for in_dim, out_dim in zip(channels[:-1], channels[1:]):
        size_in = 2 * in_dim
        size_out = out_dim
        size_h = min(size_in, size_out)
        key, k0, k1, k2, k3, k4 = jax.random.split(key, 6)

        def lin(k, fan_out, fan_in):
            scale = 1.0 / jnp.sqrt(jnp.float32(fan_in))
            return jax.random.uniform(k, (fan_out, fan_in), jnp.float32, -scale, scale)

        wf1 = (jnp.zeros((size_out, size_h), jnp.float32) if zero_init_fc1
               else lin(k3, size_out, size_h))
        params.append(dict(
            wa0=lin(k0, size_in, size_in),    # actvn0.map_to_dir
            wf0=lin(k1, size_h, size_in),     # fc0.map_to_feat
            wa1=lin(k2, size_h, size_h),      # actvn1.map_to_dir
            wf1=wf1,                          # fc1.map_to_feat (zeros_ in PyTorch)
            wsc=(lin(k4, size_out, size_in)   # shortcut.map_to_feat (if size_in != size_out)
                 if size_in != size_out else None),
        ))
    return params


# ---------------------------------------------------------------------------
# Pure-JAX reference (PyTorch [B, C, 3, N] layout) for correctness checking.
# ---------------------------------------------------------------------------
def _ref_vn_linear(w, x):
    return jnp.einsum("oi,bidn->bodn", w, x)


def _ref_vn_leaky_relu(w, x, slope):
    d = _ref_vn_linear(w, x)
    dot = jnp.sum(x * d, axis=2, keepdims=True)
    dsq = jnp.sum(d * d, axis=2, keepdims=True) + EPS
    mask = (dot >= 0).astype(x.dtype)
    proj = x - (dot / dsq) * d
    return slope * x + (1.0 - slope) * (mask * x + (1.0 - mask) * proj)


def vn_resnet_pointnet_reference(params, x, *, negative_slope=0.0):
    net = x
    for i, p in enumerate(params):
        h = _ref_vn_leaky_relu(p["wa0"], net, negative_slope)
        h = _ref_vn_linear(p["wf0"], h)
        h = _ref_vn_leaky_relu(p["wa1"], h, negative_slope)
        dx = _ref_vn_linear(p["wf1"], h)
        x_s = _ref_vn_linear(p["wsc"], net) if p["wsc"] is not None else net
        net = x_s + dx
        if i < len(params) - 1:
            pooled = jnp.broadcast_to(jnp.mean(net, axis=3, keepdims=True), net.shape)
            net = jnp.concatenate([net, pooled], axis=1)
    return net


if __name__ == "__main__":
    key = jax.random.PRNGKey(0)
    channels = [4, 8, 8, 16]          # 3 blocks: 8->8 (no shortcut), 16->8 (shortcut), 16->16
    B, N = 2, 256                     # batch, number of points (multiple of 128 for lane alignment)
    k_params, k_x = jax.random.split(key)
    # zero_init_fc1=False so the numerical check exercises the full residual branch;
    # pass zero_init_fc1=True to exactly match the PyTorch module at initialization.
    params = init_vn_resnet_pointnet_params(k_params, channels, zero_init_fc1=False)
    x = jax.random.normal(k_x, (B, 2 * channels[0], 3, N), jnp.float32)

    fwd = jax.jit(vn_resnet_pointnet_forward)
    out = jax.block_until_ready(fwd(params, x))
    assert out.shape == (B, channels[-1], 3, N), out.shape
    assert out.dtype == jnp.float32

    ref = vn_resnet_pointnet_reference(params, x)
    assert jnp.allclose(out, ref, rtol=1e-4, atol=1e-4), \
        float(jnp.max(jnp.abs(out - ref)))
    print("KERNEL_OK")
</pallas_src>

<mosaic_0001>
module attributes {stable_mosaic.version = 11 : i64} {
  func.func @_fused_forward_kernel(%arg0: i32, %arg1: memref<1x8x768xf32, #tpu.memory_space<vmem>>, %arg2: memref<8x8xf32, #tpu.memory_space<vmem>>, %arg3: memref<8x8xf32, #tpu.memory_space<vmem>>, %arg4: memref<8x8xf32, #tpu.memory_space<vmem>>, %arg5: memref<8x8xf32, #tpu.memory_space<vmem>>, %arg6: memref<16x16xf32, #tpu.memory_space<vmem>>, %arg7: memref<8x16xf32, #tpu.memory_space<vmem>>, %arg8: memref<8x8xf32, #tpu.memory_space<vmem>>, %arg9: memref<8x8xf32, #tpu.memory_space<vmem>>, %arg10: memref<8x16xf32, #tpu.memory_space<vmem>>, %arg11: memref<16x16xf32, #tpu.memory_space<vmem>>, %arg12: memref<16x16xf32, #tpu.memory_space<vmem>>, %arg13: memref<16x16xf32, #tpu.memory_space<vmem>>, %arg14: memref<16x16xf32, #tpu.memory_space<vmem>>, %arg15: memref<1x16x768xf32, #tpu.memory_space<vmem>>) attributes {dimension_semantics = [#tpu.dimension_semantics<parallel>], iteration_bounds = array<i64: 2>, scalar_prefetch = 0 : i64, scratch_operands = 0 : i64, tpu.core_type = #tpu.core_type<tc>, window_params = [{transform_indices = @transform_0, window_bounds = array<i64: 1, 8, 768>}, {pipeline_mode = #tpu.pipeline_mode<synchronous>, transform_indices = @transform_1, window_bounds = array<i64: 8, 8>}, {pipeline_mode = #tpu.pipeline_mode<synchronous>, transform_indices = @transform_2, window_bounds = array<i64: 8, 8>}, {pipeline_mode = #tpu.pipeline_mode<synchronous>, transform_indices = @transform_3, window_bounds = array<i64: 8, 8>}, {pipeline_mode = #tpu.pipeline_mode<synchronous>, transform_indices = @transform_4, window_bounds = array<i64: 8, 8>}, {pipeline_mode = #tpu.pipeline_mode<synchronous>, transform_indices = @transform_5, window_bounds = array<i64: 16, 16>}, {pipeline_mode = #tpu.pipeline_mode<synchronous>, transform_indices = @transform_6, window_bounds = array<i64: 8, 16>}, {pipeline_mode = #tpu.pipeline_mode<synchronous>, transform_indices = @transform_7, window_bounds = array<i64: 8, 8>}, {pipeline_mode = #tpu.pipeline_mode<synchronous>, transform_indices = @transform_8, window_bounds = array<i64: 8, 8>}, {pipeline_mode = #tpu.pipeline_mode<synchronous>, transform_indices = @transform_9, window_bounds = array<i64: 8, 16>}, {pipeline_mode = #tpu.pipeline_mode<synchronous>, transform_indices = @transform_10, window_bounds = array<i64: 16, 16>}, {pipeline_mode = #tpu.pipeline_mode<synchronous>, transform_indices = @transform_11, window_bounds = array<i64: 16, 16>}, {pipeline_mode = #tpu.pipeline_mode<synchronous>, transform_indices = @transform_12, window_bounds = array<i64: 16, 16>}, {pipeline_mode = #tpu.pipeline_mode<synchronous>, transform_indices = @transform_13, window_bounds = array<i64: 16, 16>}, {transform_indices = @transform_14, window_bounds = array<i64: 1, 16, 768>}]} {
    %c0 = arith.constant 0 : index
    %c0_0 = arith.constant 0 : index
    %c0_1 = arith.constant 0 : index
    %0 = vector.load %arg1[%c0, %c0_0, %c0_1] : memref<1x8x768xf32, #tpu.memory_space<vmem>>, vector<1x8x768xf32>
    %1 = vector.shape_cast %0 : vector<1x8x768xf32> to vector<8x768xf32>
    %c0_2 = arith.constant 0 : index
    %c0_3 = arith.constant 0 : index
    %2 = vector.load %arg2[%c0_2, %c0_3] : memref<8x8xf32, #tpu.memory_space<vmem>>, vector<8x8xf32>
    %c0_4 = arith.constant 0 : index
    %c0_5 = arith.constant 0 : index
    %3 = vector.load %arg3[%c0_4, %c0_5] : memref<8x8xf32, #tpu.memory_space<vmem>>, vector<8x8xf32>
    %c0_6 = arith.constant 0 : index
    %c0_7 = arith.constant 0 : index
    %4 = vector.load %arg4[%c0_6, %c0_7] : memref<8x8xf32, #tpu.memory_space<vmem>>, vector<8x8xf32>
    %c0_8 = arith.constant 0 : index
    %c0_9 = arith.constant 0 : index
    %5 = vector.load %arg5[%c0_8, %c0_9] : memref<8x8xf32, #tpu.memory_space<vmem>>, vector<8x8xf32>
    %cst = arith.constant dense<0.000000e+00> : vector<8x768xf32>
    %6 = tpu.matmul %2, %1, %cst {dimension_numbers = #tpu.dot_dimension_numbers<[1], [0], [0], [1], [0, 0, 1, 1], [], []>} : vector<8x8xf32>, vector<8x768xf32>, vector<8x768xf32> -> vector<8x768xf32>
    %7 = vector.extract_strided_slice %1 {offsets = [0, 0], sizes = [8, 256], strides = [1, 1]} : vector<8x768xf32> to vector<8x256xf32>
    %8 = vector.extract_strided_slice %1 {offsets = [0, 256], sizes = [8, 256], strides = [1, 1]} : vector<8x768xf32> to vector<8x256xf32>
    %9 = vector.extract_strided_slice %1 {offsets = [0, 512], sizes = [8, 256], strides = [1, 1]} : vector<8x768xf32> to vector<8x256xf32>
    %10 = vector.extract_strided_slice %6 {offsets = [0, 0], sizes = [8, 256], strides = [1, 1]} : vector<8x768xf32> to vector<8x256xf32>
    %11 = vector.extract_strided_slice %6 {offsets = [0, 256], sizes = [8, 256], strides = [1, 1]} : vector<8x768xf32> to vector<8x256xf32>
    %12 = vector.extract_strided_slice %6 {offsets = [0, 512], sizes = [8, 256], strides = [1, 1]} : vector<8x768xf32> to vector<8x256xf32>
    %13 = arith.mulf %7, %10 : vector<8x256xf32>
    %14 = arith.mulf %8, %11 : vector<8x256xf32>
    %15 = arith.addf %13, %14 : vector<8x256xf32>
    %16 = arith.mulf %9, %12 : vector<8x256xf32>
    %17 = arith.addf %15, %16 : vector<8x256xf32>
    %18 = arith.mulf %10, %10 : vector<8x256xf32>
    %19 = arith.mulf %11, %11 : vector<8x256xf32>
    %20 = arith.addf %18, %19 : vector<8x256xf32>
    %21 = arith.mulf %12, %12 : vector<8x256xf32>
    %22 = arith.addf %20, %21 : vector<8x256xf32>
    %cst_10 = arith.constant 9.99999997E-7 : f32
    %23 = vector.broadcast %cst_10 : f32 to vector<8x256xf32>
    %24 = arith.addf %22, %23 : vector<8x256xf32>
    %cst_11 = arith.constant 0.000000e+00 : f32
    %25 = vector.broadcast %cst_11 : f32 to vector<8x256xf32>
    %26 = arith.cmpf olt, %17, %25 : vector<8x256xf32>
    %27 = tpu.reciprocal %24 : vector<8x256xf32> -> vector<8x256xf32>
    %28 = arith.mulf %17, %27 : vector<8x256xf32>
    %cst_12 = arith.constant 0.000000e+00 : f32
    %29 = vector.broadcast %cst_12 : f32 to vector<8x256xf32>
    %30 = arith.select %26, %28, %29 : vector<8x256xi1>, vector<8x256xf32>
    %31 = tpu.concatenate %30, %30, %30 in 1 : vector<8x256xf32>, vector<8x256xf32>, vector<8x256xf32> -> vector<8x768xf32>
    %32 = arith.mulf %31, %6 : vector<8x768xf32>
    %33 = arith.subf %1, %32 : vector<8x768xf32>
    %cst_13 = arith.constant dense<0.000000e+00> : vector<8x768xf32>
    %34 = tpu.matmul %3, %33, %cst_13 {dimension_numbers = #tpu.dot_dimension_numbers<[1], [0], [0], [1], [0, 0, 1, 1], [], []>} : vector<8x8xf32>, vector<8x768xf32>, vector<8x768xf32> -> vector<8x768xf32>
    %cst_14 = arith.constant dense<0.000000e+00> : vector<8x768xf32>
    %35 = tpu.matmul %4, %34, %cst_14 {dimension_numbers = #tpu.dot_dimension_numbers<[1], [0], [0], [1], [0, 0, 1, 1], [], []>} : vector<8x8xf32>, vector<8x768xf32>, vector<8x768xf32> -> vector<8x768xf32>
    %36 = vector.extract_strided_slice %34 {offsets = [0, 0], sizes = [8, 256], strides = [1, 1]} : vector<8x768xf32> to vector<8x256xf32>
    %37 = vector.extract_strided_slice %34 {offsets = [0, 256], sizes = [8, 256], strides = [1, 1]} : vector<8x768xf32> to vector<8x256xf32>
    %38 = vector.extract_strided_slice %34 {offsets = [0, 512], sizes = [8, 256], strides = [1, 1]} : vector<8x768xf32> to vector<8x256xf32>
    %39 = vector.extract_strided_slice %35 {offsets = [0, 0], sizes = [8, 256], strides = [1, 1]} : vector<8x768xf32> to vector<8x256xf32>
    %40 = vector.extract_strided_slice %35 {offsets = [0, 256], sizes = [8, 256], strides = [1, 1]} : vector<8x768xf32> to vector<8x256xf32>
    %41 = vector.extract_strided_slice %35 {offsets = [0, 512], sizes = [8, 256], strides = [1, 1]} : vector<8x768xf32> to vector<8x256xf32>
    %42 = arith.mulf %36, %39 : vector<8x256xf32>
    %43 = arith.mulf %37, %40 : vector<8x256xf32>
    %44 = arith.addf %42, %43 : vector<8x256xf32>
    %45 = arith.mulf %38, %41 : vector<8x256xf32>
    %46 = arith.addf %44, %45 : vector<8x256xf32>
    %47 = arith.mulf %39, %39 : vector<8x256xf32>
    %48 = arith.mulf %40, %40 : vector<8x256xf32>
    %49 = arith.addf %47, %48 : vector<8x256xf32>
    %50 = arith.mulf %41, %41 : vector<8x256xf32>
    %51 = arith.addf %49, %50 : vector<8x256xf32>
    %cst_15 = arith.constant 9.99999997E-7 : f32
    %52 = vector.broadcast %cst_15 : f32 to vector<8x256xf32>
    %53 = arith.addf %51, %52 : vector<8x256xf32>
    %cst_16 = arith.constant 0.000000e+00 : f32
    %54 = vector.broadcast %cst_16 : f32 to vector<8x256xf32>
    %55 = arith.cmpf olt, %46, %54 : vector<8x256xf32>
    %56 = tpu.reciprocal %53 : vector<8x256xf32> -> vector<8x256xf32>
    %57 = arith.mulf %46, %56 : vector<8x256xf32>
    %cst_17 = arith.constant 0.000000e+00 : f32
    %58 = vector.broadcast %cst_17 : f32 to vector<8x256xf32>
    %59 = arith.select %55, %57, %58 : vector<8x256xi1>, vector<8x256xf32>
    %60 = tpu.concatenate %59, %59, %59 in 1 : vector<8x256xf32>, vector<8x256xf32>, vector<8x256xf32> -> vector<8x768xf32>
    %61 = arith.mulf %60, %35 : vector<8x768xf32>
    %62 = arith.subf %34, %61 : vector<8x768xf32>
    %cst_18 = arith.constant dense<0.000000e+00> : vector<8x768xf32>
    %63 = tpu.matmul %5, %62, %cst_18 {dimension_numbers = #tpu.dot_dimension_numbers<[1], [0], [0], [1], [0, 0, 1, 1], [], []>} : vector<8x8xf32>, vector<8x768xf32>, vector<8x768xf32> -> vector<8x768xf32>
    %64 = arith.addf %1, %63 : vector<8x768xf32>
    %65 = vector.extract_strided_slice %64 {offsets = [0, 0], sizes = [8, 256], strides = [1, 1]} : vector<8x768xf32> to vector<8x256xf32>
    %cst_19 = arith.constant dense<0.000000e+00> : vector<8xf32>
    %66 = vector.multi_reduction <add>, %65, %cst_19 [1] : vector<8x256xf32> to vector<8xf32>
    %67 = vector.shape_cast %66 : vector<8xf32> to vector<8x1xf32>
    %cst_20 = arith.constant 2.560000e+02 : f32
    %68 = vector.broadcast %cst_20 : f32 to vector<8x1xf32>
    %69 = arith.divf %67, %68 : vector<8x1xf32>
    %70 = vector.extract_strided_slice %64 {offsets = [0, 256], sizes = [8, 256], strides = [1, 1]} : vector<8x768xf32> to vector<8x256xf32>
    %cst_21 = arith.constant dense<0.000000e+00> : vector<8xf32>
    %71 = vector.multi_reduction <add>, %70, %cst_21 [1] : vector<8x256xf32> to vector<8xf32>
    %72 = vector.shape_cast %71 : vector<8xf32> to vector<8x1xf32>
    %cst_22 = arith.constant 2.560000e+02 : f32
    %73 = vector.broadcast %cst_22 : f32 to vector<8x1xf32>
    %74 = arith.divf %72, %73 : vector<8x1xf32>
    %75 = vector.extract_strided_slice %64 {offsets = [0, 512], sizes = [8, 256], strides = [1, 1]} : vector<8x768xf32> to vector<8x256xf32>
    %cst_23 = arith.constant dense<0.000000e+00> : vector<8xf32>
    %76 = vector.multi_reduction <add>, %75, %cst_23 [1] : vector<8x256xf32> to vector<8xf32>
    %77 = vector.shape_cast %76 : vector<8xf32> to vector<8x1xf32>
    %cst_24 = arith.constant 2.560000e+02 : f32
    %78 = vector.broadcast %cst_24 : f32 to vector<8x1xf32>
    %79 = arith.divf %77, %78 : vector<8x1xf32>
    %80 = vector.shape_cast %69 : vector<8x1xf32> to vector<8x1xf32>
    %81 = vector.broadcast %80 : vector<8x1xf32> to vector<8x256xf32>
    %82 = vector.shape_cast %74 : vector<8x1xf32> to vector<8x1xf32>
    %83 = vector.broadcast %82 : vector<8x1xf32> to vector<8x256xf32>
    %84 = vector.shape_cast %79 : vector<8x1xf32> to vector<8x1xf32>
    %85 = vector.broadcast %84 : vector<8x1xf32> to vector<8x256xf32>
    %86 = tpu.concatenate %81, %83, %85 in 1 : vector<8x256xf32>, vector<8x256xf32>, vector<8x256xf32> -> vector<8x768xf32>
    %87 = tpu.concatenate %64, %86 in 0 : vector<8x768xf32>, vector<8x768xf32> -> vector<16x768xf32>
    %c0_25 = arith.constant 0 : index
    %c0_26 = arith.constant 0 : index
    %88 = vector.load %arg6[%c0_25, %c0_26] : memref<16x16xf32, #tpu.memory_space<vmem>>, vector<16x16xf32>
    %c0_27 = arith.constant 0 : index
    %c0_28 = arith.constant 0 : index
    %89 = vector.load %arg7[%c0_27, %c0_28] : memref<8x16xf32, #tpu.memory_space<vmem>>, vector<8x16xf32>
    %c0_29 = arith.constant 0 : index
    %c0_30 = arith.constant 0 : index
    %90 = vector.load %arg8[%c0_29, %c0_30] : memref<8x8xf32, #tpu.memory_space<vmem>>, vector<8x8xf32>
    %c0_31 = arith.constant 0 : index
    %c0_32 = arith.constant 0 : index
    %91 = vector.load %arg9[%c0_31, %c0_32] : memref<8x8xf32, #tpu.memory_space<vmem>>, vector<8x8xf32>
    %c0_33 = arith.constant 0 : index
    %c0_34 = arith.constant 0 : index
    %92 = vector.load %arg10[%c0_33, %c0_34] : memref<8x16xf32, #tpu.memory_space<vmem>>, vector<8x16xf32>
    %cst_35 = arith.constant dense<0.000000e+00> : vector<16x768xf32>
    %93 = tpu.matmul %88, %87, %cst_35 {dimension_numbers = #tpu.dot_dimension_numbers<[1], [0], [0], [1], [0, 0, 1, 1], [], []>} : vector<16x16xf32>, vector<16x768xf32>, vector<16x768xf32> -> vector<16x768xf32>
    %94 = vector.extract_strided_slice %87 {offsets = [0, 0], sizes = [16, 256], strides = [1, 1]} : vector<16x768xf32> to vector<16x256xf32>
    %95 = vector.extract_strided_slice %87 {offsets = [0, 256], sizes = [16, 256], strides = [1, 1]} : vector<16x768xf32> to vector<16x256xf32>
    %96 = vector.extract_strided_slice %87 {offsets = [0, 512], sizes = [16, 256], strides = [1, 1]} : vector<16x768xf32> to vector<16x256xf32>
    %97 = vector.extract_strided_slice %93 {offsets = [0, 0], sizes = [16, 256], strides = [1, 1]} : vector<16x768xf32> to vector<16x256xf32>
    %98 = vector.extract_strided_slice %93 {offsets = [0, 256], sizes = [16, 256], strides = [1, 1]} : vector<16x768xf32> to vector<16x256xf32>
    %99 = vector.extract_strided_slice %93 {offsets = [0, 512], sizes = [16, 256], strides = [1, 1]} : vector<16x768xf32> to vector<16x256xf32>
    %100 = arith.mulf %94, %97 : vector<16x256xf32>
    %101 = arith.mulf %95, %98 : vector<16x256xf32>
    %102 = arith.addf %100, %101 : vector<16x256xf32>
    %103 = arith.mulf %96, %99 : vector<16x256xf32>
    %104 = arith.addf %102, %103 : vector<16x256xf32>
    %105 = arith.mulf %97, %97 : vector<16x256xf32>
    %106 = arith.mulf %98, %98 : vector<16x256xf32>
    %107 = arith.addf %105, %106 : vector<16x256xf32>
    %108 = arith.mulf %99, %99 : vector<16x256xf32>
    %109 = arith.addf %107, %108 : vector<16x256xf32>
    %cst_36 = arith.constant 9.99999997E-7 : f32
    %110 = vector.broadcast %cst_36 : f32 to vector<16x256xf32>
    %111 = arith.addf %109, %110 : vector<16x256xf32>
    %cst_37 = arith.constant 0.000000e+00 : f32
    %112 = vector.broadcast %cst_37 : f32 to vector<16x256xf32>
    %113 = arith.cmpf olt, %104, %112 : vector<16x256xf32>
    %114 = tpu.reciprocal %111 : vector<16x256xf32> -> vector<16x256xf32>
    %115 = arith.mulf %104, %114 : vector<16x256xf32>
    %cst_38 = arith.constant 0.000000e+00 : f32
    %116 = vector.broadcast %cst_38 : f32 to vector<16x256xf32>
    %117 = arith.select %113, %115, %116 : vector<16x256xi1>, vector<16x256xf32>
    %118 = tpu.concatenate %117, %117, %117 in 1 : vector<16x256xf32>, vector<16x256xf32>, vector<16x256xf32> -> vector<16x768xf32>
    %119 = arith.mulf %118, %93 : vector<16x768xf32>
    %120 = arith.subf %87, %119 : vector<16x768xf32>
    %cst_39 = arith.constant dense<0.000000e+00> : vector<8x768xf32>
    %121 = tpu.matmul %89, %120, %cst_39 {dimension_numbers = #tpu.dot_dimension_numbers<[1], [0], [0], [1], [0, 0, 1, 1], [], []>} : vector<8x16xf32>, vector<16x768xf32>, vector<8x768xf32> -> vector<8x768xf32>
    %cst_40 = arith.constant dense<0.000000e+00> : vector<8x768xf32>
    %122 = tpu.matmul %90, %121, %cst_40 {dimension_numbers = #tpu.dot_dimension_numbers<[1], [0], [0], [1], [0, 0, 1, 1], [], []>} : vector<8x8xf32>, vector<8x768xf32>, vector<8x768xf32> -> vector<8x768xf32>
    %123 = vector.extract_strided_slice %121 {offsets = [0, 0], sizes = [8, 256], strides = [1, 1]} : vector<8x768xf32> to vector<8x256xf32>
    %124 = vector.extract_strided_slice %121 {offsets = [0, 256], sizes = [8, 256], strides = [1, 1]} : vector<8x768xf32> to vector<8x256xf32>
    %125 = vector.extract_strided_slice %121 {offsets = [0, 512], sizes = [8, 256], strides = [1, 1]} : vector<8x768xf32> to vector<8x256xf32>
    %126 = vector.extract_strided_slice %122 {offsets = [0, 0], sizes = [8, 256], strides = [1, 1]} : vector<8x768xf32> to vector<8x256xf32>
    %127 = vector.extract_strided_slice %122 {offsets = [0, 256], sizes = [8, 256], strides = [1, 1]} : vector<8x768xf32> to vector<8x256xf32>
    %128 = vector.extract_strided_slice %122 {offsets = [0, 512], sizes = [8, 256], strides = [1, 1]} : vector<8x768xf32> to vector<8x256xf32>
    %129 = arith.mulf %123, %126 : vector<8x256xf32>
    %130 = arith.mulf %124, %127 : vector<8x256xf32>
    %131 = arith.addf %129, %130 : vector<8x256xf32>
    %132 = arith.mulf %125, %128 : vector<8x256xf32>
    %133 = arith.addf %131, %132 : vector<8x256xf32>
    %134 = arith.mulf %126, %126 : vector<8x256xf32>
    %135 = arith.mulf %127, %127 : vector<8x256xf32>
    %136 = arith.addf %134, %135 : vector<8x256xf32>
    %137 = arith.mulf %128, %128 : vector<8x256xf32>
    %138 = arith.addf %136, %137 : vector<8x256xf32>
    %cst_41 = arith.constant 9.99999997E-7 : f32
    %139 = vector.broadcast %cst_41 : f32 to vector<8x256xf32>
    %140 = arith.addf %138, %139 : vector<8x256xf32>
    %cst_42 = arith.constant 0.000000e+00 : f32
    %141 = vector.broadcast %cst_42 : f32 to vector<8x256xf32>
    %142 = arith.cmpf olt, %133, %141 : vector<8x256xf32>
    %143 = tpu.reciprocal %140 : vector<8x256xf32> -> vector<8x256xf32>
    %144 = arith.mulf %133, %143 : vector<8x256xf32>
    %cst_43 = arith.constant 0.000000e+00 : f32
    %145 = vector.broadcast %cst_43 : f32 to vector<8x256xf32>
    %146 = arith.select %142, %144, %145 : vector<8x256xi1>, vector<8x256xf32>
    %147 = tpu.concatenate %146, %146, %146 in 1 : vector<8x256xf32>, vector<8x256xf32>, vector<8x256xf32> -> vector<8x768xf32>
    %148 = arith.mulf %147, %122 : vector<8x768xf32>
    %149 = arith.subf %121, %148 : vector<8x768xf32>
    %cst_44 = arith.constant dense<0.000000e+00> : vector<8x768xf32>
    %150 = tpu.matmul %91, %149, %cst_44 {dimension_numbers = #tpu.dot_dimension_numbers<[1], [0], [0], [1], [0, 0, 1, 1], [], []>} : vector<8x8xf32>, vector<8x768xf32>, vector<8x768xf32> -> vector<8x768xf32>
    %cst_45 = arith.constant dense<0.000000e+00> : vector<8x768xf32>
    %151 = tpu.matmul %92, %87, %cst_45 {dimension_numbers = #tpu.dot_dimension_numbers<[1], [0], [0], [1], [0, 0, 1, 1], [], []>} : vector<8x16xf32>, vector<16x768xf32>, vector<8x768xf32> -> vector<8x768xf32>
    %152 = arith.addf %151, %150 : vector<8x768xf32>
    %153 = vector.extract_strided_slice %152 {offsets = [0, 0], sizes = [8, 256], strides = [1, 1]} : vector<8x768xf32> to vector<8x256xf32>
    %cst_46 = arith.constant dense<0.000000e+00> : vector<8xf32>
    %154 = vector.multi_reduction <add>, %153, %cst_46 [1] : vector<8x256xf32> to vector<8xf32>
    %155 = vector.shape_cast %154 : vector<8xf32> to vector<8x1xf32>
    %cst_47 = arith.constant 2.560000e+02 : f32
    %156 = vector.broadcast %cst_47 : f32 to vector<8x1xf32>
    %157 = arith.divf %155, %156 : vector<8x1xf32>
    %158 = vector.extract_strided_slice %152 {offsets = [0, 256], sizes = [8, 256], strides = [1, 1]} : vector<8x768xf32> to vector<8x256xf32>
    %cst_48 = arith.constant dense<0.000000e+00> : vector<8xf32>
    %159 = vector.multi_reduction <add>, %158, %cst_48 [1] : vector<8x256xf32> to vector<8xf32>
    %160 = vector.shape_cast %159 : vector<8xf32> to vector<8x1xf32>
    %cst_49 = arith.constant 2.560000e+02 : f32
    %161 = vector.broadcast %cst_49 : f32 to vector<8x1xf32>
    %162 = arith.divf %160, %161 : vector<8x1xf32>
    %163 = vector.extract_strided_slice %152 {offsets = [0, 512], sizes = [8, 256], strides = [1, 1]} : vector<8x768xf32> to vector<8x256xf32>
    %cst_50 = arith.constant dense<0.000000e+00> : vector<8xf32>
    %164 = vector.multi_reduction <add>, %163, %cst_50 [1] : vector<8x256xf32> to vector<8xf32>
    %165 = vector.shape_cast %164 : vector<8xf32> to vector<8x1xf32>
    %cst_51 = arith.constant 2.560000e+02 : f32
    %166 = vector.broadcast %cst_51 : f32 to vector<8x1xf32>
    %167 = arith.divf %165, %166 : vector<8x1xf32>
    %168 = vector.shape_cast %157 : vector<8x1xf32> to vector<8x1xf32>
    %169 = vector.broadcast %168 : vector<8x1xf32> to vector<8x256xf32>
    %170 = vector.shape_cast %162 : vector<8x1xf32> to vector<8x1xf32>
    %171 = vector.broadcast %170 : vector<8x1xf32> to vector<8x256xf32>
    %172 = vector.shape_cast %167 : vector<8x1xf32> to vector<8x1xf32>
    %173 = vector.broadcast %172 : vector<8x1xf32> to vector<8x256xf32>
    %174 = tpu.concatenate %169, %171, %173 in 1 : vector<8x256xf32>, vector<8x256xf32>, vector<8x256xf32> -> vector<8x768xf32>
    %175 = tpu.concatenate %152, %174 in 0 : vector<8x768xf32>, vector<8x768xf32> -> vector<16x768xf32>
    %c0_52 = arith.constant 0 : index
    %c0_53 = arith.constant 0 : index
    %176 = vector.load %arg11[%c0_52, %c0_53] : memref<16x16xf32, #tpu.memory_space<vmem>>, vector<16x16xf32>
    %c0_54 = arith.constant 0 : index
    %c0_55 = arith.constant 0 : index
    %177 = vector.load %arg12[%c0_54, %c0_55] : memref<16x16xf32, #tpu.memory_space<vmem>>, vector<16x16xf32>
    %c0_56 = arith.constant 0 : index
    %c0_57 = arith.constant 0 : index
    %178 = vector.load %arg13[%c0_56, %c0_57] : memref<16x16xf32, #tpu.memory_space<vmem>>, vector<16x16xf32>
    %c0_58 = arith.constant 0 : index
    %c0_59 = arith.constant 0 : index
    %179 = vector.load %arg14[%c0_58, %c0_59] : memref<16x16xf32, #tpu.memory_space<vmem>>, vector<16x16xf32>
    %cst_60 = arith.constant dense<0.000000e+00> : vector<16x768xf32>
    %180 = tpu.matmul %176, %175, %cst_60 {dimension_numbers = #tpu.dot_dimension_numbers<[1], [0], [0], [1], [0, 0, 1, 1], [], []>} : vector<16x16xf32>, vector<16x768xf32>, vector<16x768xf32> -> vector<16x768xf32>
    %181 = vector.extract_strided_slice %175 {offsets = [0, 0], sizes = [16, 256], strides = [1, 1]} : vector<16x768xf32> to vector<16x256xf32>
    %182 = vector.extract_strided_slice %175 {offsets = [0, 256], sizes = [16, 256], strides = [1, 1]} : vector<16x768xf32> to vector<16x256xf32>
    %183 = vector.extract_strided_slice %175 {offsets = [0, 512], sizes = [16, 256], strides = [1, 1]} : vector<16x768xf32> to vector<16x256xf32>
    %184 = vector.extract_strided_slice %180 {offsets = [0, 0], sizes = [16, 256], strides = [1, 1]} : vector<16x768xf32> to vector<16x256xf32>
    %185 = vector.extract_strided_slice %180 {offsets = [0, 256], sizes = [16, 256], strides = [1, 1]} : vector<16x768xf32> to vector<16x256xf32>
    %186 = vector.extract_strided_slice %180 {offsets = [0, 512], sizes = [16, 256], strides = [1, 1]} : vector<16x768xf32> to vector<16x256xf32>
    %187 = arith.mulf %181, %184 : vector<16x256xf32>
    %188 = arith.mulf %182, %185 : vector<16x256xf32>
    %189 = arith.addf %187, %188 : vector<16x256xf32>
    %190 = arith.mulf %183, %186 : vector<16x256xf32>
    %191 = arith.addf %189, %190 : vector<16x256xf32>
    %192 = arith.mulf %184, %184 : vector<16x256xf32>
    %193 = arith.mulf %185, %185 : vector<16x256xf32>
    %194 = arith.addf %192, %193 : vector<16x256xf32>
    %195 = arith.mulf %186, %186 : vector<16x256xf32>
    %196 = arith.addf %194, %195 : vector<16x256xf32>
    %cst_61 = arith.constant 9.99999997E-7 : f32
    %197 = vector.broadcast %cst_61 : f32 to vector<16x256xf32>
    %198 = arith.addf %196, %197 : vector<16x256xf32>
    %cst_62 = arith.constant 0.000000e+00 : f32
    %199 = vector.broadcast %cst_62 : f32 to vector<16x256xf32>
    %200 = arith.cmpf olt, %191, %199 : vector<16x256xf32>
    %201 = tpu.reciprocal %198 : vector<16x256xf32> -> vector<16x256xf32>
    %202 = arith.mulf %191, %201 : vector<16x256xf32>
    %cst_63 = arith.constant 0.000000e+00 : f32
    %203 = vector.broadcast %cst_63 : f32 to vector<16x256xf32>
    %204 = arith.select %200, %202, %203 : vector<16x256xi1>, vector<16x256xf32>
    %205 = tpu.concatenate %204, %204, %204 in 1 : vector<16x256xf32>, vector<16x256xf32>, vector<16x256xf32> -> vector<16x768xf32>
    %206 = arith.mulf %205, %180 : vector<16x768xf32>
    %207 = arith.subf %175, %206 : vector<16x768xf32>
    %cst_64 = arith.constant dense<0.000000e+00> : vector<16x768xf32>
    %208 = tpu.matmul %177, %207, %cst_64 {dimension_numbers = #tpu.dot_dimension_numbers<[1], [0], [0], [1], [0, 0, 1, 1], [], []>} : vector<16x16xf32>, vector<16x768xf32>, vector<16x768xf32> -> vector<16x768xf32>
    %cst_65 = arith.constant dense<0.000000e+00> : vector<16x768xf32>
    %209 = tpu.matmul %178, %208, %cst_65 {dimension_numbers = #tpu.dot_dimension_numbers<[1], [0], [0], [1], [0, 0, 1, 1], [], []>} : vector<16x16xf32>, vector<16x768xf32>, vector<16x768xf32> -> vector<16x768xf32>
    %210 = vector.extract_strided_slice %208 {offsets = [0, 0], sizes = [16, 256], strides = [1, 1]} : vector<16x768xf32> to vector<16x256xf32>
    %211 = vector.extract_strided_slice %208 {offsets = [0, 256], sizes = [16, 256], strides = [1, 1]} : vector<16x768xf32> to vector<16x256xf32>
    %212 = vector.extract_strided_slice %208 {offsets = [0, 512], sizes = [16, 256], strides = [1, 1]} : vector<16x768xf32> to vector<16x256xf32>
    %213 = vector.extract_strided_slice %209 {offsets = [0, 0], sizes = [16, 256], strides = [1, 1]} : vector<16x768xf32> to vector<16x256xf32>
    %214 = vector.extract_strided_slice %209 {offsets = [0, 256], sizes = [16, 256], strides = [1, 1]} : vector<16x768xf32> to vector<16x256xf32>
    %215 = vector.extract_strided_slice %209 {offsets = [0, 512], sizes = [16, 256], strides = [1, 1]} : vector<16x768xf32> to vector<16x256xf32>
    %216 = arith.mulf %210, %213 : vector<16x256xf32>
    %217 = arith.mulf %211, %214 : vector<16x256xf32>
    %218 = arith.addf %216, %217 : vector<16x256xf32>
    %219 = arith.mulf %212, %215 : vector<16x256xf32>
    %220 = arith.addf %218, %219 : vector<16x256xf32>
    %221 = arith.mulf %213, %213 : vector<16x256xf32>
    %222 = arith.mulf %214, %214 : vector<16x256xf32>
    %223 = arith.addf %221, %222 : vector<16x256xf32>
    %224 = arith.mulf %215, %215 : vector<16x256xf32>
    %225 = arith.addf %223, %224 : vector<16x256xf32>
    %cst_66 = arith.constant 9.99999997E-7 : f32
    %226 = vector.broadcast %cst_66 : f32 to vector<16x256xf32>
    %227 = arith.addf %225, %226 : vector<16x256xf32>
    %cst_67 = arith.constant 0.000000e+00 : f32
    %228 = vector.broadcast %cst_67 : f32 to vector<16x256xf32>
    %229 = arith.cmpf olt, %220, %228 : vector<16x256xf32>
    %230 = tpu.reciprocal %227 : vector<16x256xf32> -> vector<16x256xf32>
    %231 = arith.mulf %220, %230 : vector<16x256xf32>
    %cst_68 = arith.constant 0.000000e+00 : f32
    %232 = vector.broadcast %cst_68 : f32 to vector<16x256xf32>
    %233 = arith.select %229, %231, %232 : vector<16x256xi1>, vector<16x256xf32>
    %234 = tpu.concatenate %233, %233, %233 in 1 : vector<16x256xf32>, vector<16x256xf32>, vector<16x256xf32> -> vector<16x768xf32>
    %235 = arith.mulf %234, %209 : vector<16x768xf32>
    %236 = arith.subf %208, %235 : vector<16x768xf32>
    %cst_69 = arith.constant dense<0.000000e+00> : vector<16x768xf32>
    %237 = tpu.matmul %179, %236, %cst_69 {dimension_numbers = #tpu.dot_dimension_numbers<[1], [0], [0], [1], [0, 0, 1, 1], [], []>} : vector<16x16xf32>, vector<16x768xf32>, vector<16x768xf32> -> vector<16x768xf32>
    %238 = arith.addf %175, %237 : vector<16x768xf32>
    %c0_70 = arith.constant 0 : index
    %c0_71 = arith.constant 0 : index
    %c0_72 = arith.constant 0 : index
    %239 = vector.load %arg15[%c0_70, %c0_71, %c0_72] : memref<1x16x768xf32, #tpu.memory_space<vmem>>, vector<1x16x768xf32>
    %240 = vector.shape_cast %239 : vector<1x16x768xf32> to vector<16x768xf32>
    %241 = vector.shape_cast %238 : vector<16x768xf32> to vector<1x16x768xf32>
    tpu.vector_store %arg15[%c0_70, %c0_71, %c0_72], %241 {strides = array<i32>} : memref<1x16x768xf32, #tpu.memory_space<vmem>>, vector<1x16x768xf32>,
    return
  }
  func.func @transform_0(%arg0: i32) -> (i32, i32, i32) {
    %c0_i32 = arith.constant 0 : i32
    %c0_i32_0 = arith.constant 0 : i32
    %c0_i32_1 = arith.constant 0 : i32
    return %arg0, %c0_i32, %c0_i32_0 : i32, i32, i32
  }
  func.func @transform_1(%arg0: i32) -> (i32, i32) {
    %c0_i32 = arith.constant 0 : i32
    %c0_i32_0 = arith.constant 0 : i32
    %c0_i32_1 = arith.constant 0 : i32
    return %c0_i32, %c0_i32_0 : i32, i32
  }
  func.func @transform_2(%arg0: i32) -> (i32, i32) {
    %c0_i32 = arith.constant 0 : i32
    %c0_i32_0 = arith.constant 0 : i32
    %c0_i32_1 = arith.constant 0 : i32
    return %c0_i32, %c0_i32_0 : i32, i32
  }
  func.func @transform_3(%arg0: i32) -> (i32, i32) {
    %c0_i32 = arith.constant 0 : i32
    %c0_i32_0 = arith.constant 0 : i32
    %c0_i32_1 = arith.constant 0 : i32
    return %c0_i32, %c0_i32_0 : i32, i32
  }
  func.func @transform_4(%arg0: i32) -> (i32, i32) {
    %c0_i32 = arith.constant 0 : i32
    %c0_i32_0 = arith.constant 0 : i32
    %c0_i32_1 = arith.constant 0 : i32
    return %c0_i32, %c0_i32_0 : i32, i32
  }
  func.func @transform_5(%arg0: i32) -> (i32, i32) {
    %c0_i32 = arith.constant 0 : i32
    %c0_i32_0 = arith.constant 0 : i32
    %c0_i32_1 = arith.constant 0 : i32
    return %c0_i32, %c0_i32_0 : i32, i32
  }
  func.func @transform_6(%arg0: i32) -> (i32, i32) {
    %c0_i32 = arith.constant 0 : i32
    %c0_i32_0 = arith.constant 0 : i32
    %c0_i32_1 = arith.constant 0 : i32
    return %c0_i32, %c0_i32_0 : i32, i32
  }
  func.func @transform_7(%arg0: i32) -> (i32, i32) {
    %c0_i32 = arith.constant 0 : i32
    %c0_i32_0 = arith.constant 0 : i32
    %c0_i32_1 = arith.constant 0 : i32
    return %c0_i32, %c0_i32_0 : i32, i32
  }
  func.func @transform_8(%arg0: i32) -> (i32, i32) {
    %c0_i32 = arith.constant 0 : i32
    %c0_i32_0 = arith.constant 0 : i32
    %c0_i32_1 = arith.constant 0 : i32
    return %c0_i32, %c0_i32_0 : i32, i32
  }
  func.func @transform_9(%arg0: i32) -> (i32, i32) {
    %c0_i32 = arith.constant 0 : i32
    %c0_i32_0 = arith.constant 0 : i32
    %c0_i32_1 = arith.constant 0 : i32
    return %c0_i32, %c0_i32_0 : i32, i32
  }
  func.func @transform_10(%arg0: i32) -> (i32, i32) {
    %c0_i32 = arith.constant 0 : i32
    %c0_i32_0 = arith.constant 0 : i32
    %c0_i32_1 = arith.constant 0 : i32
    return %c0_i32, %c0_i32_0 : i32, i32
  }
  func.func @transform_11(%arg0: i32) -> (i32, i32) {
    %c0_i32 = arith.constant 0 : i32
    %c0_i32_0 = arith.constant 0 : i32
    %c0_i32_1 = arith.constant 0 : i32
    return %c0_i32, %c0_i32_0 : i32, i32
  }
  func.func @transform_12(%arg0: i32) -> (i32, i32) {
    %c0_i32 = arith.constant 0 : i32
    %c0_i32_0 = arith.constant 0 : i32
    %c0_i32_1 = arith.constant 0 : i32
    return %c0_i32, %c0_i32_0 : i32, i32
  }
  func.func @transform_13(%arg0: i32) -> (i32, i32) {
    %c0_i32 = arith.constant 0 : i32
    %c0_i32_0 = arith.constant 0 : i32
    %c0_i32_1 = arith.constant 0 : i32
    return %c0_i32, %c0_i32_0 : i32, i32
  }
  func.func @transform_14(%arg0: i32) -> (i32, i32, i32) {
    %c0_i32 = arith.constant 0 : i32
    %c0_i32_0 = arith.constant 0 : i32
    %c0_i32_1 = arith.constant 0 : i32
    return %arg0, %c0_i32, %c0_i32_0 : i32, i32, i32
  }
}

</mosaic_0001>

<llo_original>
// kernel: vn_resnet_pointnet_forward.1
$region0: #{vn_resnet_pointnet_forward.1}
  #allocation0 [shape = 'u32[]', space=smem, size = 0x4, offset = 0x4, fixed_abs, tag = 'smem constant byte address 0x4 - core index']
  #allocation1 [shape = 'u32[144,128]{1,0:T(1,128)}', space=vmem, size = 0x12000, scoped, tag = 'internal scratch']
  %s0 = inlined_call_operand.hbm [shape: f32[2,8,768], index: 0, kind: input, shape index: {}]
  %s1 = inlined_call_operand.hbm [shape: f32[8,8], index: 1, kind: input, shape index: {}]
  %s2 = inlined_call_operand.hbm [shape: f32[8,8], index: 2, kind: input, shape index: {}]
  %s3 = inlined_call_operand.hbm [shape: f32[8,8], index: 3, kind: input, shape index: {}]
  %s4 = inlined_call_operand.hbm [shape: f32[8,8], index: 4, kind: input, shape index: {}]
  %s5 = inlined_call_operand.hbm [shape: f32[16,16], index: 5, kind: input, shape index: {}]
  %s6 = inlined_call_operand.hbm [shape: f32[8,16], index: 6, kind: input, shape index: {}]
  %s7 = inlined_call_operand.hbm [shape: f32[8,8], index: 7, kind: input, shape index: {}]
  %s8 = inlined_call_operand.hbm [shape: f32[8,8], index: 8, kind: input, shape index: {}]
  %s9 = inlined_call_operand.hbm [shape: f32[8,16], index: 9, kind: input, shape index: {}]
  %s10 = inlined_call_operand.vmem [shape: f32[16,16], index: 10, kind: input, shape index: {}]
  %s11 = inlined_call_operand.hbm [shape: f32[16,16], index: 11, kind: input, shape index: {}]
  %s12 = inlined_call_operand.hbm [shape: f32[16,16], index: 12, kind: input, shape index: {}]
  %s13 = inlined_call_operand.hbm [shape: f32[16,16], index: 13, kind: input, shape index: {}]
  %s14 = inlined_call_operand.vmem [shape: f32[2,16,768], index: 14, kind: output, shape index: {}]
  %s15 = sld [smem:[#allocation0]]
  $region141: #{vn_resnet_pointnet_forward.1} parent=0
    _
  %s17 = ssub.s32 1, %s15
  %s18 = scalar_select 0, %s17, %s15
  $region1: #{vn_resnet_pointnet_forward.1} parent=0
    #allocation2 [shape = 'u8[49152]{0}', space=vmem, size = 0xc000, scoped, tag = 'input window, operand 0']
    #allocation3 [shape = 's32[2]{0}', space=sflag, size = 0x8, scoped, tag = 'scoped memory for vn_resnet_pointnet_forward.1']
    #allocation4 [shape = 'u8[4096]{0}', space=vmem, size = 0x1000, scoped, tag = 'input window, operand 1, single buffered']
    #allocation5 [shape = 's32[1]{0}', space=sflag, size = 0x4, scoped, tag = 'scoped memory for vn_resnet_pointnet_forward.1']
    #allocation6 [shape = 'u8[4096]{0}', space=vmem, size = 0x1000, scoped, tag = 'input window, operand 2, single buffered']
    #allocation7 [shape = 'u8[4096]{0}', space=vmem, size = 0x1000, scoped, tag = 'input window, operand 3, single buffered']
    #allocation8 [shape = 's32[1]{0}', space=sflag, size = 0x4, scoped, tag = 'scoped memory for vn_resnet_pointnet_forward.1']
    #allocation9 [shape = 'u8[4096]{0}', space=vmem, size = 0x1000, scoped, tag = 'input window, operand 4, single buffered']
    #allocation10 [shape = 'u8[8192]{0}', space=vmem, size = 0x2000, scoped, tag = 'input window, operand 5, single buffered']
    #allocation11 [shape = 's32[1]{0}', space=sflag, size = 0x4, scoped, tag = 'scoped memory for vn_resnet_pointnet_forward.1']
    #allocation12 [shape = 'u8[4096]{0}', space=vmem, size = 0x1000, scoped, tag = 'input window, operand 6, single buffered']
    #allocation13 [shape = 'u8[4096]{0}', space=vmem, size = 0x1000, scoped, tag = 'input window, operand 7, single buffered']
    #allocation14 [shape = 's32[1]{0}', space=sflag, size = 0x4, scoped, tag = 'scoped memory for vn_resnet_pointnet_forward.1']
    #allocation15 [shape = 'u8[4096]{0}', space=vmem, size = 0x1000, scoped, tag = 'input window, operand 8, single buffered']
    #allocation16 [shape = 'u8[4096]{0}', space=vmem, size = 0x1000, scoped, tag = 'input window, operand 9, single buffered']
    #allocation17 [shape = 's32[1]{0}', space=sflag, size = 0x4, scoped, tag = 'scoped memory for vn_resnet_pointnet_forward.1']
    #allocation18 [shape = 'u8[8192]{0}', space=vmem, size = 0x2000, scoped, tag = 'input window, operand 11, single buffered']
    #allocation19 [shape = 'u8[8192]{0}', space=vmem, size = 0x2000, scoped, tag = 'input window, operand 12, single buffered']
    #allocation20 [shape = 's32[1]{0}', space=sflag, size = 0x4, scoped, tag = 'scoped memory for vn_resnet_pointnet_forward.1']
    #allocation21 [shape = 'u8[8192]{0}', space=vmem, size = 0x2000, scoped, tag = 'input window, operand 13, single buffered']
    %19 = vsyncpa [#allocation3], 0
    %s20 = scalar_lea.sflag [#allocation3], 1
    %21 = vsyncpa %s20, 0
    %22 = vsyncpa [#allocation5], 0
    %23 = vsyncpa [#allocation8], 0
    %24 = vsyncpa [#allocation11], 0
    %25 = vsyncpa [#allocation14], 0
    %26 = vsyncpa [#allocation17], 0
    %27 = vsyncpa [#allocation20], 0
    loop: start=0, step=1, limit=4
    $region2: #{vn_resnet_pointnet_forward.1} parent=1 // loop_pre_header
      _
    $region3: #{vn_resnet_pointnet_forward.1} parent=1 // loop_header
      %s29 = sphi 0, %s33
      %p30 = scmp.ge.s32.totalorder %s29, 4
      %s39 = sphi 0, %s41
      %s42 = sphi 0, %s39
      %s43 = sphi 0, %s42
      %s59 = sphi 0, %s43
      %s63 = sphi 0, %s63
      %s65 = sphi 0, %s63
      %s66 = sphi 0, %s65
      %s80 = sphi 0, %s66
      %s84 = sphi 0, %s84
      %s86 = sphi 0, %s84
      %s87 = sphi 0, %s86
      %s101 = sphi 0, %s87
      %s105 = sphi 0, %s105
      %s107 = sphi 0, %s105
      %s108 = sphi 0, %s107
      %s122 = sphi 0, %s108
      %s126 = sphi 0, %s126
      %s128 = sphi 0, %s126
      %s129 = sphi 0, %s128
      %s143 = sphi 0, %s129
      %s147 = sphi 0, %s147
      %s149 = sphi 0, %s147
      %s150 = sphi 0, %s149
      %s164 = sphi 0, %s150
      %s168 = sphi 0, %s168
      %s170 = sphi 0, %s168
      %s171 = sphi 0, %s170
      %s185 = sphi 0, %s171
      %s189 = sphi 0, %s189
      %s191 = sphi 0, %s189
      %s192 = sphi 0, %s191
      %s206 = sphi 0, %s192
      %s210 = sphi 0, %s210
      %s212 = sphi 0, %s210
      %s213 = sphi 0, %s212
      %s227 = sphi 0, %s213
      %s231 = sphi 0, %s231
      %s233 = sphi 0, %s231
      %s234 = sphi 0, %s233
      %s248 = sphi 0, %s234
      %s252 = sphi 0, %s252
      %s254 = sphi 0, %s252
      %s255 = sphi 0, %s254
      %s269 = sphi 0, %s255
      %s273 = sphi 0, %s273
      %s275 = sphi 0, %s273
      %s276 = sphi 0, %s275
      %s290 = sphi 0, %s276
      %s294 = sphi 0, %s294
      %s296 = sphi 0, %s294
      %s297 = sphi 0, %s296
      %s311 = sphi 0, %s297
      %s315 = sphi 0, %s315
      %s317 = sphi 0, %s315
      %s318 = sphi 0, %s317
      %s332 = sphi 0, %s318
      %s338 = sphi 0, %s340
      %s341 = sphi 0, %s338
      %s342 = sphi 0, %s341
      %s358 = sphi 0, %s342
    $region4: #{vn_resnet_pointnet_forward.1} parent=1 // loop_header_branch
      %32 = sbr.rel (%p30) target = $region8
    $region5: #{vn_resnet_pointnet_forward.1} parent=1 // loop_body
      %s34 = ssub.s32 %s29, 1
      %s35 = ssub.s32 %s29, 2
      %s36 = sadd.s32 %s29, 1
      %s37 = ssub.s32 %s29, %s36
      %p38 = scmp.eq.s32.totalorder %s37, 0
      %s40 = sadd.s32 %s39, 1
      %s41 = scalar_select %p38, %s39, %s40
      %p44 = pneg %p38
      %p45 = scmp.eq.s32.totalorder %s29, 1
      %p46 = por %p44, %p45
      %p47 = scmp.ne.s32.totalorder %s39, %s42
      %p48 = scmp.eq.s32.totalorder %s29, 0
      %p49 = por %p47, %p48
      %p50 = scmp.ne.s32.totalorder %s39, %s42
      %p51 = scmp.eq.s32.totalorder %s34, 1
      %p52 = por %p50, %p51
      %p53 = scmp.ne.s32.totalorder %s42, %s43
      %p54 = scmp.eq.s32.totalorder %s34, 0
      %p55 = por %p53, %p54
      %p56 = scmp.ne.s32.totalorder %s42, %s43
      %p57 = scmp.eq.s32.totalorder %s35, 1
      %p58 = por %p56, %p57
      %p60 = scmp.ne.s32.totalorder %s43, %s59
      %p61 = scmp.eq.s32.totalorder %s35, 0
      %p62 = por %p60, %p61
      %s64 = sadd.s32 %s63, 1
      %p67 = scmp.eq.s32.totalorder %s29, 1
      %p68 = scmp.ne.s32.totalorder %s63, %s65
      %p69 = scmp.eq.s32.totalorder %s29, 0
      %p70 = por %p68, %p69
      %p71 = scmp.ne.s32.totalorder %s63, %s65
      %p72 = scmp.eq.s32.totalorder %s34, 1
      %p73 = por %p71, %p72
      %p74 = scmp.ne.s32.totalorder %s65, %s66
      %p75 = scmp.eq.s32.totalorder %s34, 0
      %p76 = por %p74, %p75
      %p77 = scmp.ne.s32.totalorder %s65, %s66
      %p78 = scmp.eq.s32.totalorder %s35, 1
      %p79 = por %p77, %p78
      %p81 = scmp.ne.s32.totalorder %s66, %s80
      %p82 = scmp.eq.s32.totalorder %s35, 0
      %p83 = por %p81, %p82
      %s85 = sadd.s32 %s84, 1
      %p88 = scmp.eq.s32.totalorder %s29, 1
      %p89 = scmp.ne.s32.totalorder %s84, %s86
      %p90 = scmp.eq.s32.totalorder %s29, 0
      %p91 = por %p89, %p90
      %p92 = scmp.ne.s32.totalorder %s84, %s86
      %p93 = scmp.eq.s32.totalorder %s34, 1
      %p94 = por %p92, %p93
      %p95 = scmp.ne.s32.totalorder %s86, %s87
      %p96 = scmp.eq.s32.totalorder %s34, 0
      %p97 = por %p95, %p96
      %p98 = scmp.ne.s32.totalorder %s86, %s87
      %p99 = scmp.eq.s32.totalorder %s35, 1
      %p100 = por %p98, %p99
      %p102 = scmp.ne.s32.totalorder %s87, %s101
      %p103 = scmp.eq.s32.totalorder %s35, 0
      %p104 = por %p102, %p103
      %s106 = sadd.s32 %s105, 1
      %p109 = scmp.eq.s32.totalorder %s29, 1
      %p110 = scmp.ne.s32.totalorder %s105, %s107
      %p111 = scmp.eq.s32.totalorder %s29, 0
      %p112 = por %p110, %p111
      %p113 = scmp.ne.s32.totalorder %s105, %s107
      %p114 = scmp.eq.s32.totalorder %s34, 1
      %p115 = por %p113, %p114
      %p116 = scmp.ne.s32.totalorder %s107, %s108
      %p117 = scmp.eq.s32.totalorder %s34, 0
      %p118 = por %p116, %p117
      %p119 = scmp.ne.s32.totalorder %s107, %s108
      %p120 = scmp.eq.s32.totalorder %s35, 1
      %p121 = por %p119, %p120
      %p123 = scmp.ne.s32.totalorder %s108, %s122
      %p124 = scmp.eq.s32.totalorder %s35, 0
      %p125 = por %p123, %p124
      %s127 = sadd.s32 %s126, 1
      %p130 = scmp.eq.s32.totalorder %s29, 1
      %p131 = scmp.ne.s32.totalorder %s126, %s128
      %p132 = scmp.eq.s32.totalorder %s29, 0
      %p133 = por %p131, %p132
      %p134 = scmp.ne.s32.totalorder %s126, %s128
      %p135 = scmp.eq.s32.totalorder %s34, 1
      %p136 = por %p134, %p135
      %p137 = scmp.ne.s32.totalorder %s128, %s129
      %p138 = scmp.eq.s32.totalorder %s34, 0
      %p139 = por %p137, %p138
      %p140 = scmp.ne.s32.totalorder %s128, %s129
      %p141 = scmp.eq.s32.totalorder %s35, 1
      %p142 = por %p140, %p141
      %p144 = scmp.ne.s32.totalorder %s129, %s143
      %p145 = scmp.eq.s32.totalorder %s35, 0
      %p146 = por %p144, %p145
      %s148 = sadd.s32 %s147, 1
      %p151 = scmp.eq.s32.totalorder %s29, 1
      %p152 = scmp.ne.s32.totalorder %s147, %s149
      %p153 = scmp.eq.s32.totalorder %s29, 0
      %p154 = por %p152, %p153
      %p155 = scmp.ne.s32.totalorder %s147, %s149
      %p156 = scmp.eq.s32.totalorder %s34, 1
      %p157 = por %p155, %p156
      %p158 = scmp.ne.s32.totalorder %s149, %s150
      %p159 = scmp.eq.s32.totalorder %s34, 0
      %p160 = por %p158, %p159
      %p161 = scmp.ne.s32.totalorder %s149, %s150
      %p162 = scmp.eq.s32.totalorder %s35, 1
      %p163 = por %p161, %p162
      %p165 = scmp.ne.s32.totalorder %s150, %s164
      %p166 = scmp.eq.s32.totalorder %s35, 0
      %p167 = por %p165, %p166
      %s169 = sadd.s32 %s168, 1
      %p172 = scmp.eq.s32.totalorder %s29, 1
      %p173 = scmp.ne.s32.totalorder %s168, %s170
      %p174 = scmp.eq.s32.totalorder %s29, 0
      %p175 = por %p173, %p174
      %p176 = scmp.ne.s32.totalorder %s168, %s170
      %p177 = scmp.eq.s32.totalorder %s34, 1
      %p178 = por %p176, %p177
      %p179 = scmp.ne.s32.totalorder %s170, %s171
      %p180 = scmp.eq.s32.totalorder %s34, 0
      %p181 = por %p179, %p180
      %p182 = scmp.ne.s32.totalorder %s170, %s171
      %p183 = scmp.eq.s32.totalorder %s35, 1
      %p184 = por %p182, %p183
      %p186 = scmp.ne.s32.totalorder %s171, %s185
      %p187 = scmp.eq.s32.totalorder %s35, 0
      %p188 = por %p186, %p187
      %s190 = sadd.s32 %s189, 1
      %p193 = scmp.eq.s32.totalorder %s29, 1
      %p194 = scmp.ne.s32.totalorder %s189, %s191
      %p195 = scmp.eq.s32.totalorder %s29, 0
      %p196 = por %p194, %p195
      %p197 = scmp.ne.s32.totalorder %s189, %s191
      %p198 = scmp.eq.s32.totalorder %s34, 1
      %p199 = por %p197, %p198
      %p200 = scmp.ne.s32.totalorder %s191, %s192
      %p201 = scmp.eq.s32.totalorder %s34, 0
      %p202 = por %p200, %p201
      %p203 = scmp.ne.s32.totalorder %s191, %s192
      %p204 = scmp.eq.s32.totalorder %s35, 1
      %p205 = por %p203, %p204
      %p207 = scmp.ne.s32.totalorder %s192, %s206
      %p208 = scmp.eq.s32.totalorder %s35, 0
      %p209 = por %p207, %p208
      %s211 = sadd.s32 %s210, 1
      %p214 = scmp.eq.s32.totalorder %s29, 1
      %p215 = scmp.ne.s32.totalorder %s210, %s212
      %p216 = scmp.eq.s32.totalorder %s29, 0
      %p217 = por %p215, %p216
      %p218 = scmp.ne.s32.totalorder %s210, %s212
      %p219 = scmp.eq.s32.totalorder %s34, 1
      %p220 = por %p218, %p219
      %p221 = scmp.ne.s32.totalorder %s212, %s213
      %p222 = scmp.eq.s32.totalorder %s34, 0
      %p223 = por %p221, %p222
      %p224 = scmp.ne.s32.totalorder %s212, %s213
      %p225 = scmp.eq.s32.totalorder %s35, 1
      %p226 = por %p224, %p225
      %p228 = scmp.ne.s32.totalorder %s213, %s227
      %p229 = scmp.eq.s32.totalorder %s35, 0
      %p230 = por %p228, %p229
      %s232 = sadd.s32 %s231, 1
      %p235 = scmp.eq.s32.totalorder %s29, 1
      %p236 = scmp.ne.s32.totalorder %s231, %s233
      %p237 = scmp.eq.s32.totalorder %s29, 0
      %p238 = por %p236, %p237
      %p239 = scmp.ne.s32.totalorder %s231, %s233
      %p240 = scmp.eq.s32.totalorder %s34, 1
      %p241 = por %p239, %p240
      %p242 = scmp.ne.s32.totalorder %s233, %s234
      %p243 = scmp.eq.s32.totalorder %s34, 0
      %p244 = por %p242, %p243
      %p245 = scmp.ne.s32.totalorder %s233, %s234
      %p246 = scmp.eq.s32.totalorder %s35, 1
      %p247 = por %p245, %p246
      %p249 = scmp.ne.s32.totalorder %s234, %s248
      %p250 = scmp.eq.s32.totalorder %s35, 0
      %p251 = por %p249, %p250
      %s253 = sadd.s32 %s252, 1
      %p256 = scmp.eq.s32.totalorder %s29, 1
      %p257 = scmp.ne.s32.totalorder %s252, %s254
      %p258 = scmp.eq.s32.totalorder %s29, 0
      %p259 = por %p257, %p258
      %p260 = scmp.ne.s32.totalorder %s252, %s254
      %p261 = scmp.eq.s32.totalorder %s34, 1
      %p262 = por %p260, %p261
      %p263 = scmp.ne.s32.totalorder %s254, %s255
      %p264 = scmp.eq.s32.totalorder %s34, 0
      %p265 = por %p263, %p264
      %p266 = scmp.ne.s32.totalorder %s254, %s255
      %p267 = scmp.eq.s32.totalorder %s35, 1
      %p268 = por %p266, %p267
      %p270 = scmp.ne.s32.totalorder %s255, %s269
      %p271 = scmp.eq.s32.totalorder %s35, 0
      %p272 = por %p270, %p271
      %s274 = sadd.s32 %s273, 1
      %p277 = scmp.eq.s32.totalorder %s29, 1
      %p278 = scmp.ne.s32.totalorder %s273, %s275
      %p279 = scmp.eq.s32.totalorder %s29, 0
      %p280 = por %p278, %p279
      %p281 = scmp.ne.s32.totalorder %s273, %s275
      %p282 = scmp.eq.s32.totalorder %s34, 1
      %p283 = por %p281, %p282
      %p284 = scmp.ne.s32.totalorder %s275, %s276
      %p285 = scmp.eq.s32.totalorder %s34, 0
      %p286 = por %p284, %p285
      %p287 = scmp.ne.s32.totalorder %s275, %s276
      %p288 = scmp.eq.s32.totalorder %s35, 1
      %p289 = por %p287, %p288
      %p291 = scmp.ne.s32.totalorder %s276, %s290
      %p292 = scmp.eq.s32.totalorder %s35, 0
      %p293 = por %p291, %p292
      %s295 = sadd.s32 %s294, 1
      %p298 = scmp.eq.s32.totalorder %s29, 1
      %p299 = scmp.ne.s32.totalorder %s294, %s296
      %p300 = scmp.eq.s32.totalorder %s29, 0
      %p301 = por %p299, %p300
      %p302 = scmp.ne.s32.totalorder %s294, %s296
      %p303 = scmp.eq.s32.totalorder %s34, 1
      %p304 = por %p302, %p303
      %p305 = scmp.ne.s32.totalorder %s296, %s297
      %p306 = scmp.eq.s32.totalorder %s34, 0
      %p307 = por %p305, %p306
      %p308 = scmp.ne.s32.totalorder %s296, %s297
      %p309 = scmp.eq.s32.totalorder %s35, 1
      %p310 = por %p308, %p309
      %p312 = scmp.ne.s32.totalorder %s297, %s311
      %p313 = scmp.eq.s32.totalorder %s35, 0
      %p314 = por %p312, %p313
      %s316 = sadd.s32 %s315, 1
      %p319 = scmp.eq.s32.totalorder %s29, 1
      %p320 = scmp.ne.s32.totalorder %s315, %s317
      %p321 = scmp.eq.s32.totalorder %s29, 0
      %p322 = por %p320, %p321
      %p323 = scmp.ne.s32.totalorder %s315, %s317
      %p324 = scmp.eq.s32.totalorder %s34, 1
      %p325 = por %p323, %p324
      %p326 = scmp.ne.s32.totalorder %s317, %s318
      %p327 = scmp.eq.s32.totalorder %s34, 0
      %p328 = por %p326, %p327
      %p329 = scmp.ne.s32.totalorder %s317, %s318
      %p330 = scmp.eq.s32.totalorder %s35, 1
      %p331 = por %p329, %p330
      %p333 = scmp.ne.s32.totalorder %s318, %s332
      %p334 = scmp.eq.s32.totalorder %s35, 0
      %p335 = por %p333, %p334
      %s336 = ssub.s32 %s29, %s36
      %p337 = scmp.eq.s32.totalorder %s336, 0
      %s339 = sadd.s32 %s338, 1
      %s340 = scalar_select %p337, %s338, %s339
      %p343 = pneg %p337
      %p344 = scmp.eq.s32.totalorder %s29, 1
      %p345 = por %p343, %p344
      %p346 = scmp.ne.s32.totalorder %s338, %s341
      %p347 = scmp.eq.s32.totalorder %s29, 0
      %p348 = por %p346, %p347
      %p349 = scmp.ne.s32.totalorder %s338, %s341
      %p350 = scmp.eq.s32.totalorder %s34, 1
      %p351 = por %p349, %p350
      %p352 = scmp.ne.s32.totalorder %s341, %s342
      %p353 = scmp.eq.s32.totalorder %s34, 0
      %p354 = por %p352, %p353
      %p355 = scmp.ne.s32.totalorder %s341, %s342
      %p356 = scmp.eq.s32.totalorder %s35, 1
      %p357 = por %p355, %p356
      %p359 = scmp.ne.s32.totalorder %s342, %s358
      %p360 = scmp.eq.s32.totalorder %s35, 0
      %p361 = por %p359, %p360
      %p362 = scmp.le.s32.totalorder 1, %s29
      %p363 = scmp.lt.s32.totalorder %s29, 3
      %p364 = pnand %p362, %p363
      %p365 = pneg %p364
      // Predicated region
      $region9: #{vn_resnet_pointnet_forward.1} parent=5 // pred_check
        _
      $region10: #{vn_resnet_pointnet_forward.1} parent=5 // pred_check_branch
        %367 = sbr.rel (%p364) target = $region12
      $region11: #{vn_resnet_pointnet_forward.1} parent=5 // pred_region
        %s368 = ssub.s32 %s29, 1
        // Predicated region
        $region13: #{vn_resnet_pointnet_forward.1} parent=11 // pred_check
          %p369 = pneg %p76
        $region14: #{vn_resnet_pointnet_forward.1} parent=11 // pred_check_branch
          %371 = sbr.rel (%p369) target = $region16
        $region15: #{vn_resnet_pointnet_forward.1} parent=11 // pred_region
          %s373 = ssub.s32 128, 128
          %374 = vsyncadd [#allocation5], %s373
          %s376 = sshll.u32 [#allocation4], 4
          %s377 = int_to_ptr.vmem [resolvable:$true] %s376
          %379 = dma.hbm_to_vmem [thread:$0]  %s1, 128, %s377, [#allocation5]
        $region16: #{vn_resnet_pointnet_forward.1} parent=11 // pred_fallthru
          _
        // Predicated region
        $region17: #{vn_resnet_pointnet_forward.1} parent=11 // pred_check
          %p380 = pneg %p97
        $region18: #{vn_resnet_pointnet_forward.1} parent=11 // pred_check_branch
          %382 = sbr.rel (%p380) target = $region20
        $region19: #{vn_resnet_pointnet_forward.1} parent=11 // pred_region
          %s384 = ssub.s32 128, 128
          %385 = vsyncadd [#allocation5], %s384
          %s387 = sshll.u32 [#allocation6], 4
          %s388 = int_to_ptr.vmem [resolvable:$true] %s387
          %390 = dma.hbm_to_vmem [thread:$0]  %s2, 128, %s388, [#allocation5]
        $region20: #{vn_resnet_pointnet_forward.1} parent=11 // pred_fallthru
          _
        // Predicated region
        $region21: #{vn_resnet_pointnet_forward.1} parent=11 // pred_check
          %p391 = pneg %p118
        $region22: #{vn_resnet_pointnet_forward.1} parent=11 // pred_check_branch
          %393 = sbr.rel (%p391) target = $region24
        $region23: #{vn_resnet_pointnet_forward.1} parent=11 // pred_region
          %s395 = ssub.s32 128, 128
          %396 = vsyncadd [#allocation8], %s395
          %s398 = sshll.u32 [#allocation7], 4
          %s399 = int_to_ptr.vmem [resolvable:$true] %s398
          %401 = dma.hbm_to_vmem [thread:$0]  %s3, 128, %s399, [#allocation8]
        $region24: #{vn_resnet_pointnet_forward.1} parent=11 // pred_fallthru
          _
        // Predicated region
        $region25: #{vn_resnet_pointnet_forward.1} parent=11 // pred_check
          %p402 = pneg %p139
        $region26: #{vn_resnet_pointnet_forward.1} parent=11 // pred_check_branch
          %404 = sbr.rel (%p402) target = $region28
        $region27: #{vn_resnet_pointnet_forward.1} parent=11 // pred_region
          %s406 = ssub.s32 128, 128
          %407 = vsyncadd [#allocation8], %s406
          %s409 = sshll.u32 [#allocation9], 4
          %s410 = int_to_ptr.vmem [resolvable:$true] %s409
          %412 = dma.hbm_to_vmem [thread:$0]  %s4, 128, %s410, [#allocation8]
        $region28: #{vn_resnet_pointnet_forward.1} parent=11 // pred_fallthru
          _
        // Predicated region
        $region29: #{vn_resnet_pointnet_forward.1} parent=11 // pred_check
          %p413 = pneg %p160
        $region30: #{vn_resnet_pointnet_forward.1} parent=11 // pred_check_branch
          %415 = sbr.rel (%p413) target = $region32
        $region31: #{vn_resnet_pointnet_forward.1} parent=11 // pred_region
          %s417 = ssub.s32 256, 256
          %418 = vsyncadd [#allocation11], %s417
          %s419 = sshll.u32 [#allocation10], 4
          %s420 = int_to_ptr.vmem [resolvable:$true] %s419
          %425 = dma.hbm_to_vmem [thread:$0]  %s5, 256, %s420, [#allocation11], 128, 128, 8
        $region32: #{vn_resnet_pointnet_forward.1} parent=11 // pred_fallthru
          _
        // Predicated region
        $region33: #{vn_resnet_pointnet_forward.1} parent=11 // pred_check
          %p426 = pneg %p181
        $region34: #{vn_resnet_pointnet_forward.1} parent=11 // pred_check_branch
          %428 = sbr.rel (%p426) target = $region36
        $region35: #{vn_resnet_pointnet_forward.1} parent=11 // pred_region
          %s430 = ssub.s32 128, 128
          %431 = vsyncadd [#allocation11], %s430
          %s433 = sshll.u32 [#allocation12], 4
          %s434 = int_to_ptr.vmem [resolvable:$true] %s433
          %436 = dma.hbm_to_vmem [thread:$0]  %s6, 128, %s434, [#allocation11]
        $region36: #{vn_resnet_pointnet_forward.1} parent=11 // pred_fallthru
          _
        // Predicated region
        $region37: #{vn_resnet_pointnet_forward.1} parent=11 // pred_check
          %p437 = pneg %p202
        $region38: #{vn_resnet_pointnet_forward.1} parent=11 // pred_check_branch
          %439 = sbr.rel (%p437) target = $region40
        $region39: #{vn_resnet_pointnet_forward.1} parent=11 // pred_region
          %s441 = ssub.s32 128, 128
          %442 = vsyncadd [#allocation14], %s441
          %s444 = sshll.u32 [#allocation13], 4
          %s445 = int_to_ptr.vmem [resolvable:$true] %s444
          %447 = dma.hbm_to_vmem [thread:$0]  %s7, 128, %s445, [#allocation14]
        $region40: #{vn_resnet_pointnet_forward.1} parent=11 // pred_fallthru
          _
        // Predicated region
        $region41: #{vn_resnet_pointnet_forward.1} parent=11 // pred_check
          %p448 = pneg %p223
        $region42: #{vn_resnet_pointnet_forward.1} parent=11 // pred_check_branch
          %450 = sbr.rel (%p448) target = $region44
        $region43: #{vn_resnet_pointnet_forward.1} parent=11 // pred_region
          %s452 = ssub.s32 128, 128
          %453 = vsyncadd [#allocation14], %s452
          %s455 = sshll.u32 [#allocation15], 4
          %s456 = int_to_ptr.vmem [resolvable:$true] %s455
          %458 = dma.hbm_to_vmem [thread:$0]  %s8, 128, %s456, [#allocation14]
        $region44: #{vn_resnet_pointnet_forward.1} parent=11 // pred_fallthru
          _
        // Predicated region
        $region45: #{vn_resnet_pointnet_forward.1} parent=11 // pred_check
          %p459 = pneg %p244
        $region46: #{vn_resnet_pointnet_forward.1} parent=11 // pred_check_branch
          %461 = sbr.rel (%p459) target = $region48
        $region47: #{vn_resnet_pointnet_forward.1} parent=11 // pred_region
          %s463 = ssub.s32 128, 128
          %464 = vsyncadd [#allocation17], %s463
          %s466 = sshll.u32 [#allocation16], 4
          %s467 = int_to_ptr.vmem [resolvable:$true] %s466
          %469 = dma.hbm_to_vmem [thread:$0]  %s9, 128, %s467, [#allocation17]
        $region48: #{vn_resnet_pointnet_forward.1} parent=11 // pred_fallthru
          _
        // Predicated region
        $region49: #{vn_resnet_pointnet_forward.1} parent=11 // pred_check
          %p470 = pneg %p265
        $region50: #{vn_resnet_pointnet_forward.1} parent=11 // pred_check_branch
          %472 = sbr.rel (%p470) target = $region52
        $region51: #{vn_resnet_pointnet_forward.1} parent=11 // pred_region
          _
        $region52: #{vn_resnet_pointnet_forward.1} parent=11 // pred_fallthru
          _
        // Predicated region
        $region53: #{vn_resnet_pointnet_forward.1} parent=11 // pred_check
          %p473 = pneg %p286
        $region54: #{vn_resnet_pointnet_forward.1} parent=11 // pred_check_branch
          %475 = sbr.rel (%p473) target = $region56
        $region55: #{vn_resnet_pointnet_forward.1} parent=11 // pred_region
          %s477 = ssub.s32 256, 256
          %478 = vsyncadd [#allocation17], %s477
          %s479 = sshll.u32 [#allocation18], 4
          %s480 = int_to_ptr.vmem [resolvable:$true] %s479
          %485 = dma.hbm_to_vmem [thread:$0]  %s11, 256, %s480, [#allocation17], 128, 128, 8
        $region56: #{vn_resnet_pointnet_forward.1} parent=11 // pred_fallthru
          _
        // Predicated region
        $region57: #{vn_resnet_pointnet_forward.1} parent=11 // pred_check
          %p486 = pneg %p307
        $region58: #{vn_resnet_pointnet_forward.1} parent=11 // pred_check_branch
          %488 = sbr.rel (%p486) target = $region60
        $region59: #{vn_resnet_pointnet_forward.1} parent=11 // pred_region
          %s490 = ssub.s32 256, 256
          %491 = vsyncadd [#allocation20], %s490
          %s492 = sshll.u32 [#allocation19], 4
          %s493 = int_to_ptr.vmem [resolvable:$true] %s492
          %498 = dma.hbm_to_vmem [thread:$0]  %s12, 256, %s493, [#allocation20], 128, 128, 8
        $region60: #{vn_resnet_pointnet_forward.1} parent=11 // pred_fallthru
          _
        // Predicated region
        $region61: #{vn_resnet_pointnet_forward.1} parent=11 // pred_check
          %p499 = pneg %p328
        $region62: #{vn_resnet_pointnet_forward.1} parent=11 // pred_check_branch
          %501 = sbr.rel (%p499) target = $region64
        $region63: #{vn_resnet_pointnet_forward.1} parent=11 // pred_region
          %s503 = ssub.s32 256, 256
          %504 = vsyncadd [#allocation20], %s503
          %s505 = sshll.u32 [#allocation21], 4
          %s506 = int_to_ptr.vmem [resolvable:$true] %s505
          %511 = dma.hbm_to_vmem [thread:$0]  %s13, 256, %s506, [#allocation20], 128, 128, 8
        $region64: #{vn_resnet_pointnet_forward.1} parent=11 // pred_fallthru
          _
      $region12: #{vn_resnet_pointnet_forward.1} parent=5 // pred_fallthru
        _
      %p512 = scmp.lt.s32.totalorder %s29, 2
      // Predicated region
      $region65: #{vn_resnet_pointnet_forward.1} parent=5 // pred_check
        %p513 = pneg %p512
      $region66: #{vn_resnet_pointnet_forward.1} parent=5 // pred_check_branch
        %515 = sbr.rel (%p513) target = $region68
      $region67: #{vn_resnet_pointnet_forward.1} parent=5 // pred_region
        // Predicated region
        $region69: #{vn_resnet_pointnet_forward.1} parent=67 // pred_check
          %p516 = pneg %p49
        $region70: #{vn_resnet_pointnet_forward.1} parent=67 // pred_check_branch
          %518 = sbr.rel (%p516) target = $region72
        $region71: #{vn_resnet_pointnet_forward.1} parent=67 // pred_region
          %s519 = sand.u32 %s39, 1
          %s520 = scalar_lea.sflag [#allocation3], %s519
          %s521 = sand.u32 %s39, 1
          %s522 = smul.addr %s521, 48
          %s523 = scalar_lea.vmem [#allocation2], %s522
          %s525 = ssub.s32 768, 768
          %526 = vsyncadd %s520, %s525
          %s527 = smul.addr %s29, 6
          %s528 = smul.addr %s527, 128
          %s529 = scalar_lea.hbm %s0, %s528
          %s531 = sshll.u32 %s523, 4
          %s532 = int_to_ptr.vmem [resolvable:$true] %s531
          %534 = dma.hbm_to_vmem [thread:$0]  %s529, 768, %s532, %s520
        $region72: #{vn_resnet_pointnet_forward.1} parent=67 // pred_fallthru
          _
      $region68: #{vn_resnet_pointnet_forward.1} parent=5 // pred_fallthru
        _
      %p535 = scmp.le.s32.totalorder 1, %s29
      %p536 = scmp.lt.s32.totalorder %s29, 3
      %p537 = pnand %p535, %p536
      %p538 = pneg %p537
      // Predicated region
      $region73: #{vn_resnet_pointnet_forward.1} parent=5 // pred_check
        _
      $region74: #{vn_resnet_pointnet_forward.1} parent=5 // pred_check_branch
        %540 = sbr.rel (%p537) target = $region76
      $region75: #{vn_resnet_pointnet_forward.1} parent=5 // pred_region
        %s541 = ssub.s32 %s29, 1
        %s542 = sand.u32 %s42, 1
        %s543 = scalar_lea.sflag [#allocation3], %s542
        %s544 = sand.u32 %s42, 1
        %s545 = smul.addr %s544, 48
        %s546 = scalar_lea.vmem [#allocation2], %s545
        // Predicated region
        $region77: #{vn_resnet_pointnet_forward.1} parent=75 // pred_check
          %p547 = pneg %p55
        $region78: #{vn_resnet_pointnet_forward.1} parent=75 // pred_check_branch
          %549 = sbr.rel (%p547) target = $region80
        $region79: #{vn_resnet_pointnet_forward.1} parent=75 // pred_region
          %550 = dma.done %s543, 768
        $region80: #{vn_resnet_pointnet_forward.1} parent=75 // pred_fallthru
          _
        // Predicated region
        $region81: #{vn_resnet_pointnet_forward.1} parent=75 // pred_check
          %p551 = pneg %p76
        $region82: #{vn_resnet_pointnet_forward.1} parent=75 // pred_check_branch
          %553 = sbr.rel (%p551) target = $region84
        $region83: #{vn_resnet_pointnet_forward.1} parent=75 // pred_region
          %554 = dma.done [#allocation5], 128
        $region84: #{vn_resnet_pointnet_forward.1} parent=75 // pred_fallthru
          _
        // Predicated region
        $region85: #{vn_resnet_pointnet_forward.1} parent=75 // pred_check
          %p555 = pneg %p97
        $region86: #{vn_resnet_pointnet_forward.1} parent=75 // pred_check_branch
          %557 = sbr.rel (%p555) target = $region88
        $region87: #{vn_resnet_pointnet_forward.1} parent=75 // pred_region
          %558 = dma.done [#allocation5], 128
        $region88: #{vn_resnet_pointnet_forward.1} parent=75 // pred_fallthru
          _
        // Predicated region
        $region89: #{vn_resnet_pointnet_forward.1} parent=75 // pred_check
          %p559 = pneg %p118
        $region90: #{vn_resnet_pointnet_forward.1} parent=75 // pred_check_branch
          %561 = sbr.rel (%p559) target = $region92
        $region91: #{vn_resnet_pointnet_forward.1} parent=75 // pred_region
          %562 = dma.done [#allocation8], 128
        $region92: #{vn_resnet_pointnet_forward.1} parent=75 // pred_fallthru
          _
        // Predicated region
        $region93: #{vn_resnet_pointnet_forward.1} parent=75 // pred_check
          %p563 = pneg %p139
        $region94: #{vn_resnet_pointnet_forward.1} parent=75 // pred_check_branch
          %565 = sbr.rel (%p563) target = $region96
        $region95: #{vn_resnet_pointnet_forward.1} parent=75 // pred_region
          %566 = dma.done [#allocation8], 128
        $region96: #{vn_resnet_pointnet_forward.1} parent=75 // pred_fallthru
          _
        // Predicated region
        $region97: #{vn_resnet_pointnet_forward.1} parent=75 // pred_check
          %p567 = pneg %p160
        $region98: #{vn_resnet_pointnet_forward.1} parent=75 // pred_check_branch
          %569 = sbr.rel (%p567) target = $region100
        $region99: #{vn_resnet_pointnet_forward.1} parent=75 // pred_region
          %570 = dma.done [#allocation11], 256
        $region100: #{vn_resnet_pointnet_forward.1} parent=75 // pred_fallthru
          _
        // Predicated region
        $region101: #{vn_resnet_pointnet_forward.1} parent=75 // pred_check
          %p571 = pneg %p181
        $region102: #{vn_resnet_pointnet_forward.1} parent=75 // pred_check_branch
          %573 = sbr.rel (%p571) target = $region104
        $region103: #{vn_resnet_pointnet_forward.1} parent=75 // pred_region
          %574 = dma.done [#allocation11], 128
        $region104: #{vn_resnet_pointnet_forward.1} parent=75 // pred_fallthru
          _
        // Predicated region
        $region105: #{vn_resnet_pointnet_forward.1} parent=75 // pred_check
          %p575 = pneg %p202
        $region106: #{vn_resnet_pointnet_forward.1} parent=75 // pred_check_branch
          %577 = sbr.rel (%p575) target = $region108
        $region107: #{vn_resnet_pointnet_forward.1} parent=75 // pred_region
          %578 = dma.done [#allocation14], 128
        $region108: #{vn_resnet_pointnet_forward.1} parent=75 // pred_fallthru
          _
        // Predicated region
        $region109: #{vn_resnet_pointnet_forward.1} parent=75 // pred_check
          %p579 = pneg %p223
        $region110: #{vn_resnet_pointnet_forward.1} parent=75 // pred_check_branch
          %581 = sbr.rel (%p579) target = $region112
        $region111: #{vn_resnet_pointnet_forward.1} parent=75 // pred_region
          %582 = dma.done [#allocation14], 128
        $region112: #{vn_resnet_pointnet_forward.1} parent=75 // pred_fallthru
          _
        // Predicated region
        $region113: #{vn_resnet_pointnet_forward.1} parent=75 // pred_check
          %p583 = pneg %p244
        $region114: #{vn_resnet_pointnet_forward.1} parent=75 // pred_check_branch
          %585 = sbr.rel (%p583) target = $region116
        $region115: #{vn_resnet_pointnet_forward.1} parent=75 // pred_region
          %586 = dma.done [#allocation17], 128
        $region116: #{vn_resnet_pointnet_forward.1} parent=75 // pred_fallthru
          _
        // Predicated region
        $region117: #{vn_resnet_pointnet_forward.1} parent=75 // pred_check
          %p587 = pneg %p286
        $region118: #{vn_resnet_pointnet_forward.1} parent=75 // pred_check_branch
          %589 = sbr.rel (%p587) target = $region120
        $region119: #{vn_resnet_pointnet_forward.1} parent=75 // pred_region
          %590 = dma.done [#allocation17], 256
        $region120: #{vn_resnet_pointnet_forward.1} parent=75 // pred_fallthru
          _
        // Predicated region
        $region121: #{vn_resnet_pointnet_forward.1} parent=75 // pred_check
          %p591 = pneg %p307
        $region122: #{vn_resnet_pointnet_forward.1} parent=75 // pred_check_branch
          %593 = sbr.rel (%p591) target = $region124
        $region123: #{vn_resnet_pointnet_forward.1} parent=75 // pred_region
          %594 = dma.done [#allocation20], 256
        $region124: #{vn_resnet_pointnet_forward.1} parent=75 // pred_fallthru
          _
        // Predicated region
        $region125: #{vn_resnet_pointnet_forward.1} parent=75 // pred_check
          %p595 = pneg %p328
        $region126: #{vn_resnet_pointnet_forward.1} parent=75 // pred_check_branch
          %597 = sbr.rel (%p595) target = $region128
        $region127: #{vn_resnet_pointnet_forward.1} parent=75 // pred_region
          %598 = dma.done [#allocation20], 256
        $region128: #{vn_resnet_pointnet_forward.1} parent=75 // pred_fallthru
          _
        %s599 = sand.u32 %s42, 1
        %s600 = scalar_lea.sflag [#allocation3], %s599
        %s601 = sand.u32 %s42, 1
        %s602 = smul.addr %s601, 48
        %s603 = scalar_lea.vmem [#allocation2], %s602
        %p604 = pneg %p55
        %p605 = pneg %p52
        %p606 = pneg %p76
        %p607 = pneg %p73
        %p608 = pneg %p97
        %p609 = pneg %p94
        %p610 = pneg %p118
        %p611 = pneg %p115
        %p612 = pneg %p139
        %p613 = pneg %p136
        %p614 = pneg %p160
        %p615 = pneg %p157
        %p616 = pneg %p181
        %p617 = pneg %p178
        %p618 = pneg %p202
        %p619 = pneg %p199
        %p620 = pneg %p223
        %p621 = pneg %p220
        %p622 = pneg %p244
        %p623 = pneg %p241
        %p624 = pneg %p265
        %p625 = pneg %p262
        %p626 = pneg %p286
        %p627 = pneg %p283
        %p628 = pneg %p307
        %p629 = pneg %p304
        %p630 = pneg %p328
        %p631 = pneg %p325
        %p632 = pneg %p354
        %p633 = pneg %p351
        %p634 = scmp.lt.s32.totalorder %s34, 1
        %s635 = scalar_select %p634, %s34, 1
        %s636 = smul.addr %s635, 12
        %s637 = smul.addr %s636, 8
        %s638 = scalar_lea.vmem %s14, %s637
        %p639 = scmp.lt.s32.totalorder %s34, 1
        %s640 = scalar_select %p639, %s34, 1
        %s641 = smul.addr %s640, 12
        %s642 = smul.addr %s641, 8
        %s643 = scalar_lea.vmem %s14, %s642
        %v644 = vld [vmem:[%s546] sm:$0xff]
        %v645 = vld [vmem:[%s546 + $0x8] sm:$0xff]
        %v646 = vld [vmem:[%s546 + $0x10] sm:$0xff]
        %v647 = vld [vmem:[%s546 + $0x18] sm:$0xff]
        %v648 = vld [vmem:[%s546 + $0x20] sm:$0xff]
        %v649 = vld [vmem:[%s546 + $0x28] sm:$0xff]
        %v650 = vld [vmem:[#allocation4] sm:$0xff]
        %v651 = vld [vmem:[#allocation6] sm:$0xff]
        %v652 = vld [vmem:[#allocation7] sm:$0xff]
        %v653 = vld [vmem:[#allocation9] sm:$0xff]
        %vm654 = vcmask 64512
        %v656 = vsel %vm654, %v650, 0
        %658 = vmatprep.subr.mxu0 0.0
        %659 = vmatpush1.msra.mxu0 0.0
        %660 = vmatprep.subr.mxu0 0.0
        %661 = vmatpush1.msra.mxu0 0.0
        %662 = vmatprep.subr.mxu0 0.0
        %663 = vmatpush1.msra.mxu0 0.0
        %664 = vmatprep.subr.mxu0 0.0
        %665 = vmatpush1.msra.mxu0 0.0
        %666 = vmatprep.subr.mxu0 0.0
        %667 = vmatpush1.msra.mxu0 0.0
        %668 = vmatprep.subr.mxu0 0.0
        %669 = vmatpush1.msra.mxu0 0.0
        %670 = vmatprep.subr.mxu0 0.0
        %671 = vmatpush1.msra.mxu0 0.0
        %672 = vmatprep.subr.mxu0 0.0
        %673 = vmatpush1.msra.mxu0 0.0
        %674 = vmatprep.subr.mxu0 0.0
        %675 = vmatpush1.msra.mxu0 0.0
        %676 = vmatprep.subr.mxu0 0.0
        %677 = vmatpush1.msra.mxu0 0.0
        %678 = vmatprep.subr.mxu0 0.0
        %679 = vmatpush1.msra.mxu0 0.0
        %680 = vmatprep.subr.mxu0 0.0
        %681 = vmatpush1.msra.mxu0 0.0
        %682 = vmatprep.subr.mxu0 0.0
        %683 = vmatpush1.msra.mxu0 0.0
        %684 = vmatprep.subr.mxu0 0.0
        %685 = vmatpush1.msra.mxu0 0.0
        %686 = vmatprep.subr.mxu0 0.0
        %687 = vmatpush1.msra.mxu0 0.0
        %688 = vmatprep.subr.mxu0 %v645
        %689 = vmatpush1.msra.mxu0 %v644
        %690 = vmatprep.subr.mxu0 0.0
        %691 = vmatpush2.msra.mxu0 0.0
        %692 = vmatprep.subr.mxu0 0.0
        %693 = vmatpush2.msra.mxu0 0.0
        %694 = vmatprep.subr.mxu0 0.0
        %695 = vmatpush2.msra.mxu0 0.0
        %696 = vmatprep.subr.mxu0 0.0
        %697 = vmatpush2.msra.mxu0 0.0
        %698 = vmatprep.subr.mxu0 0.0
        %699 = vmatpush2.msra.mxu0 0.0
        %700 = vmatprep.subr.mxu0 0.0
        %701 = vmatpush2.msra.mxu0 0.0
        %702 = vmatprep.subr.mxu0 0.0
        %703 = vmatpush2.msra.mxu0 0.0
        %704 = vmatprep.subr.mxu0 0.0
        %705 = vmatpush2.msra.mxu0 0.0
        %706 = vmatprep.subr.mxu0 0.0
        %707 = vmatpush2.msra.mxu0 0.0
        %708 = vmatprep.subr.mxu0 0.0
        %709 = vmatpush2.msra.mxu0 0.0
        %710 = vmatprep.subr.mxu0 0.0
        %711 = vmatpush2.msra.mxu0 0.0
        %712 = vmatprep.subr.mxu0 0.0
        %713 = vmatpush2.msra.mxu0 0.0
        %714 = vmatprep.subr.mxu0 0.0
        %715 = vmatpush2.msra.mxu0 0.0
        %716 = vmatprep.subr.mxu0 0.0
        %717 = vmatpush2.msra.mxu0 0.0
        %718 = vmatprep.subr.mxu0 0.0
        %719 = vmatpush2.msra.mxu0 0.0
        %720 = vmatprep.subr.mxu0 0.0
        %721 = vmatpush2.msra.mxu0 0.0
        %722 = vmatprep.mubr.f32.mxu0 0.0
        %723 = vmatmul.mubr.f32.gmra.mxu0 %v656
        %v724 = vpop.f32.mrf.mxu0
        %v725 = vadd.f32 0.0, %v724
        %v726 = vpop.f32.mrf.mxu0
        %v727 = vadd.f32 0.0, %v726
        %728 = vdwg.mxu0
        %729 = vmatprep.subr.mxu0 0.0
        %730 = vmatpush1.msra.mxu0 0.0
        %731 = vmatprep.subr.mxu0 0.0
        %732 = vmatpush1.msra.mxu0 0.0
        %733 = vmatprep.subr.mxu0 0.0
        %734 = vmatpush1.msra.mxu0 0.0
        %735 = vmatprep.subr.mxu0 0.0
        %736 = vmatpush1.msra.mxu0 0.0
        %737 = vmatprep.subr.mxu0 0.0
        %738 = vmatpush1.msra.mxu0 0.0
        %739 = vmatprep.subr.mxu0 0.0
        %740 = vmatpush1.msra.mxu0 0.0
        %741 = vmatprep.subr.mxu0 0.0
        %742 = vmatpush1.msra.mxu0 0.0
        %743 = vmatprep.subr.mxu0 0.0
        %744 = vmatpush1.msra.mxu0 0.0
        %745 = vmatprep.subr.mxu0 0.0
        %746 = vmatpush1.msra.mxu0 0.0
        %747 = vmatprep.subr.mxu0 0.0
        %748 = vmatpush1.msra.mxu0 0.0
        %749 = vmatprep.subr.mxu0 0.0
        %750 = vmatpush1.msra.mxu0 0.0
        %751 = vmatprep.subr.mxu0 0.0
        %752 = vmatpush1.msra.mxu0 0.0
        %753 = vmatprep.subr.mxu0 0.0
        %754 = vmatpush1.msra.mxu0 0.0
        %755 = vmatprep.subr.mxu0 0.0
        %756 = vmatpush1.msra.mxu0 0.0
        %757 = vmatprep.subr.mxu0 0.0
        %758 = vmatpush1.msra.mxu0 0.0
        %759 = vmatprep.subr.mxu0 %v647
        %760 = vmatpush1.msra.mxu0 %v646
        %761 = vmatprep.subr.mxu0 0.0
        %762 = vmatpush2.msra.mxu0 0.0
        %763 = vmatprep.subr.mxu0 0.0
        %764 = vmatpush2.msra.mxu0 0.0
        %765 = vmatprep.subr.mxu0 0.0
        %766 = vmatpush2.msra.mxu0 0.0
        %767 = vmatprep.subr.mxu0 0.0
        %768 = vmatpush2.msra.mxu0 0.0
        %769 = vmatprep.subr.mxu0 0.0
        %770 = vmatpush2.msra.mxu0 0.0
        %771 = vmatprep.subr.mxu0 0.0
        %772 = vmatpush2.msra.mxu0 0.0
        %773 = vmatprep.subr.mxu0 0.0
        %774 = vmatpush2.msra.mxu0 0.0
        %775 = vmatprep.subr.mxu0 0.0
        %776 = vmatpush2.msra.mxu0 0.0
        %777 = vmatprep.subr.mxu0 0.0
        %778 = vmatpush2.msra.mxu0 0.0
        %779 = vmatprep.subr.mxu0 0.0
        %780 = vmatpush2.msra.mxu0 0.0
        %781 = vmatprep.subr.mxu0 0.0
        %782 = vmatpush2.msra.mxu0 0.0
        %783 = vmatprep.subr.mxu0 0.0
        %784 = vmatpush2.msra.mxu0 0.0
        %785 = vmatprep.subr.mxu0 0.0
        %786 = vmatpush2.msra.mxu0 0.0
        %787 = vmatprep.subr.mxu0 0.0
        %788 = vmatpush2.msra.mxu0 0.0
        %789 = vmatprep.subr.mxu0 0.0
        %790 = vmatpush2.msra.mxu0 0.0
        %791 = vmatprep.subr.mxu0 0.0
        %792 = vmatpush2.msra.mxu0 0.0
        %793 = vmatprep.mubr.f32.mxu0 0.0
        %794 = vmatmul.mubr.f32.gmra.mxu0 %v656
        %v795 = vpop.f32.mrf.mxu0
        %v796 = vadd.f32 0.0, %v795
        %v797 = vpop.f32.mrf.mxu0
        %v798 = vadd.f32 0.0, %v797
        %799 = vdwg.mxu0
        %800 = vmatprep.subr.mxu0 0.0
        %801 = vmatpush1.msra.mxu0 0.0
        %802 = vmatprep.subr.mxu0 0.0
        %803 = vmatpush1.msra.mxu0 0.0
        %804 = vmatprep.subr.mxu0 0.0
        %805 = vmatpush1.msra.mxu0 0.0
        %806 = vmatprep.subr.mxu0 0.0
        %807 = vmatpush1.msra.mxu0 0.0
        %808 = vmatprep.subr.mxu0 0.0
        %809 = vmatpush1.msra.mxu0 0.0
        %810 = vmatprep.subr.mxu0 0.0
        %811 = vmatpush1.msra.mxu0 0.0
        %812 = vmatprep.subr.mxu0 0.0
        %813 = vmatpush1.msra.mxu0 0.0
        %814 = vmatprep.subr.mxu0 0.0
        %815 = vmatpush1.msra.mxu0 0.0
        %816 = vmatprep.subr.mxu0 0.0
        %817 = vmatpush1.msra.mxu0 0.0
        %818 = vmatprep.subr.mxu0 0.0
        %819 = vmatpush1.msra.mxu0 0.0
        %820 = vmatprep.subr.mxu0 0.0
        %821 = vmatpush1.msra.mxu0 0.0
        %822 = vmatprep.subr.mxu0 0.0
        %823 = vmatpush1.msra.mxu0 0.0
        %824 = vmatprep.subr.mxu0 0.0
        %825 = vmatpush1.msra.mxu0 0.0
        %826 = vmatprep.subr.mxu0 0.0
        %827 = vmatpush1.msra.mxu0 0.0
        %828 = vmatprep.subr.mxu0 0.0
        %829 = vmatpush1.msra.mxu0 0.0
        %830 = vmatprep.subr.mxu0 %v649
        %831 = vmatpush1.msra.mxu0 %v648
        %832 = vmatprep.subr.mxu0 0.0
        %833 = vmatpush2.msra.mxu0 0.0
        %834 = vmatprep.subr.mxu0 0.0
        %835 = vmatpush2.msra.mxu0 0.0
        %836 = vmatprep.subr.mxu0 0.0
        %837 = vmatpush2.msra.mxu0 0.0
        %838 = vmatprep.subr.mxu0 0.0
        %839 = vmatpush2.msra.mxu0 0.0
        %840 = vmatprep.subr.mxu0 0.0
        %841 = vmatpush2.msra.mxu0 0.0
        %842 = vmatprep.subr.mxu0 0.0
        %843 = vmatpush2.msra.mxu0 0.0
        %844 = vmatprep.subr.mxu0 0.0
        %845 = vmatpush2.msra.mxu0 0.0
        %846 = vmatprep.subr.mxu0 0.0
        %847 = vmatpush2.msra.mxu0 0.0
        %848 = vmatprep.subr.mxu0 0.0
        %849 = vmatpush2.msra.mxu0 0.0
        %850 = vmatprep.subr.mxu0 0.0
        %851 = vmatpush2.msra.mxu0 0.0
        %852 = vmatprep.subr.mxu0 0.0
        %853 = vmatpush2.msra.mxu0 0.0
        %854 = vmatprep.subr.mxu0 0.0
        %855 = vmatpush2.msra.mxu0 0.0
        %856 = vmatprep.subr.mxu0 0.0
        %857 = vmatpush2.msra.mxu0 0.0
        %858 = vmatprep.subr.mxu0 0.0
        %859 = vmatpush2.msra.mxu0 0.0
        %860 = vmatprep.subr.mxu0 0.0
        %861 = vmatpush2.msra.mxu0 0.0
        %862 = vmatprep.subr.mxu0 0.0
        %863 = vmatpush2.msra.mxu0 0.0
        %864 = vmatprep.mubr.f32.mxu0 0.0
        %865 = vmatmul.mubr.f32.gmra.mxu0 %v656
        %v866 = vpop.f32.mrf.mxu0
        %v867 = vadd.f32 0.0, %v866
        %v868 = vpop.f32.mrf.mxu0
        %v869 = vadd.f32 0.0, %v868
        %870 = vdwg.mxu0
        %v871 = vmul.f32 %v644, %v725
        %v872 = vmul.f32 %v645, %v727
        %v873 = vmul.f32 %v646, %v796
        %v874 = vmul.f32 %v647, %v798
        %v875 = vadd.f32 %v871, %v873
        %v876 = vadd.f32 %v872, %v874
        %v877 = vmul.f32 %v648, %v867
        %v878 = vmul.f32 %v649, %v869
        %v879 = vadd.f32 %v875, %v877
        %v880 = vadd.f32 %v876, %v878
        %v881 = vmul.f32 %v725, %v725
        %v882 = vmul.f32 %v727, %v727
        %v883 = vmul.f32 %v796, %v796
        %v884 = vmul.f32 %v798, %v798
        %v885 = vadd.f32 %v881, %v883
        %v886 = vadd.f32 %v882, %v884
        %v887 = vmul.f32 %v867, %v867
        %v888 = vmul.f32 %v869, %v869
        %v889 = vadd.f32 %v885, %v887
        %v890 = vadd.f32 %v886, %v888
        %v891 = vadd.f32 %v889, 1e-06
        %v892 = vadd.f32 %v890, 1e-06
        %vm893 = vcmp.lt.f32.partialorder %v879, 0.0
        %vm894 = vcmp.lt.f32.partialorder %v880, 0.0
        %v895 = vrcp.pop %v891
        %v896 = vrcp.pop %v892
        %v897 = vmul.f32 %v879, %v895
        %v898 = vmul.f32 %v880, %v896
        %v899 = vsel %vm893, %v897, 0.0
        %v900 = vsel %vm894, %v898, 0.0
        %v901 = vmul.f32 %v899, %v725
        %v902 = vmul.f32 %v900, %v727
        %v903 = vmul.f32 %v899, %v796
        %v904 = vmul.f32 %v900, %v798
        %v905 = vmul.f32 %v899, %v867
        %v906 = vmul.f32 %v900, %v869
        %v907 = vsub.f32 %v644, %v901
        %v908 = vsub.f32 %v645, %v902
        %v909 = vsub.f32 %v646, %v903
        %v910 = vsub.f32 %v647, %v904
        %v911 = vsub.f32 %v648, %v905
        %v912 = vsub.f32 %v649, %v906
        %v914 = vsel %vm654, %v651, 0
        %916 = vmatprep.subr.mxu0 0.0
        %917 = vmatpush1.msra.mxu0 0.0
        %918 = vmatprep.subr.mxu0 0.0
        %919 = vmatpush1.msra.mxu0 0.0
        %920 = vmatprep.subr.mxu0 0.0
        %921 = vmatpush1.msra.mxu0 0.0
        %922 = vmatprep.subr.mxu0 0.0
        %923 = vmatpush1.msra.mxu0 0.0
        %924 = vmatprep.subr.mxu0 0.0
        %925 = vmatpush1.msra.mxu0 0.0
        %926 = vmatprep.subr.mxu0 0.0
        %927 = vmatpush1.msra.mxu0 0.0
        %928 = vmatprep.subr.mxu0 0.0
        %929 = vmatpush1.msra.mxu0 0.0
        %930 = vmatprep.subr.mxu0 0.0
        %931 = vmatpush1.msra.mxu0 0.0
        %932 = vmatprep.subr.mxu0 0.0
        %933 = vmatpush1.msra.mxu0 0.0
        %934 = vmatprep.subr.mxu0 0.0
        %935 = vmatpush1.msra.mxu0 0.0
        %936 = vmatprep.subr.mxu0 0.0
        %937 = vmatpush1.msra.mxu0 0.0
        %938 = vmatprep.subr.mxu0 0.0
        %939 = vmatpush1.msra.mxu0 0.0
        %940 = vmatprep.subr.mxu0 0.0
        %941 = vmatpush1.msra.mxu0 0.0
        %942 = vmatprep.subr.mxu0 0.0
        %943 = vmatpush1.msra.mxu0 0.0
        %944 = vmatprep.subr.mxu0 0.0
        %945 = vmatpush1.msra.mxu0 0.0
        %946 = vmatprep.subr.mxu0 %v908
        %947 = vmatpush1.msra.mxu0 %v907
        %948 = vmatprep.subr.mxu0 0.0
        %949 = vmatpush2.msra.mxu0 0.0
        %950 = vmatprep.subr.mxu0 0.0
        %951 = vmatpush2.msra.mxu0 0.0
        %952 = vmatprep.subr.mxu0 0.0
        %953 = vmatpush2.msra.mxu0 0.0
        %954 = vmatprep.subr.mxu0 0.0
        %955 = vmatpush2.msra.mxu0 0.0
        %956 = vmatprep.subr.mxu0 0.0
        %957 = vmatpush2.msra.mxu0 0.0
        %958 = vmatprep.subr.mxu0 0.0
        %959 = vmatpush2.msra.mxu0 0.0
        %960 = vmatprep.subr.mxu0 0.0
        %961 = vmatpush2.msra.mxu0 0.0
        %962 = vmatprep.subr.mxu0 0.0
        %963 = vmatpush2.msra.mxu0 0.0
        %964 = vmatprep.subr.mxu0 0.0
        %965 = vmatpush2.msra.mxu0 0.0
        %966 = vmatprep.subr.mxu0 0.0
        %967 = vmatpush2.msra.mxu0 0.0
        %968 = vmatprep.subr.mxu0 0.0
        %969 = vmatpush2.msra.mxu0 0.0
        %970 = vmatprep.subr.mxu0 0.0
        %971 = vmatpush2.msra.mxu0 0.0
        %972 = vmatprep.subr.mxu0 0.0
        %973 = vmatpush2.msra.mxu0 0.0
        %974 = vmatprep.subr.mxu0 0.0
        %975 = vmatpush2.msra.mxu0 0.0
        %976 = vmatprep.subr.mxu0 0.0
        %977 = vmatpush2.msra.mxu0 0.0
        %978 = vmatprep.subr.mxu0 0.0
        %979 = vmatpush2.msra.mxu0 0.0
        %980 = vmatprep.mubr.f32.mxu0 0.0
        %981 = vmatmul.mubr.f32.gmra.mxu0 %v914
        %v982 = vpop.f32.mrf.mxu0
        %v983 = vadd.f32 0.0, %v982
        %v984 = vpop.f32.mrf.mxu0
        %v985 = vadd.f32 0.0, %v984
        %986 = vdwg.mxu0
        %987 = vmatprep.subr.mxu0 0.0
        %988 = vmatpush1.msra.mxu0 0.0
        %989 = vmatprep.subr.mxu0 0.0
        %990 = vmatpush1.msra.mxu0 0.0
        %991 = vmatprep.subr.mxu0 0.0
        %992 = vmatpush1.msra.mxu0 0.0
        %993 = vmatprep.subr.mxu0 0.0
        %994 = vmatpush1.msra.mxu0 0.0
        %995 = vmatprep.subr.mxu0 0.0
        %996 = vmatpush1.msra.mxu0 0.0
        %997 = vmatprep.subr.mxu0 0.0
        %998 = vmatpush1.msra.mxu0 0.0
        %999 = vmatprep.subr.mxu0 0.0
        %1000 = vmatpush1.msra.mxu0 0.0
        %1001 = vmatprep.subr.mxu0 0.0
        %1002 = vmatpush1.msra.mxu0 0.0
        %1003 = vmatprep.subr.mxu0 0.0
        %1004 = vmatpush1.msra.mxu0 0.0
        %1005 = vmatprep.subr.mxu0 0.0
        %1006 = vmatpush1.msra.mxu0 0.0
        %1007 = vmatprep.subr.mxu0 0.0
        %1008 = vmatpush1.msra.mxu0 0.0
        %1009 = vmatprep.subr.mxu0 0.0
        %1010 = vmatpush1.msra.mxu0 0.0
        %1011 = vmatprep.subr.mxu0 0.0
        %1012 = vmatpush1.msra.mxu0 0.0
        %1013 = vmatprep.subr.mxu0 0.0
        %1014 = vmatpush1.msra.mxu0 0.0
        %1015 = vmatprep.subr.mxu0 0.0
        %1016 = vmatpush1.msra.mxu0 0.0
        %1017 = vmatprep.subr.mxu0 %v910
        %1018 = vmatpush1.msra.mxu0 %v909
        %1019 = vmatprep.subr.mxu0 0.0
        %1020 = vmatpush2.msra.mxu0 0.0
        %1021 = vmatprep.subr.mxu0 0.0
        %1022 = vmatpush2.msra.mxu0 0.0
        %1023 = vmatprep.subr.mxu0 0.0
        %1024 = vmatpush2.msra.mxu0 0.0
        %1025 = vmatprep.subr.mxu0 0.0
        %1026 = vmatpush2.msra.mxu0 0.0
        %1027 = vmatprep.subr.mxu0 0.0
        %1028 = vmatpush2.msra.mxu0 0.0
        %1029 = vmatprep.subr.mxu0 0.0
        %1030 = vmatpush2.msra.mxu0 0.0
        %1031 = vmatprep.subr.mxu0 0.0
        %1032 = vmatpush2.msra.mxu0 0.0
        %1033 = vmatprep.subr.mxu0 0.0
        %1034 = vmatpush2.msra.mxu0 0.0
        %1035 = vmatprep.subr.mxu0 0.0
        %1036 = vmatpush2.msra.mxu0 0.0
        %1037 = vmatprep.subr.mxu0 0.0
        %1038 = vmatpush2.msra.mxu0 0.0
        %1039 = vmatprep.subr.mxu0 0.0
        %1040 = vmatpush2.msra.mxu0 0.0
        %1041 = vmatprep.subr.mxu0 0.0
        %1042 = vmatpush2.msra.mxu0 0.0
        %1043 = vmatprep.subr.mxu0 0.0
        %1044 = vmatpush2.msra.mxu0 0.0
        %1045 = vmatprep.subr.mxu0 0.0
        %1046 = vmatpush2.msra.mxu0 0.0
        %1047 = vmatprep.subr.mxu0 0.0
        %1048 = vmatpush2.msra.mxu0 0.0
        %1049 = vmatprep.subr.mxu0 0.0
        %1050 = vmatpush2.msra.mxu0 0.0
        %1051 = vmatprep.mubr.f32.mxu0 0.0
        %1052 = vmatmul.mubr.f32.gmra.mxu0 %v914
        %v1053 = vpop.f32.mrf.mxu0
        %v1054 = vadd.f32 0.0, %v1053
        %v1055 = vpop.f32.mrf.mxu0
        %v1056 = vadd.f32 0.0, %v1055
        %1057 = vdwg.mxu0
        %1058 = vmatprep.subr.mxu0 0.0
        %1059 = vmatpush1.msra.mxu0 0.0
        %1060 = vmatprep.subr.mxu0 0.0
        %1061 = vmatpush1.msra.mxu0 0.0
        %1062 = vmatprep.subr.mxu0 0.0
        %1063 = vmatpush1.msra.mxu0 0.0
        %1064 = vmatprep.subr.mxu0 0.0
        %1065 = vmatpush1.msra.mxu0 0.0
        %1066 = vmatprep.subr.mxu0 0.0
        %1067 = vmatpush1.msra.mxu0 0.0
        %1068 = vmatprep.subr.mxu0 0.0
        %1069 = vmatpush1.msra.mxu0 0.0
        %1070 = vmatprep.subr.mxu0 0.0
        %1071 = vmatpush1.msra.mxu0 0.0
        %1072 = vmatprep.subr.mxu0 0.0
        %1073 = vmatpush1.msra.mxu0 0.0
        %1074 = vmatprep.subr.mxu0 0.0
        %1075 = vmatpush1.msra.mxu0 0.0
        %1076 = vmatprep.subr.mxu0 0.0
        %1077 = vmatpush1.msra.mxu0 0.0
        %1078 = vmatprep.subr.mxu0 0.0
        %1079 = vmatpush1.msra.mxu0 0.0
        %1080 = vmatprep.subr.mxu0 0.0
        %1081 = vmatpush1.msra.mxu0 0.0
        %1082 = vmatprep.subr.mxu0 0.0
        %1083 = vmatpush1.msra.mxu0 0.0
        %1084 = vmatprep.subr.mxu0 0.0
        %1085 = vmatpush1.msra.mxu0 0.0
        %1086 = vmatprep.subr.mxu0 0.0
        %1087 = vmatpush1.msra.mxu0 0.0
        %1088 = vmatprep.subr.mxu0 %v912
        %1089 = vmatpush1.msra.mxu0 %v911
        %1090 = vmatprep.subr.mxu0 0.0
        %1091 = vmatpush2.msra.mxu0 0.0
        %1092 = vmatprep.subr.mxu0 0.0
        %1093 = vmatpush2.msra.mxu0 0.0
        %1094 = vmatprep.subr.mxu0 0.0
        %1095 = vmatpush2.msra.mxu0 0.0
        %1096 = vmatprep.subr.mxu0 0.0
        %1097 = vmatpush2.msra.mxu0 0.0
        %1098 = vmatprep.subr.mxu0 0.0
        %1099 = vmatpush2.msra.mxu0 0.0
        %1100 = vmatprep.subr.mxu0 0.0
        %1101 = vmatpush2.msra.mxu0 0.0
        %1102 = vmatprep.subr.mxu0 0.0
        %1103 = vmatpush2.msra.mxu0 0.0
        %1104 = vmatprep.subr.mxu0 0.0
        %1105 = vmatpush2.msra.mxu0 0.0
        %1106 = vmatprep.subr.mxu0 0.0
        %1107 = vmatpush2.msra.mxu0 0.0
        %1108 = vmatprep.subr.mxu0 0.0
        %1109 = vmatpush2.msra.mxu0 0.0
        %1110 = vmatprep.subr.mxu0 0.0
        %1111 = vmatpush2.msra.mxu0 0.0
        %1112 = vmatprep.subr.mxu0 0.0
        %1113 = vmatpush2.msra.mxu0 0.0
        %1114 = vmatprep.subr.mxu0 0.0
        %1115 = vmatpush2.msra.mxu0 0.0
        %1116 = vmatprep.subr.mxu0 0.0
        %1117 = vmatpush2.msra.mxu0 0.0
        %1118 = vmatprep.subr.mxu0 0.0
        %1119 = vmatpush2.msra.mxu0 0.0
        %1120 = vmatprep.subr.mxu0 0.0
        %1121 = vmatpush2.msra.mxu0 0.0
        %1122 = vmatprep.mubr.f32.mxu0 0.0
        %1123 = vmatmul.mubr.f32.gmra.mxu0 %v914
        %v1124 = vpop.f32.mrf.mxu0
        %v1125 = vadd.f32 0.0, %v1124
        %v1126 = vpop.f32.mrf.mxu0
        %v1127 = vadd.f32 0.0, %v1126
        %1128 = vdwg.mxu0
        %v1130 = vsel %vm654, %v652, 0
        %1132 = vmatprep.subr.mxu0 0.0
        %1133 = vmatpush1.msra.mxu0 0.0
        %1134 = vmatprep.subr.mxu0 0.0
        %1135 = vmatpush1.msra.mxu0 0.0
        %1136 = vmatprep.subr.mxu0 0.0
        %1137 = vmatpush1.msra.mxu0 0.0
        %1138 = vmatprep.subr.mxu0 0.0
        %1139 = vmatpush1.msra.mxu0 0.0
        %1140 = vmatprep.subr.mxu0 0.0
        %1141 = vmatpush1.msra.mxu0 0.0
        %1142 = vmatprep.subr.mxu0 0.0
        %1143 = vmatpush1.msra.mxu0 0.0
        %1144 = vmatprep.subr.mxu0 0.0
        %1145 = vmatpush1.msra.mxu0 0.0
        %1146 = vmatprep.subr.mxu0 0.0
        %1147 = vmatpush1.msra.mxu0 0.0
        %1148 = vmatprep.subr.mxu0 0.0
        %1149 = vmatpush1.msra.mxu0 0.0
        %1150 = vmatprep.subr.mxu0 0.0
        %1151 = vmatpush1.msra.mxu0 0.0
        %1152 = vmatprep.subr.mxu0 0.0
        %1153 = vmatpush1.msra.mxu0 0.0
        %1154 = vmatprep.subr.mxu0 0.0
        %1155 = vmatpush1.msra.mxu0 0.0
        %1156 = vmatprep.subr.mxu0 0.0
        %1157 = vmatpush1.msra.mxu0 0.0
        %1158 = vmatprep.subr.mxu0 0.0
        %1159 = vmatpush1.msra.mxu0 0.0
        %1160 = vmatprep.subr.mxu0 0.0
        %1161 = vmatpush1.msra.mxu0 0.0
        %1162 = vmatprep.subr.mxu0 %v985
        %1163 = vmatpush1.msra.mxu0 %v983
        %1164 = vmatprep.subr.mxu0 0.0
        %1165 = vmatpush2.msra.mxu0 0.0
        %1166 = vmatprep.subr.mxu0 0.0
        %1167 = vmatpush2.msra.mxu0 0.0
        %1168 = vmatprep.subr.mxu0 0.0
        %1169 = vmatpush2.msra.mxu0 0.0
        %1170 = vmatprep.subr.mxu0 0.0
        %1171 = vmatpush2.msra.mxu0 0.0
        %1172 = vmatprep.subr.mxu0 0.0
        %1173 = vmatpush2.msra.mxu0 0.0
        %1174 = vmatprep.subr.mxu0 0.0
        %1175 = vmatpush2.msra.mxu0 0.0
        %1176 = vmatprep.subr.mxu0 0.0
        %1177 = vmatpush2.msra.mxu0 0.0
        %1178 = vmatprep.subr.mxu0 0.0
        %1179 = vmatpush2.msra.mxu0 0.0
        %1180 = vmatprep.subr.mxu0 0.0
        %1181 = vmatpush2.msra.mxu0 0.0
        %1182 = vmatprep.subr.mxu0 0.0
        %1183 = vmatpush2.msra.mxu0 0.0
        %1184 = vmatprep.subr.mxu0 0.0
        %1185 = vmatpush2.msra.mxu0 0.0
        %1186 = vmatprep.subr.mxu0 0.0
        %1187 = vmatpush2.msra.mxu0 0.0
        %1188 = vmatprep.subr.mxu0 0.0
        %1189 = vmatpush2.msra.mxu0 0.0
        %1190 = vmatprep.subr.mxu0 0.0
        %1191 = vmatpush2.msra.mxu0 0.0
        %1192 = vmatprep.subr.mxu0 0.0
        %1193 = vmatpush2.msra.mxu0 0.0
        %1194 = vmatprep.subr.mxu0 0.0
        %1195 = vmatpush2.msra.mxu0 0.0
        %1196 = vmatprep.mubr.f32.mxu0 0.0
        %1197 = vmatmul.mubr.f32.gmra.mxu0 %v1130
        %v1198 = vpop.f32.mrf.mxu0
        %v1199 = vadd.f32 0.0, %v1198
        %v1200 = vpop.f32.mrf.mxu0
        %v1201 = vadd.f32 0.0, %v1200
        %1202 = vdwg.mxu0
        %1203 = vmatprep.subr.mxu0 0.0
        %1204 = vmatpush1.msra.mxu0 0.0
        %1205 = vmatprep.subr.mxu0 0.0
        %1206 = vmatpush1.msra.mxu0 0.0
        %1207 = vmatprep.subr.mxu0 0.0
        %1208 = vmatpush1.msra.mxu0 0.0
        %1209 = vmatprep.subr.mxu0 0.0
        %1210 = vmatpush1.msra.mxu0 0.0
        %1211 = vmatprep.subr.mxu0 0.0
        %1212 = vmatpush1.msra.mxu0 0.0
        %1213 = vmatprep.subr.mxu0 0.0
        %1214 = vmatpush1.msra.mxu0 0.0
        %1215 = vmatprep.subr.mxu0 0.0
        %1216 = vmatpush1.msra.mxu0 0.0
        %1217 = vmatprep.subr.mxu0 0.0
        %1218 = vmatpush1.msra.mxu0 0.0
        %1219 = vmatprep.subr.mxu0 0.0
        %1220 = vmatpush1.msra.mxu0 0.0
        %1221 = vmatprep.subr.mxu0 0.0
        %1222 = vmatpush1.msra.mxu0 0.0
        %1223 = vmatprep.subr.mxu0 0.0
        %1224 = vmatpush1.msra.mxu0 0.0
        %1225 = vmatprep.subr.mxu0 0.0
        %1226 = vmatpush1.msra.mxu0 0.0
        %1227 = vmatprep.subr.mxu0 0.0
        %1228 = vmatpush1.msra.mxu0 0.0
        %1229 = vmatprep.subr.mxu0 0.0
        %1230 = vmatpush1.msra.mxu0 0.0
        %1231 = vmatprep.subr.mxu0 0.0
        %1232 = vmatpush1.msra.mxu0 0.0
        %1233 = vmatprep.subr.mxu0 %v1056
        %1234 = vmatpush1.msra.mxu0 %v1054
        %1235 = vmatprep.subr.mxu0 0.0
        %1236 = vmatpush2.msra.mxu0 0.0
        %1237 = vmatprep.subr.mxu0 0.0
        %1238 = vmatpush2.msra.mxu0 0.0
        %1239 = vmatprep.subr.mxu0 0.0
        %1240 = vmatpush2.msra.mxu0 0.0
        %1241 = vmatprep.subr.mxu0 0.0
        %1242 = vmatpush2.msra.mxu0 0.0
        %1243 = vmatprep.subr.mxu0 0.0
        %1244 = vmatpush2.msra.mxu0 0.0
        %1245 = vmatprep.subr.mxu0 0.0
        %1246 = vmatpush2.msra.mxu0 0.0
        %1247 = vmatprep.subr.mxu0 0.0
        %1248 = vmatpush2.msra.mxu0 0.0
        %1249 = vmatprep.subr.mxu0 0.0
        %1250 = vmatpush2.msra.mxu0 0.0
        %1251 = vmatprep.subr.mxu0 0.0
        %1252 = vmatpush2.msra.mxu0 0.0
        %1253 = vmatprep.subr.mxu0 0.0
        %1254 = vmatpush2.msra.mxu0 0.0
        %1255 = vmatprep.subr.mxu0 0.0
        %1256 = vmatpush2.msra.mxu0 0.0
        %1257 = vmatprep.subr.mxu0 0.0
        %1258 = vmatpush2.msra.mxu0 0.0
        %1259 = vmatprep.subr.mxu0 0.0
        %1260 = vmatpush2.msra.mxu0 0.0
        %1261 = vmatprep.subr.mxu0 0.0
        %1262 = vmatpush2.msra.mxu0 0.0
        %1263 = vmatprep.subr.mxu0 0.0
        %1264 = vmatpush2.msra.mxu0 0.0
        %1265 = vmatprep.subr.mxu0 0.0
        %1266 = vmatpush2.msra.mxu0 0.0
        %1267 = vmatprep.mubr.f32.mxu0 0.0
        %1268 = vmatmul.mubr.f32.gmra.mxu0 %v1130
        %v1269 = vpop.f32.mrf.mxu0
        %v1270 = vadd.f32 0.0, %v1269
        %v1271 = vpop.f32.mrf.mxu0
        %v1272 = vadd.f32 0.0, %v1271
        %1273 = vdwg.mxu0
        %1274 = vmatprep.subr.mxu0 0.0
        %1275 = vmatpush1.msra.mxu0 0.0
        %1276 = vmatprep.subr.mxu0 0.0
        %1277 = vmatpush1.msra.mxu0 0.0
        %1278 = vmatprep.subr.mxu0 0.0
        %1279 = vmatpush1.msra.mxu0 0.0
        %1280 = vmatprep.subr.mxu0 0.0
        %1281 = vmatpush1.msra.mxu0 0.0
        %1282 = vmatprep.subr.mxu0 0.0
        %1283 = vmatpush1.msra.mxu0 0.0
        %1284 = vmatprep.subr.mxu0 0.0
        %1285 = vmatpush1.msra.mxu0 0.0
        %1286 = vmatprep.subr.mxu0 0.0
        %1287 = vmatpush1.msra.mxu0 0.0
        %1288 = vmatprep.subr.mxu0 0.0
        %1289 = vmatpush1.msra.mxu0 0.0
        %1290 = vmatprep.subr.mxu0 0.0
        %1291 = vmatpush1.msra.mxu0 0.0
        %1292 = vmatprep.subr.mxu0 0.0
        %1293 = vmatpush1.msra.mxu0 0.0
        %1294 = vmatprep.subr.mxu0 0.0
        %1295 = vmatpush1.msra.mxu0 0.0
        %1296 = vmatprep.subr.mxu0 0.0
        %1297 = vmatpush1.msra.mxu0 0.0
        %1298 = vmatprep.subr.mxu0 0.0
        %1299 = vmatpush1.msra.mxu0 0.0
        %1300 = vmatprep.subr.mxu0 0.0
        %1301 = vmatpush1.msra.mxu0 0.0
        %1302 = vmatprep.subr.mxu0 0.0
        %1303 = vmatpush1.msra.mxu0 0.0
        %1304 = vmatprep.subr.mxu0 %v1127
        %1305 = vmatpush1.msra.mxu0 %v1125
        %1306 = vmatprep.subr.mxu0 0.0
        %1307 = vmatpush2.msra.mxu0 0.0
        %1308 = vmatprep.subr.mxu0 0.0
        %1309 = vmatpush2.msra.mxu0 0.0
        %1310 = vmatprep.subr.mxu0 0.0
        %1311 = vmatpush2.msra.mxu0 0.0
        %1312 = vmatprep.subr.mxu0 0.0
        %1313 = vmatpush2.msra.mxu0 0.0
        %1314 = vmatprep.subr.mxu0 0.0
        %1315 = vmatpush2.msra.mxu0 0.0
        %1316 = vmatprep.subr.mxu0 0.0
        %1317 = vmatpush2.msra.mxu0 0.0
        %1318 = vmatprep.subr.mxu0 0.0
        %1319 = vmatpush2.msra.mxu0 0.0
        %1320 = vmatprep.subr.mxu0 0.0
        %1321 = vmatpush2.msra.mxu0 0.0
        %1322 = vmatprep.subr.mxu0 0.0
        %1323 = vmatpush2.msra.mxu0 0.0
        %1324 = vmatprep.subr.mxu0 0.0
        %1325 = vmatpush2.msra.mxu0 0.0
        %1326 = vmatprep.subr.mxu0 0.0
        %1327 = vmatpush2.msra.mxu0 0.0
        %1328 = vmatprep.subr.mxu0 0.0
        %1329 = vmatpush2.msra.mxu0 0.0
        %1330 = vmatprep.subr.mxu0 0.0
        %1331 = vmatpush2.msra.mxu0 0.0
        %1332 = vmatprep.subr.mxu0 0.0
        %1333 = vmatpush2.msra.mxu0 0.0
        %1334 = vmatprep.subr.mxu0 0.0
        %1335 = vmatpush2.msra.mxu0 0.0
        %1336 = vmatprep.subr.mxu0 0.0
        %1337 = vmatpush2.msra.mxu0 0.0
        %1338 = vmatprep.mubr.f32.mxu0 0.0
        %1339 = vmatmul.mubr.f32.gmra.mxu0 %v1130
        %v1340 = vpop.f32.mrf.mxu0
        %v1341 = vadd.f32 0.0, %v1340
        %v1342 = vpop.f32.mrf.mxu0
        %v1343 = vadd.f32 0.0, %v1342
        %1344 = vdwg.mxu0
        %v1345 = vmul.f32 %v983, %v1199
        %v1346 = vmul.f32 %v985, %v1201
        %v1347 = vmul.f32 %v1054, %v1270
        %v1348 = vmul.f32 %v1056, %v1272
        %v1349 = vadd.f32 %v1345, %v1347
        %v1350 = vadd.f32 %v1346, %v1348
        %v1351 = vmul.f32 %v1125, %v1341
        %v1352 = vmul.f32 %v1127, %v1343
        %v1353 = vadd.f32 %v1349, %v1351
        %v1354 = vadd.f32 %v1350, %v1352
        %v1355 = vmul.f32 %v1199, %v1199
        %v1356 = vmul.f32 %v1201, %v1201
        %v1357 = vmul.f32 %v1270, %v1270
        %v1358 = vmul.f32 %v1272, %v1272
        %v1359 = vadd.f32 %v1355, %v1357
        %v1360 = vadd.f32 %v1356, %v1358
        %v1361 = vmul.f32 %v1341, %v1341
        %v1362 = vmul.f32 %v1343, %v1343
        %v1363 = vadd.f32 %v1359, %v1361
        %v1364 = vadd.f32 %v1360, %v1362
        %v1365 = vadd.f32 %v1363, 1e-06
        %v1366 = vadd.f32 %v1364, 1e-06
        %vm1367 = vcmp.lt.f32.partialorder %v1353, 0.0
        %vm1368 = vcmp.lt.f32.partialorder %v1354, 0.0
        %v1369 = vrcp.pop %v1365
        %v1370 = vrcp.pop %v1366
        %v1371 = vmul.f32 %v1353, %v1369
        %v1372 = vmul.f32 %v1354, %v1370
        %v1373 = vsel %vm1367, %v1371, 0.0
        %v1374 = vsel %vm1368, %v1372, 0.0
        %v1375 = vmul.f32 %v1373, %v1199
        %v1376 = vmul.f32 %v1374, %v1201
        %v1377 = vmul.f32 %v1373, %v1270
        %v1378 = vmul.f32 %v1374, %v1272
        %v1379 = vmul.f32 %v1373, %v1341
        %v1380 = vmul.f32 %v1374, %v1343
        %v1381 = vsub.f32 %v983, %v1375
        %v1382 = vsub.f32 %v985, %v1376
        %v1383 = vsub.f32 %v1054, %v1377
        %v1384 = vsub.f32 %v1056, %v1378
        %v1385 = vsub.f32 %v1125, %v1379
        %v1386 = vsub.f32 %v1127, %v1380
        %v1388 = vsel %vm654, %v653, 0
        %1390 = vmatprep.subr.mxu0 0.0
        %1391 = vmatpush1.msra.mxu0 0.0
        %1392 = vmatprep.subr.mxu0 0.0
        %1393 = vmatpush1.msra.mxu0 0.0
        %1394 = vmatprep.subr.mxu0 0.0
        %1395 = vmatpush1.msra.mxu0 0.0
        %1396 = vmatprep.subr.mxu0 0.0
        %1397 = vmatpush1.msra.mxu0 0.0
        %1398 = vmatprep.subr.mxu0 0.0
        %1399 = vmatpush1.msra.mxu0 0.0
        %1400 = vmatprep.subr.mxu0 0.0
        %1401 = vmatpush1.msra.mxu0 0.0
        %1402 = vmatprep.subr.mxu0 0.0
        %1403 = vmatpush1.msra.mxu0 0.0
        %1404 = vmatprep.subr.mxu0 0.0
        %1405 = vmatpush1.msra.mxu0 0.0
        %1406 = vmatprep.subr.mxu0 0.0
        %1407 = vmatpush1.msra.mxu0 0.0
        %1408 = vmatprep.subr.mxu0 0.0
        %1409 = vmatpush1.msra.mxu0 0.0
        %1410 = vmatprep.subr.mxu0 0.0
        %1411 = vmatpush1.msra.mxu0 0.0
        %1412 = vmatprep.subr.mxu0 0.0
        %1413 = vmatpush1.msra.mxu0 0.0
        %1414 = vmatprep.subr.mxu0 0.0
        %1415 = vmatpush1.msra.mxu0 0.0
        %1416 = vmatprep.subr.mxu0 0.0
        %1417 = vmatpush1.msra.mxu0 0.0
        %1418 = vmatprep.subr.mxu0 0.0
        %1419 = vmatpush1.msra.mxu0 0.0
        %1420 = vmatprep.subr.mxu0 %v1382
        %1421 = vmatpush1.msra.mxu0 %v1381
        %1422 = vmatprep.subr.mxu0 0.0
        %1423 = vmatpush2.msra.mxu0 0.0
        %1424 = vmatprep.subr.mxu0 0.0
        %1425 = vmatpush2.msra.mxu0 0.0
        %1426 = vmatprep.subr.mxu0 0.0
        %1427 = vmatpush2.msra.mxu0 0.0
        %1428 = vmatprep.subr.mxu0 0.0
        %1429 = vmatpush2.msra.mxu0 0.0
        %1430 = vmatprep.subr.mxu0 0.0
        %1431 = vmatpush2.msra.mxu0 0.0
        %1432 = vmatprep.subr.mxu0 0.0
        %1433 = vmatpush2.msra.mxu0 0.0
        %1434 = vmatprep.subr.mxu0 0.0
        %1435 = vmatpush2.msra.mxu0 0.0
        %1436 = vmatprep.subr.mxu0 0.0
        %1437 = vmatpush2.msra.mxu0 0.0
        %1438 = vmatprep.subr.mxu0 0.0
        %1439 = vmatpush2.msra.mxu0 0.0
        %1440 = vmatprep.subr.mxu0 0.0
        %1441 = vmatpush2.msra.mxu0 0.0
        %1442 = vmatprep.subr.mxu0 0.0
        %1443 = vmatpush2.msra.mxu0 0.0
        %1444 = vmatprep.subr.mxu0 0.0
        %1445 = vmatpush2.msra.mxu0 0.0
        %1446 = vmatprep.subr.mxu0 0.0
        %1447 = vmatpush2.msra.mxu0 0.0
        %1448 = vmatprep.subr.mxu0 0.0
        %1449 = vmatpush2.msra.mxu0 0.0
        %1450 = vmatprep.subr.mxu0 0.0
        %1451 = vmatpush2.msra.mxu0 0.0
        %1452 = vmatprep.subr.mxu0 0.0
        %1453 = vmatpush2.msra.mxu0 0.0
        %1454 = vmatprep.mubr.f32.mxu0 0.0
        %1455 = vmatmul.mubr.f32.gmra.mxu0 %v1388
        %v1456 = vpop.f32.mrf.mxu0
        %v1457 = vadd.f32 0.0, %v1456
        %v1458 = vpop.f32.mrf.mxu0
        %v1459 = vadd.f32 0.0, %v1458
        %1460 = vdwg.mxu0
        %1461 = vmatprep.subr.mxu0 0.0
        %1462 = vmatpush1.msra.mxu0 0.0
        %1463 = vmatprep.subr.mxu0 0.0
        %1464 = vmatpush1.msra.mxu0 0.0
        %1465 = vmatprep.subr.mxu0 0.0
        %1466 = vmatpush1.msra.mxu0 0.0
        %1467 = vmatprep.subr.mxu0 0.0
        %1468 = vmatpush1.msra.mxu0 0.0
        %1469 = vmatprep.subr.mxu0 0.0
        %1470 = vmatpush1.msra.mxu0 0.0
        %1471 = vmatprep.subr.mxu0 0.0
        %1472 = vmatpush1.msra.mxu0 0.0
        %1473 = vmatprep.subr.mxu0 0.0
        %1474 = vmatpush1.msra.mxu0 0.0
        %1475 = vmatprep.subr.mxu0 0.0
        %1476 = vmatpush1.msra.mxu0 0.0
        %1477 = vmatprep.subr.mxu0 0.0
        %1478 = vmatpush1.msra.mxu0 0.0
        %1479 = vmatprep.subr.mxu0 0.0
        %1480 = vmatpush1.msra.mxu0 0.0
        %1481 = vmatprep.subr.mxu0 0.0
        %1482 = vmatpush1.msra.mxu0 0.0
        %1483 = vmatprep.subr.mxu0 0.0
        %1484 = vmatpush1.msra.mxu0 0.0
        %1485 = vmatprep.subr.mxu0 0.0
        %1486 = vmatpush1.msra.mxu0 0.0
        %1487 = vmatprep.subr.mxu0 0.0
        %1488 = vmatpush1.msra.mxu0 0.0
        %1489 = vmatprep.subr.mxu0 0.0
        %1490 = vmatpush1.msra.mxu0 0.0
        %1491 = vmatprep.subr.mxu0 %v1384
        %1492 = vmatpush1.msra.mxu0 %v1383
        %1493 = vmatprep.subr.mxu0 0.0
        %1494 = vmatpush2.msra.mxu0 0.0
        %1495 = vmatprep.subr.mxu0 0.0
        %1496 = vmatpush2.msra.mxu0 0.0
        %1497 = vmatprep.subr.mxu0 0.0
        %1498 = vmatpush2.msra.mxu0 0.0
        %1499 = vmatprep.subr.mxu0 0.0
        %1500 = vmatpush2.msra.mxu0 0.0
        %1501 = vmatprep.subr.mxu0 0.0
        %1502 = vmatpush2.msra.mxu0 0.0
        %1503 = vmatprep.subr.mxu0 0.0
        %1504 = vmatpush2.msra.mxu0 0.0
        %1505 = vmatprep.subr.mxu0 0.0
        %1506 = vmatpush2.msra.mxu0 0.0
        %1507 = vmatprep.subr.mxu0 0.0
        %1508 = vmatpush2.msra.mxu0 0.0
        %1509 = vmatprep.subr.mxu0 0.0
        %1510 = vmatpush2.msra.mxu0 0.0
        %1511 = vmatprep.subr.mxu0 0.0
        %1512 = vmatpush2.msra.mxu0 0.0
        %1513 = vmatprep.subr.mxu0 0.0
        %1514 = vmatpush2.msra.mxu0 0.0
        %1515 = vmatprep.subr.mxu0 0.0
        %1516 = vmatpush2.msra.mxu0 0.0
        %1517 = vmatprep.subr.mxu0 0.0
        %1518 = vmatpush2.msra.mxu0 0.0
        %1519 = vmatprep.subr.mxu0 0.0
        %1520 = vmatpush2.msra.mxu0 0.0
        %1521 = vmatprep.subr.mxu0 0.0
        %1522 = vmatpush2.msra.mxu0 0.0
        %1523 = vmatprep.subr.mxu0 0.0
        %1524 = vmatpush2.msra.mxu0 0.0
        %1525 = vmatprep.mubr.f32.mxu0 0.0
        %1526 = vmatmul.mubr.f32.gmra.mxu0 %v1388
        %v1527 = vpop.f32.mrf.mxu0
        %v1528 = vadd.f32 0.0, %v1527
        %v1529 = vpop.f32.mrf.mxu0
        %v1530 = vadd.f32 0.0, %v1529
        %1531 = vdwg.mxu0
        %1532 = vmatprep.subr.mxu0 0.0
        %1533 = vmatpush1.msra.mxu0 0.0
        %1534 = vmatprep.subr.mxu0 0.0
        %1535 = vmatpush1.msra.mxu0 0.0
        %1536 = vmatprep.subr.mxu0 0.0
        %1537 = vmatpush1.msra.mxu0 0.0
        %1538 = vmatprep.subr.mxu0 0.0
        %1539 = vmatpush1.msra.mxu0 0.0
        %1540 = vmatprep.subr.mxu0 0.0
        %1541 = vmatpush1.msra.mxu0 0.0
        %1542 = vmatprep.subr.mxu0 0.0
        %1543 = vmatpush1.msra.mxu0 0.0
        %1544 = vmatprep.subr.mxu0 0.0
        %1545 = vmatpush1.msra.mxu0 0.0
        %1546 = vmatprep.subr.mxu0 0.0
        %1547 = vmatpush1.msra.mxu0 0.0
        %1548 = vmatprep.subr.mxu0 0.0
        %1549 = vmatpush1.msra.mxu0 0.0
        %1550 = vmatprep.subr.mxu0 0.0
        %1551 = vmatpush1.msra.mxu0 0.0
        %1552 = vmatprep.subr.mxu0 0.0
        %1553 = vmatpush1.msra.mxu0 0.0
        %1554 = vmatprep.subr.mxu0 0.0
        %1555 = vmatpush1.msra.mxu0 0.0
        %1556 = vmatprep.subr.mxu0 0.0
        %1557 = vmatpush1.msra.mxu0 0.0
        %1558 = vmatprep.subr.mxu0 0.0
        %1559 = vmatpush1.msra.mxu0 0.0
        %1560 = vmatprep.subr.mxu0 0.0
        %1561 = vmatpush1.msra.mxu0 0.0
        %1562 = vmatprep.subr.mxu0 %v1386
        %1563 = vmatpush1.msra.mxu0 %v1385
        %1564 = vmatprep.subr.mxu0 0.0
        %1565 = vmatpush2.msra.mxu0 0.0
        %1566 = vmatprep.subr.mxu0 0.0
        %1567 = vmatpush2.msra.mxu0 0.0
        %1568 = vmatprep.subr.mxu0 0.0
        %1569 = vmatpush2.msra.mxu0 0.0
        %1570 = vmatprep.subr.mxu0 0.0
        %1571 = vmatpush2.msra.mxu0 0.0
        %1572 = vmatprep.subr.mxu0 0.0
        %1573 = vmatpush2.msra.mxu0 0.0
        %1574 = vmatprep.subr.mxu0 0.0
        %1575 = vmatpush2.msra.mxu0 0.0
        %1576 = vmatprep.subr.mxu0 0.0
        %1577 = vmatpush2.msra.mxu0 0.0
        %1578 = vmatprep.subr.mxu0 0.0
        %1579 = vmatpush2.msra.mxu0 0.0
        %1580 = vmatprep.subr.mxu0 0.0
        %1581 = vmatpush2.msra.mxu0 0.0
        %1582 = vmatprep.subr.mxu0 0.0
        %1583 = vmatpush2.msra.mxu0 0.0
        %1584 = vmatprep.subr.mxu0 0.0
        %1585 = vmatpush2.msra.mxu0 0.0
        %1586 = vmatprep.subr.mxu0 0.0
        %1587 = vmatpush2.msra.mxu0 0.0
        %1588 = vmatprep.subr.mxu0 0.0
        %1589 = vmatpush2.msra.mxu0 0.0
        %1590 = vmatprep.subr.mxu0 0.0
        %1591 = vmatpush2.msra.mxu0 0.0
        %1592 = vmatprep.subr.mxu0 0.0
        %1593 = vmatpush2.msra.mxu0 0.0
        %1594 = vmatprep.subr.mxu0 0.0
        %1595 = vmatpush2.msra.mxu0 0.0
        %1596 = vmatprep.mubr.f32.mxu0 0.0
        %1597 = vmatmul.mubr.f32.gmra.mxu0 %v1388
        %v1598 = vpop.f32.mrf.mxu0
        %v1599 = vadd.f32 0.0, %v1598
        %v1600 = vpop.f32.mrf.mxu0
        %v1601 = vadd.f32 0.0, %v1600
        %1602 = vdwg.mxu0
        %v1603 = vadd.f32 %v644, %v1457
        %v1604 = vadd.f32 %v645, %v1459
        %v1605 = vadd.f32 %v646, %v1528
        %v1606 = vadd.f32 %v647, %v1530
        %v1607 = vadd.f32 %v648, %v1599
        %v1608 = vadd.f32 %v649, %v1601
        %v1609 = vadd.f32 %v1603, %v1604
        %1610 = vadd.xlane.f32.xlu0 %v1609
        %v1611 = vpop.xlane.xlu0 %1610
        %v1612 = vrcp.pop 256.0
        %v1613 = vmul.f32 %v1611, %v1612
        %v1614 = vadd.f32 %v1605, %v1606
        %1615 = vadd.xlane.f32.xlu0 %v1614
        %v1616 = vpop.xlane.xlu0 %1615
        %v1617 = vmul.f32 %v1616, %v1612
        %v1618 = vadd.f32 %v1607, %v1608
        %1619 = vadd.xlane.f32.xlu0 %v1618
        %v1620 = vpop.xlane.xlu0 %1619
        %v1621 = vmul.f32 %v1620, %v1612
        %v1622 = vld [vmem:[#allocation10] sm:$0xff]
        %v1623 = vld [vmem:[#allocation10 + $0x8] sm:$0xff]
        %v1624 = vld [vmem:[#allocation12] sm:$0xff]
        %v1625 = vld [vmem:[#allocation13] sm:$0xff]
        %v1626 = vld [vmem:[#allocation15] sm:$0xff]
        %v1627 = vld [vmem:[#allocation16] sm:$0xff]
        %vm1628 = vcmask 130048
        %v1630 = vsel %vm1628, %v1622, 0
        %v1633 = vsel %vm1628, %v1623, 0
        %1635 = vmatprep.subr.mxu0 0.0
        %1636 = vmatpush1.msra.mxu0 0.0
        %1637 = vmatprep.subr.mxu0 0.0
        %1638 = vmatpush1.msra.mxu0 0.0
        %1639 = vmatprep.subr.mxu0 0.0
        %1640 = vmatpush1.msra.mxu0 0.0
        %1641 = vmatprep.subr.mxu0 0.0
        %1642 = vmatpush1.msra.mxu0 0.0
        %1643 = vmatprep.subr.mxu0 0.0
        %1644 = vmatpush1.msra.mxu0 0.0
        %1645 = vmatprep.subr.mxu0 0.0
        %1646 = vmatpush1.msra.mxu0 0.0
        %1647 = vmatprep.subr.mxu0 0.0
        %1648 = vmatpush1.msra.mxu0 0.0
        %1649 = vmatprep.subr.mxu0 0.0
        %1650 = vmatpush1.msra.mxu0 0.0
        %1651 = vmatprep.subr.mxu0 0.0
        %1652 = vmatpush1.msra.mxu0 0.0
        %1653 = vmatprep.subr.mxu0 0.0
        %1654 = vmatpush1.msra.mxu0 0.0
        %1655 = vmatprep.subr.mxu0 0.0
        %1656 = vmatpush1.msra.mxu0 0.0
        %1657 = vmatprep.subr.mxu0 0.0
        %1658 = vmatpush1.msra.mxu0 0.0
        %1659 = vmatprep.subr.mxu0 0.0
        %1660 = vmatpush1.msra.mxu0 0.0
        %1661 = vmatprep.subr.mxu0 0.0
        %1662 = vmatpush1.msra.mxu0 0.0
        %1663 = vmatprep.subr.mxu0 %v1613
        %1664 = vmatpush1.msra.mxu0 %v1613
        %1665 = vmatprep.subr.mxu0 %v1604
        %1666 = vmatpush1.msra.mxu0 %v1603
        %1667 = vmatprep.subr.mxu0 0.0
        %1668 = vmatpush2.msra.mxu0 0.0
        %1669 = vmatprep.subr.mxu0 0.0
        %1670 = vmatpush2.msra.mxu0 0.0
        %1671 = vmatprep.subr.mxu0 0.0
        %1672 = vmatpush2.msra.mxu0 0.0
        %1673 = vmatprep.subr.mxu0 0.0
        %1674 = vmatpush2.msra.mxu0 0.0
        %1675 = vmatprep.subr.mxu0 0.0
        %1676 = vmatpush2.msra.mxu0 0.0
        %1677 = vmatprep.subr.mxu0 0.0
        %1678 = vmatpush2.msra.mxu0 0.0
        %1679 = vmatprep.subr.mxu0 0.0
        %1680 = vmatpush2.msra.mxu0 0.0
        %1681 = vmatprep.subr.mxu0 0.0
        %1682 = vmatpush2.msra.mxu0 0.0
        %1683 = vmatprep.subr.mxu0 0.0
        %1684 = vmatpush2.msra.mxu0 0.0
        %1685 = vmatprep.subr.mxu0 0.0
        %1686 = vmatpush2.msra.mxu0 0.0
        %1687 = vmatprep.subr.mxu0 0.0
        %1688 = vmatpush2.msra.mxu0 0.0
        %1689 = vmatprep.subr.mxu0 0.0
        %1690 = vmatpush2.msra.mxu0 0.0
        %1691 = vmatprep.subr.mxu0 0.0
        %1692 = vmatpush2.msra.mxu0 0.0
        %1693 = vmatprep.subr.mxu0 0.0
        %1694 = vmatpush2.msra.mxu0 0.0
        %1695 = vmatprep.subr.mxu0 0.0
        %1696 = vmatpush2.msra.mxu0 0.0
        %1697 = vmatprep.subr.mxu0 0.0
        %1698 = vmatpush2.msra.mxu0 0.0
        %1699 = vmatprep.mubr.f32.mxu0 0.0
        %1700 = vmatmul.mubr.f32.gmra.mxu0 %v1630
        %v1701 = vpop.f32.mrf.mxu0
        %v1702 = vadd.f32 0.0, %v1701
        %v1703 = vpop.f32.mrf.mxu0
        %v1704 = vadd.f32 0.0, %v1703
        %1705 = vmatprep.mubr.f32.mxu0 0.0
        %1706 = vmatmul.mubr.f32.gmra.mxu0 %v1633
        %v1707 = vpop.f32.mrf.mxu0
        %v1708 = vadd.f32 0.0, %v1707
        %v1709 = vpop.f32.mrf.mxu0
        %v1710 = vadd.f32 0.0, %v1709
        %1711 = vdwg.mxu0
        %1712 = vmatprep.subr.mxu0 0.0
        %1713 = vmatpush1.msra.mxu0 0.0
        %1714 = vmatprep.subr.mxu0 0.0
        %1715 = vmatpush1.msra.mxu0 0.0
        %1716 = vmatprep.subr.mxu0 0.0
        %1717 = vmatpush1.msra.mxu0 0.0
        %1718 = vmatprep.subr.mxu0 0.0
        %1719 = vmatpush1.msra.mxu0 0.0
        %1720 = vmatprep.subr.mxu0 0.0
        %1721 = vmatpush1.msra.mxu0 0.0
        %1722 = vmatprep.subr.mxu0 0.0
        %1723 = vmatpush1.msra.mxu0 0.0
        %1724 = vmatprep.subr.mxu0 0.0
        %1725 = vmatpush1.msra.mxu0 0.0
        %1726 = vmatprep.subr.mxu0 0.0
        %1727 = vmatpush1.msra.mxu0 0.0
        %1728 = vmatprep.subr.mxu0 0.0
        %1729 = vmatpush1.msra.mxu0 0.0
        %1730 = vmatprep.subr.mxu0 0.0
        %1731 = vmatpush1.msra.mxu0 0.0
        %1732 = vmatprep.subr.mxu0 0.0
        %1733 = vmatpush1.msra.mxu0 0.0
        %1734 = vmatprep.subr.mxu0 0.0
        %1735 = vmatpush1.msra.mxu0 0.0
        %1736 = vmatprep.subr.mxu0 0.0
        %1737 = vmatpush1.msra.mxu0 0.0
        %1738 = vmatprep.subr.mxu0 0.0
        %1739 = vmatpush1.msra.mxu0 0.0
        %1740 = vmatprep.subr.mxu0 %v1617
        %1741 = vmatpush1.msra.mxu0 %v1617
        %1742 = vmatprep.subr.mxu0 %v1606
        %1743 = vmatpush1.msra.mxu0 %v1605
        %1744 = vmatprep.subr.mxu0 0.0
        %1745 = vmatpush2.msra.mxu0 0.0
        %1746 = vmatprep.subr.mxu0 0.0
        %1747 = vmatpush2.msra.mxu0 0.0
        %1748 = vmatprep.subr.mxu0 0.0
        %1749 = vmatpush2.msra.mxu0 0.0
        %1750 = vmatprep.subr.mxu0 0.0
        %1751 = vmatpush2.msra.mxu0 0.0
        %1752 = vmatprep.subr.mxu0 0.0
        %1753 = vmatpush2.msra.mxu0 0.0
        %1754 = vmatprep.subr.mxu0 0.0
        %1755 = vmatpush2.msra.mxu0 0.0
        %1756 = vmatprep.subr.mxu0 0.0
        %1757 = vmatpush2.msra.mxu0 0.0
        %1758 = vmatprep.subr.mxu0 0.0
        %1759 = vmatpush2.msra.mxu0 0.0
        %1760 = vmatprep.subr.mxu0 0.0
        %1761 = vmatpush2.msra.mxu0 0.0
        %1762 = vmatprep.subr.mxu0 0.0
        %1763 = vmatpush2.msra.mxu0 0.0
        %1764 = vmatprep.subr.mxu0 0.0
        %1765 = vmatpush2.msra.mxu0 0.0
        %1766 = vmatprep.subr.mxu0 0.0
        %1767 = vmatpush2.msra.mxu0 0.0
        %1768 = vmatprep.subr.mxu0 0.0
        %1769 = vmatpush2.msra.mxu0 0.0
        %1770 = vmatprep.subr.mxu0 0.0
        %1771 = vmatpush2.msra.mxu0 0.0
        %1772 = vmatprep.subr.mxu0 0.0
        %1773 = vmatpush2.msra.mxu0 0.0
        %1774 = vmatprep.subr.mxu0 0.0
        %1775 = vmatpush2.msra.mxu0 0.0
        %1776 = vmatprep.mubr.f32.mxu0 0.0
        %1777 = vmatmul.mubr.f32.gmra.mxu0 %v1630
        %v1778 = vpop.f32.mrf.mxu0
        %v1779 = vadd.f32 0.0, %v1778
        %v1780 = vpop.f32.mrf.mxu0
        %v1781 = vadd.f32 0.0, %v1780
        %1782 = vmatprep.mubr.f32.mxu0 0.0
        %1783 = vmatmul.mubr.f32.gmra.mxu0 %v1633
        %v1784 = vpop.f32.mrf.mxu0
        %v1785 = vadd.f32 0.0, %v1784
        %v1786 = vpop.f32.mrf.mxu0
        %v1787 = vadd.f32 0.0, %v1786
        %1788 = vdwg.mxu0
        %1789 = vmatprep.subr.mxu0 0.0
        %1790 = vmatpush1.msra.mxu0 0.0
        %1791 = vmatprep.subr.mxu0 0.0
        %1792 = vmatpush1.msra.mxu0 0.0
        %1793 = vmatprep.subr.mxu0 0.0
        %1794 = vmatpush1.msra.mxu0 0.0
        %1795 = vmatprep.subr.mxu0 0.0
        %1796 = vmatpush1.msra.mxu0 0.0
        %1797 = vmatprep.subr.mxu0 0.0
        %1798 = vmatpush1.msra.mxu0 0.0
        %1799 = vmatprep.subr.mxu0 0.0
        %1800 = vmatpush1.msra.mxu0 0.0
        %1801 = vmatprep.subr.mxu0 0.0
        %1802 = vmatpush1.msra.mxu0 0.0
        %1803 = vmatprep.subr.mxu0 0.0
        %1804 = vmatpush1.msra.mxu0 0.0
        %1805 = vmatprep.subr.mxu0 0.0
        %1806 = vmatpush1.msra.mxu0 0.0
        %1807 = vmatprep.subr.mxu0 0.0
        %1808 = vmatpush1.msra.mxu0 0.0
        %1809 = vmatprep.subr.mxu0 0.0
        %1810 = vmatpush1.msra.mxu0 0.0
        %1811 = vmatprep.subr.mxu0 0.0
        %1812 = vmatpush1.msra.mxu0 0.0
        %1813 = vmatprep.subr.mxu0 0.0
        %1814 = vmatpush1.msra.mxu0 0.0
        %1815 = vmatprep.subr.mxu0 0.0
        %1816 = vmatpush1.msra.mxu0 0.0
        %1817 = vmatprep.subr.mxu0 %v1621
        %1818 = vmatpush1.msra.mxu0 %v1621
        %1819 = vmatprep.subr.mxu0 %v1608
        %1820 = vmatpush1.msra.mxu0 %v1607
        %1821 = vmatprep.subr.mxu0 0.0
        %1822 = vmatpush2.msra.mxu0 0.0
        %1823 = vmatprep.subr.mxu0 0.0
        %1824 = vmatpush2.msra.mxu0 0.0
        %1825 = vmatprep.subr.mxu0 0.0
        %1826 = vmatpush2.msra.mxu0 0.0
        %1827 = vmatprep.subr.mxu0 0.0
        %1828 = vmatpush2.msra.mxu0 0.0
        %1829 = vmatprep.subr.mxu0 0.0
        %1830 = vmatpush2.msra.mxu0 0.0
        %1831 = vmatprep.subr.mxu0 0.0
        %1832 = vmatpush2.msra.mxu0 0.0
        %1833 = vmatprep.subr.mxu0 0.0
        %1834 = vmatpush2.msra.mxu0 0.0
        %1835 = vmatprep.subr.mxu0 0.0
        %1836 = vmatpush2.msra.mxu0 0.0
        %1837 = vmatprep.subr.mxu0 0.0
        %1838 = vmatpush2.msra.mxu0 0.0
        %1839 = vmatprep.subr.mxu0 0.0
        %1840 = vmatpush2.msra.mxu0 0.0
        %1841 = vmatprep.subr.mxu0 0.0
        %1842 = vmatpush2.msra.mxu0 0.0
        %1843 = vmatprep.subr.mxu0 0.0
        %1844 = vmatpush2.msra.mxu0 0.0
        %1845 = vmatprep.subr.mxu0 0.0
        %1846 = vmatpush2.msra.mxu0 0.0
        %1847 = vmatprep.subr.mxu0 0.0
        %1848 = vmatpush2.msra.mxu0 0.0
        %1849 = vmatprep.subr.mxu0 0.0
        %1850 = vmatpush2.msra.mxu0 0.0
        %1851 = vmatprep.subr.mxu0 0.0
        %1852 = vmatpush2.msra.mxu0 0.0
        %1853 = vmatprep.mubr.f32.mxu0 0.0
        %1854 = vmatmul.mubr.f32.gmra.mxu0 %v1630
        %v1855 = vpop.f32.mrf.mxu0
        %v1856 = vadd.f32 0.0, %v1855
        %v1857 = vpop.f32.mrf.mxu0
        %v1858 = vadd.f32 0.0, %v1857
        %1859 = vmatprep.mubr.f32.mxu0 0.0
        %1860 = vmatmul.mubr.f32.gmra.mxu0 %v1633
        %v1861 = vpop.f32.mrf.mxu0
        %v1862 = vadd.f32 0.0, %v1861
        %v1863 = vpop.f32.mrf.mxu0
        %v1864 = vadd.f32 0.0, %v1863
        %1865 = vdwg.mxu0
        %v1866 = vmul.f32 %v1603, %v1702
        %v1867 = vmul.f32 %v1604, %v1704
        %v1868 = vmul.f32 %v1613, %v1708
        %v1869 = vmul.f32 %v1613, %v1710
        %v1870 = vmul.f32 %v1605, %v1779
        %v1871 = vmul.f32 %v1606, %v1781
        %v1872 = vmul.f32 %v1617, %v1785
        %v1873 = vmul.f32 %v1617, %v1787
        %v1874 = vadd.f32 %v1866, %v1870
        %v1875 = vadd.f32 %v1867, %v1871
        %v1876 = vadd.f32 %v1868, %v1872
        %v1877 = vadd.f32 %v1869, %v1873
        %v1878 = vmul.f32 %v1607, %v1856
        %v1879 = vmul.f32 %v1608, %v1858
        %v1880 = vmul.f32 %v1621, %v1862
        %v1881 = vmul.f32 %v1621, %v1864
        %v1882 = vadd.f32 %v1874, %v1878
        %v1883 = vadd.f32 %v1875, %v1879
        %v1884 = vadd.f32 %v1876, %v1880
        %v1885 = vadd.f32 %v1877, %v1881
        %v1886 = vmul.f32 %v1702, %v1702
        %v1887 = vmul.f32 %v1704, %v1704
        %v1888 = vmul.f32 %v1708, %v1708
        %v1889 = vmul.f32 %v1710, %v1710
        %v1890 = vmul.f32 %v1779, %v1779
        %v1891 = vmul.f32 %v1781, %v1781
        %v1892 = vmul.f32 %v1785, %v1785
        %v1893 = vmul.f32 %v1787, %v1787
        %v1894 = vadd.f32 %v1886, %v1890
        %v1895 = vadd.f32 %v1887, %v1891
        %v1896 = vadd.f32 %v1888, %v1892
        %v1897 = vadd.f32 %v1889, %v1893
        %v1898 = vmul.f32 %v1856, %v1856
        %v1899 = vmul.f32 %v1858, %v1858
        %v1900 = vmul.f32 %v1862, %v1862
        %v1901 = vmul.f32 %v1864, %v1864
        %v1902 = vadd.f32 %v1894, %v1898
        %v1903 = vadd.f32 %v1895, %v1899
        %v1904 = vadd.f32 %v1896, %v1900
        %v1905 = vadd.f32 %v1897, %v1901
        %v1906 = vadd.f32 %v1902, 1e-06
        %v1907 = vadd.f32 %v1903, 1e-06
        %v1908 = vadd.f32 %v1904, 1e-06
        %v1909 = vadd.f32 %v1905, 1e-06
        %vm1910 = vcmp.lt.f32.partialorder %v1882, 0.0
        %vm1911 = vcmp.lt.f32.partialorder %v1883, 0.0
        %vm1912 = vcmp.lt.f32.partialorder %v1884, 0.0
        %vm1913 = vcmp.lt.f32.partialorder %v1885, 0.0
        %v1914 = vrcp.pop %v1906
        %v1915 = vrcp.pop %v1907
        %v1916 = vrcp.pop %v1908
        %v1917 = vrcp.pop %v1909
        %v1918 = vmul.f32 %v1882, %v1914
        %v1919 = vmul.f32 %v1883, %v1915
        %v1920 = vmul.f32 %v1884, %v1916
        %v1921 = vmul.f32 %v1885, %v1917
        %v1922 = vsel %vm1910, %v1918, 0.0
        %v1923 = vsel %vm1911, %v1919, 0.0
        %v1924 = vsel %vm1912, %v1920, 0.0
        %v1925 = vsel %vm1913, %v1921, 0.0
        %v1926 = vmul.f32 %v1922, %v1702
        %v1927 = vmul.f32 %v1923, %v1704
        %v1928 = vmul.f32 %v1922, %v1779
        %v1929 = vmul.f32 %v1923, %v1781
        %v1930 = vmul.f32 %v1922, %v1856
        %v1931 = vmul.f32 %v1923, %v1858
        %v1932 = vmul.f32 %v1924, %v1708
        %v1933 = vmul.f32 %v1925, %v1710
        %v1934 = vmul.f32 %v1924, %v1785
        %v1935 = vmul.f32 %v1925, %v1787
        %v1936 = vmul.f32 %v1924, %v1862
        %v1937 = vmul.f32 %v1925, %v1864
        %v1938 = vsub.f32 %v1603, %v1926
        %v1939 = vsub.f32 %v1604, %v1927
        %v1940 = vsub.f32 %v1605, %v1928
        %v1941 = vsub.f32 %v1606, %v1929
        %v1942 = vsub.f32 %v1607, %v1930
        %v1943 = vsub.f32 %v1608, %v1931
        %v1944 = vsub.f32 %v1613, %v1932
        %v1945 = vsub.f32 %v1613, %v1933
        %v1946 = vsub.f32 %v1617, %v1934
        %v1947 = vsub.f32 %v1617, %v1935
        %v1948 = vsub.f32 %v1621, %v1936
        %v1949 = vsub.f32 %v1621, %v1937
        %v1951 = vsel %vm1628, %v1624, 0
        %1953 = vmatprep.subr.mxu0 0.0
        %1954 = vmatpush1.msra.mxu0 0.0
        %1955 = vmatprep.subr.mxu0 0.0
        %1956 = vmatpush1.msra.mxu0 0.0
        %1957 = vmatprep.subr.mxu0 0.0
        %1958 = vmatpush1.msra.mxu0 0.0
        %1959 = vmatprep.subr.mxu0 0.0
        %1960 = vmatpush1.msra.mxu0 0.0
        %1961 = vmatprep.subr.mxu0 0.0
        %1962 = vmatpush1.msra.mxu0 0.0
        %1963 = vmatprep.subr.mxu0 0.0
        %1964 = vmatpush1.msra.mxu0 0.0
        %1965 = vmatprep.subr.mxu0 0.0
        %1966 = vmatpush1.msra.mxu0 0.0
        %1967 = vmatprep.subr.mxu0 0.0
        %1968 = vmatpush1.msra.mxu0 0.0
        %1969 = vmatprep.subr.mxu0 0.0
        %1970 = vmatpush1.msra.mxu0 0.0
        %1971 = vmatprep.subr.mxu0 0.0
        %1972 = vmatpush1.msra.mxu0 0.0
        %1973 = vmatprep.subr.mxu0 0.0
        %1974 = vmatpush1.msra.mxu0 0.0
        %1975 = vmatprep.subr.mxu0 0.0
        %1976 = vmatpush1.msra.mxu0 0.0
        %1977 = vmatprep.subr.mxu0 0.0
        %1978 = vmatpush1.msra.mxu0 0.0
        %1979 = vmatprep.subr.mxu0 0.0
        %1980 = vmatpush1.msra.mxu0 0.0
        %1981 = vmatprep.subr.mxu0 %v1945
        %1982 = vmatpush1.msra.mxu0 %v1944
        %1983 = vmatprep.subr.mxu0 %v1939
        %1984 = vmatpush1.msra.mxu0 %v1938
        %1985 = vmatprep.subr.mxu0 0.0
        %1986 = vmatpush2.msra.mxu0 0.0
        %1987 = vmatprep.subr.mxu0 0.0
        %1988 = vmatpush2.msra.mxu0 0.0
        %1989 = vmatprep.subr.mxu0 0.0
        %1990 = vmatpush2.msra.mxu0 0.0
        %1991 = vmatprep.subr.mxu0 0.0
        %1992 = vmatpush2.msra.mxu0 0.0
        %1993 = vmatprep.subr.mxu0 0.0
        %1994 = vmatpush2.msra.mxu0 0.0
        %1995 = vmatprep.subr.mxu0 0.0
        %1996 = vmatpush2.msra.mxu0 0.0
        %1997 = vmatprep.subr.mxu0 0.0
        %1998 = vmatpush2.msra.mxu0 0.0
        %1999 = vmatprep.subr.mxu0 0.0
        %2000 = vmatpush2.msra.mxu0 0.0
        %2001 = vmatprep.subr.mxu0 0.0
        %2002 = vmatpush2.msra.mxu0 0.0
        %2003 = vmatprep.subr.mxu0 0.0
        %2004 = vmatpush2.msra.mxu0 0.0
        %2005 = vmatprep.subr.mxu0 0.0
        %2006 = vmatpush2.msra.mxu0 0.0
        %2007 = vmatprep.subr.mxu0 0.0
        %2008 = vmatpush2.msra.mxu0 0.0
        %2009 = vmatprep.subr.mxu0 0.0
        %2010 = vmatpush2.msra.mxu0 0.0
        %2011 = vmatprep.subr.mxu0 0.0
        %2012 = vmatpush2.msra.mxu0 0.0
        %2013 = vmatprep.subr.mxu0 0.0
        %2014 = vmatpush2.msra.mxu0 0.0
        %2015 = vmatprep.subr.mxu0 0.0
        %2016 = vmatpush2.msra.mxu0 0.0
        %2017 = vmatprep.mubr.f32.mxu0 0.0
        %2018 = vmatmul.mubr.f32.gmra.mxu0 %v1951
        %v2019 = vpop.f32.mrf.mxu0
        %v2020 = vadd.f32 0.0, %v2019
        %v2021 = vpop.f32.mrf.mxu0
        %v2022 = vadd.f32 0.0, %v2021
        %2023 = vdwg.mxu0
        %2024 = vmatprep.subr.mxu0 0.0
        %2025 = vmatpush1.msra.mxu0 0.0
        %2026 = vmatprep.subr.mxu0 0.0
        %2027 = vmatpush1.msra.mxu0 0.0
        %2028 = vmatprep.subr.mxu0 0.0
        %2029 = vmatpush1.msra.mxu0 0.0
        %2030 = vmatprep.subr.mxu0 0.0
        %2031 = vmatpush1.msra.mxu0 0.0
        %2032 = vmatprep.subr.mxu0 0.0
        %2033 = vmatpush1.msra.mxu0 0.0
        %2034 = vmatprep.subr.mxu0 0.0
        %2035 = vmatpush1.msra.mxu0 0.0
        %2036 = vmatprep.subr.mxu0 0.0
        %2037 = vmatpush1.msra.mxu0 0.0
        %2038 = vmatprep.subr.mxu0 0.0
        %2039 = vmatpush1.msra.mxu0 0.0
        %2040 = vmatprep.subr.mxu0 0.0
        %2041 = vmatpush1.msra.mxu0 0.0
        %2042 = vmatprep.subr.mxu0 0.0
        %2043 = vmatpush1.msra.mxu0 0.0
        %2044 = vmatprep.subr.mxu0 0.0
        %2045 = vmatpush1.msra.mxu0 0.0
        %2046 = vmatprep.subr.mxu0 0.0
        %2047 = vmatpush1.msra.mxu0 0.0
        %2048 = vmatprep.subr.mxu0 0.0
        %2049 = vmatpush1.msra.mxu0 0.0
        %2050 = vmatprep.subr.mxu0 0.0
        %2051 = vmatpush1.msra.mxu0 0.0
        %2052 = vmatprep.subr.mxu0 %v1947
        %2053 = vmatpush1.msra.mxu0 %v1946
        %2054 = vmatprep.subr.mxu0 %v1941
        %2055 = vmatpush1.msra.mxu0 %v1940
        %2056 = vmatprep.subr.mxu0 0.0
        %2057 = vmatpush2.msra.mxu0 0.0
        %2058 = vmatprep.subr.mxu0 0.0
        %2059 = vmatpush2.msra.mxu0 0.0
        %2060 = vmatprep.subr.mxu0 0.0
        %2061 = vmatpush2.msra.mxu0 0.0
        %2062 = vmatprep.subr.mxu0 0.0
        %2063 = vmatpush2.msra.mxu0 0.0
        %2064 = vmatprep.subr.mxu0 0.0
        %2065 = vmatpush2.msra.mxu0 0.0
        %2066 = vmatprep.subr.mxu0 0.0
        %2067 = vmatpush2.msra.mxu0 0.0
        %2068 = vmatprep.subr.mxu0 0.0
        %2069 = vmatpush2.msra.mxu0 0.0
        %2070 = vmatprep.subr.mxu0 0.0
        %2071 = vmatpush2.msra.mxu0 0.0
        %2072 = vmatprep.subr.mxu0 0.0
        %2073 = vmatpush2.msra.mxu0 0.0
        %2074 = vmatprep.subr.mxu0 0.0
        %2075 = vmatpush2.msra.mxu0 0.0
        %2076 = vmatprep.subr.mxu0 0.0
        %2077 = vmatpush2.msra.mxu0 0.0
        %2078 = vmatprep.subr.mxu0 0.0
        %2079 = vmatpush2.msra.mxu0 0.0
        %2080 = vmatprep.subr.mxu0 0.0
        %2081 = vmatpush2.msra.mxu0 0.0
        %2082 = vmatprep.subr.mxu0 0.0
        %2083 = vmatpush2.msra.mxu0 0.0
        %2084 = vmatprep.subr.mxu0 0.0
        %2085 = vmatpush2.msra.mxu0 0.0
        %2086 = vmatprep.subr.mxu0 0.0
        %2087 = vmatpush2.msra.mxu0 0.0
        %2088 = vmatprep.mubr.f32.mxu0 0.0
        %2089 = vmatmul.mubr.f32.gmra.mxu0 %v1951
        %v2090 = vpop.f32.mrf.mxu0
        %v2091 = vadd.f32 0.0, %v2090
        %v2092 = vpop.f32.mrf.mxu0
        %v2093 = vadd.f32 0.0, %v2092
        %2094 = vdwg.mxu0
        %2095 = vmatprep.subr.mxu0 0.0
        %2096 = vmatpush1.msra.mxu0 0.0
        %2097 = vmatprep.subr.mxu0 0.0
        %2098 = vmatpush1.msra.mxu0 0.0
        %2099 = vmatprep.subr.mxu0 0.0
        %2100 = vmatpush1.msra.mxu0 0.0
        %2101 = vmatprep.subr.mxu0 0.0
        %2102 = vmatpush1.msra.mxu0 0.0
        %2103 = vmatprep.subr.mxu0 0.0
        %2104 = vmatpush1.msra.mxu0 0.0
        %2105 = vmatprep.subr.mxu0 0.0
        %2106 = vmatpush1.msra.mxu0 0.0
        %2107 = vmatprep.subr.mxu0 0.0
        %2108 = vmatpush1.msra.mxu0 0.0
        %2109 = vmatprep.subr.mxu0 0.0
        %2110 = vmatpush1.msra.mxu0 0.0
        %2111 = vmatprep.subr.mxu0 0.0
        %2112 = vmatpush1.msra.mxu0 0.0
        %2113 = vmatprep.subr.mxu0 0.0
        %2114 = vmatpush1.msra.mxu0 0.0
        %2115 = vmatprep.subr.mxu0 0.0
        %2116 = vmatpush1.msra.mxu0 0.0
        %2117 = vmatprep.subr.mxu0 0.0
        %2118 = vmatpush1.msra.mxu0 0.0
        %2119 = vmatprep.subr.mxu0 0.0
        %2120 = vmatpush1.msra.mxu0 0.0
        %2121 = vmatprep.subr.mxu0 0.0
        %2122 = vmatpush1.msra.mxu0 0.0
        %2123 = vmatprep.subr.mxu0 %v1949
        %2124 = vmatpush1.msra.mxu0 %v1948
        %2125 = vmatprep.subr.mxu0 %v1943
        %2126 = vmatpush1.msra.mxu0 %v1942
        %2127 = vmatprep.subr.mxu0 0.0
        %2128 = vmatpush2.msra.mxu0 0.0
        %2129 = vmatprep.subr.mxu0 0.0
        %2130 = vmatpush2.msra.mxu0 0.0
        %2131 = vmatprep.subr.mxu0 0.0
        %2132 = vmatpush2.msra.mxu0 0.0
        %2133 = vmatprep.subr.mxu0 0.0
        %2134 = vmatpush2.msra.mxu0 0.0
        %2135 = vmatprep.subr.mxu0 0.0
        %2136 = vmatpush2.msra.mxu0 0.0
        %2137 = vmatprep.subr.mxu0 0.0
        %2138 = vmatpush2.msra.mxu0 0.0
        %2139 = vmatprep.subr.mxu0 0.0
        %2140 = vmatpush2.msra.mxu0 0.0
        %2141 = vmatprep.subr.mxu0 0.0
        %2142 = vmatpush2.msra.mxu0 0.0
        %2143 = vmatprep.subr.mxu0 0.0
        %2144 = vmatpush2.msra.mxu0 0.0
        %2145 = vmatprep.subr.mxu0 0.0
        %2146 = vmatpush2.msra.mxu0 0.0
        %2147 = vmatprep.subr.mxu0 0.0
        %2148 = vmatpush2.msra.mxu0 0.0
        %2149 = vmatprep.subr.mxu0 0.0
        %2150 = vmatpush2.msra.mxu0 0.0
        %2151 = vmatprep.subr.mxu0 0.0
        %2152 = vmatpush2.msra.mxu0 0.0
        %2153 = vmatprep.subr.mxu0 0.0
        %2154 = vmatpush2.msra.mxu0 0.0
        %2155 = vmatprep.subr.mxu0 0.0
        %2156 = vmatpush2.msra.mxu0 0.0
        %2157 = vmatprep.subr.mxu0 0.0
        %2158 = vmatpush2.msra.mxu0 0.0
        %2159 = vmatprep.mubr.f32.mxu0 0.0
        %2160 = vmatmul.mubr.f32.gmra.mxu0 %v1951
        %v2161 = vpop.f32.mrf.mxu0
        %v2162 = vadd.f32 0.0, %v2161
        %v2163 = vpop.f32.mrf.mxu0
        %v2164 = vadd.f32 0.0, %v2163
        %2165 = vdwg.mxu0
        %v2167 = vsel %vm654, %v1625, 0
        %2169 = vmatprep.subr.mxu0 0.0
        %2170 = vmatpush1.msra.mxu0 0.0
        %2171 = vmatprep.subr.mxu0 0.0
        %2172 = vmatpush1.msra.mxu0 0.0
        %2173 = vmatprep.subr.mxu0 0.0
        %2174 = vmatpush1.msra.mxu0 0.0
        %2175 = vmatprep.subr.mxu0 0.0
        %2176 = vmatpush1.msra.mxu0 0.0
        %2177 = vmatprep.subr.mxu0 0.0
        %2178 = vmatpush1.msra.mxu0 0.0
        %2179 = vmatprep.subr.mxu0 0.0
        %2180 = vmatpush1.msra.mxu0 0.0
        %2181 = vmatprep.subr.mxu0 0.0
        %2182 = vmatpush1.msra.mxu0 0.0
        %2183 = vmatprep.subr.mxu0 0.0
        %2184 = vmatpush1.msra.mxu0 0.0
        %2185 = vmatprep.subr.mxu0 0.0
        %2186 = vmatpush1.msra.mxu0 0.0
        %2187 = vmatprep.subr.mxu0 0.0
        %2188 = vmatpush1.msra.mxu0 0.0
        %2189 = vmatprep.subr.mxu0 0.0
        %2190 = vmatpush1.msra.mxu0 0.0
        %2191 = vmatprep.subr.mxu0 0.0
        %2192 = vmatpush1.msra.mxu0 0.0
        %2193 = vmatprep.subr.mxu0 0.0
        %2194 = vmatpush1.msra.mxu0 0.0
        %2195 = vmatprep.subr.mxu0 0.0
        %2196 = vmatpush1.msra.mxu0 0.0
        %2197 = vmatprep.subr.mxu0 0.0
        %2198 = vmatpush1.msra.mxu0 0.0
        %2199 = vmatprep.subr.mxu0 %v2022
        %2200 = vmatpush1.msra.mxu0 %v2020
        %2201 = vmatprep.subr.mxu0 0.0
        %2202 = vmatpush2.msra.mxu0 0.0
        %2203 = vmatprep.subr.mxu0 0.0
        %2204 = vmatpush2.msra.mxu0 0.0
        %2205 = vmatprep.subr.mxu0 0.0
        %2206 = vmatpush2.msra.mxu0 0.0
        %2207 = vmatprep.subr.mxu0 0.0
        %2208 = vmatpush2.msra.mxu0 0.0
        %2209 = vmatprep.subr.mxu0 0.0
        %2210 = vmatpush2.msra.mxu0 0.0
        %2211 = vmatprep.subr.mxu0 0.0
        %2212 = vmatpush2.msra.mxu0 0.0
        %2213 = vmatprep.subr.mxu0 0.0
        %2214 = vmatpush2.msra.mxu0 0.0
        %2215 = vmatprep.subr.mxu0 0.0
        %2216 = vmatpush2.msra.mxu0 0.0
        %2217 = vmatprep.subr.mxu0 0.0
        %2218 = vmatpush2.msra.mxu0 0.0
        %2219 = vmatprep.subr.mxu0 0.0
        %2220 = vmatpush2.msra.mxu0 0.0
        %2221 = vmatprep.subr.mxu0 0.0
        %2222 = vmatpush2.msra.mxu0 0.0
        %2223 = vmatprep.subr.mxu0 0.0
        %2224 = vmatpush2.msra.mxu0 0.0
        %2225 = vmatprep.subr.mxu0 0.0
        %2226 = vmatpush2.msra.mxu0 0.0
        %2227 = vmatprep.subr.mxu0 0.0
        %2228 = vmatpush2.msra.mxu0 0.0
        %2229 = vmatprep.subr.mxu0 0.0
        %2230 = vmatpush2.msra.mxu0 0.0
        %2231 = vmatprep.subr.mxu0 0.0
        %2232 = vmatpush2.msra.mxu0 0.0
        %2233 = vmatprep.mubr.f32.mxu0 0.0
        %2234 = vmatmul.mubr.f32.gmra.mxu0 %v2167
        %v2235 = vpop.f32.mrf.mxu0
        %v2236 = vadd.f32 0.0, %v2235
        %v2237 = vpop.f32.mrf.mxu0
        %v2238 = vadd.f32 0.0, %v2237
        %2239 = vdwg.mxu0
        %2240 = vmatprep.subr.mxu0 0.0
        %2241 = vmatpush1.msra.mxu0 0.0
        %2242 = vmatprep.subr.mxu0 0.0
        %2243 = vmatpush1.msra.mxu0 0.0
        %2244 = vmatprep.subr.mxu0 0.0
        %2245 = vmatpush1.msra.mxu0 0.0
        %2246 = vmatprep.subr.mxu0 0.0
        %2247 = vmatpush1.msra.mxu0 0.0
        %2248 = vmatprep.subr.mxu0 0.0
        %2249 = vmatpush1.msra.mxu0 0.0
        %2250 = vmatprep.subr.mxu0 0.0
        %2251 = vmatpush1.msra.mxu0 0.0
        %2252 = vmatprep.subr.mxu0 0.0
        %2253 = vmatpush1.msra.mxu0 0.0
        %2254 = vmatprep.subr.mxu0 0.0
        %2255 = vmatpush1.msra.mxu0 0.0
        %2256 = vmatprep.subr.mxu0 0.0
        %2257 = vmatpush1.msra.mxu0 0.0
        %2258 = vmatprep.subr.mxu0 0.0
        %2259 = vmatpush1.msra.mxu0 0.0
        %2260 = vmatprep.subr.mxu0 0.0
        %2261 = vmatpush1.msra.mxu0 0.0
        %2262 = vmatprep.subr.mxu0 0.0
        %2263 = vmatpush1.msra.mxu0 0.0
        %2264 = vmatprep.subr.mxu0 0.0
        %2265 = vmatpush1.msra.mxu0 0.0
        %2266 = vmatprep.subr.mxu0 0.0
        %2267 = vmatpush1.msra.mxu0 0.0
        %2268 = vmatprep.subr.mxu0 0.0
        %2269 = vmatpush1.msra.mxu0 0.0
        %2270 = vmatprep.subr.mxu0 %v2093
        %2271 = vmatpush1.msra.mxu0 %v2091
        %2272 = vmatprep.subr.mxu0 0.0
        %2273 = vmatpush2.msra.mxu0 0.0
        %2274 = vmatprep.subr.mxu0 0.0
        %2275 = vmatpush2.msra.mxu0 0.0
        %2276 = vmatprep.subr.mxu0 0.0
        %2277 = vmatpush2.msra.mxu0 0.0
        %2278 = vmatprep.subr.mxu0 0.0
        %2279 = vmatpush2.msra.mxu0 0.0
        %2280 = vmatprep.subr.mxu0 0.0
        %2281 = vmatpush2.msra.mxu0 0.0
        %2282 = vmatprep.subr.mxu0 0.0
        %2283 = vmatpush2.msra.mxu0 0.0
        %2284 = vmatprep.subr.mxu0 0.0
        %2285 = vmatpush2.msra.mxu0 0.0
        %2286 = vmatprep.subr.mxu0 0.0
        %2287 = vmatpush2.msra.mxu0 0.0
        %2288 = vmatprep.subr.mxu0 0.0
        %2289 = vmatpush2.msra.mxu0 0.0
        %2290 = vmatprep.subr.mxu0 0.0
        %2291 = vmatpush2.msra.mxu0 0.0
        %2292 = vmatprep.subr.mxu0 0.0
        %2293 = vmatpush2.msra.mxu0 0.0
        %2294 = vmatprep.subr.mxu0 0.0
        %2295 = vmatpush2.msra.mxu0 0.0
        %2296 = vmatprep.subr.mxu0 0.0
        %2297 = vmatpush2.msra.mxu0 0.0
        %2298 = vmatprep.subr.mxu0 0.0
        %2299 = vmatpush2.msra.mxu0 0.0
        %2300 = vmatprep.subr.mxu0 0.0
        %2301 = vmatpush2.msra.mxu0 0.0
        %2302 = vmatprep.subr.mxu0 0.0
        %2303 = vmatpush2.msra.mxu0 0.0
        %2304 = vmatprep.mubr.f32.mxu0 0.0
        %2305 = vmatmul.mubr.f32.gmra.mxu0 %v2167
        %v2306 = vpop.f32.mrf.mxu0
        %v2307 = vadd.f32 0.0, %v2306
        %v2308 = vpop.f32.mrf.mxu0
        %v2309 = vadd.f32 0.0, %v2308
        %2310 = vdwg.mxu0
        %2311 = vmatprep.subr.mxu0 0.0
        %2312 = vmatpush1.msra.mxu0 0.0
        %2313 = vmatprep.subr.mxu0 0.0
        %2314 = vmatpush1.msra.mxu0 0.0
        %2315 = vmatprep.subr.mxu0 0.0
        %2316 = vmatpush1.msra.mxu0 0.0
        %2317 = vmatprep.subr.mxu0 0.0
        %2318 = vmatpush1.msra.mxu0 0.0
        %2319 = vmatprep.subr.mxu0 0.0
        %2320 = vmatpush1.msra.mxu0 0.0
        %2321 = vmatprep.subr.mxu0 0.0
        %2322 = vmatpush1.msra.mxu0 0.0
        %2323 = vmatprep.subr.mxu0 0.0
        %2324 = vmatpush1.msra.mxu0 0.0
        %2325 = vmatprep.subr.mxu0 0.0
        %2326 = vmatpush1.msra.mxu0 0.0
        %2327 = vmatprep.subr.mxu0 0.0
        %2328 = vmatpush1.msra.mxu0 0.0
        %2329 = vmatprep.subr.mxu0 0.0
        %2330 = vmatpush1.msra.mxu0 0.0
        %2331 = vmatprep.subr.mxu0 0.0
        %2332 = vmatpush1.msra.mxu0 0.0
        %2333 = vmatprep.subr.mxu0 0.0
        %2334 = vmatpush1.msra.mxu0 0.0
        %2335 = vmatprep.subr.mxu0 0.0
        %2336 = vmatpush1.msra.mxu0 0.0
        %2337 = vmatprep.subr.mxu0 0.0
        %2338 = vmatpush1.msra.mxu0 0.0
        %2339 = vmatprep.subr.mxu0 0.0
        %2340 = vmatpush1.msra.mxu0 0.0
        %2341 = vmatprep.subr.mxu0 %v2164
        %2342 = vmatpush1.msra.mxu0 %v2162
        %2343 = vmatprep.subr.mxu0 0.0
        %2344 = vmatpush2.msra.mxu0 0.0
        %2345 = vmatprep.subr.mxu0 0.0
        %2346 = vmatpush2.msra.mxu0 0.0
        %2347 = vmatprep.subr.mxu0 0.0
        %2348 = vmatpush2.msra.mxu0 0.0
        %2349 = vmatprep.subr.mxu0 0.0
        %2350 = vmatpush2.msra.mxu0 0.0
        %2351 = vmatprep.subr.mxu0 0.0
        %2352 = vmatpush2.msra.mxu0 0.0
        %2353 = vmatprep.subr.mxu0 0.0
        %2354 = vmatpush2.msra.mxu0 0.0
        %2355 = vmatprep.subr.mxu0 0.0
        %2356 = vmatpush2.msra.mxu0 0.0
        %2357 = vmatprep.subr.mxu0 0.0
        %2358 = vmatpush2.msra.mxu0 0.0
        %2359 = vmatprep.subr.mxu0 0.0
        %2360 = vmatpush2.msra.mxu0 0.0
        %2361 = vmatprep.subr.mxu0 0.0
        %2362 = vmatpush2.msra.mxu0 0.0
        %2363 = vmatprep.subr.mxu0 0.0
        %2364 = vmatpush2.msra.mxu0 0.0
        %2365 = vmatprep.subr.mxu0 0.0
        %2366 = vmatpush2.msra.mxu0 0.0
        %2367 = vmatprep.subr.mxu0 0.0
        %2368 = vmatpush2.msra.mxu0 0.0
        %2369 = vmatprep.subr.mxu0 0.0
        %2370 = vmatpush2.msra.mxu0 0.0
        %2371 = vmatprep.subr.mxu0 0.0
        %2372 = vmatpush2.msra.mxu0 0.0
        %2373 = vmatprep.subr.mxu0 0.0
        %2374 = vmatpush2.msra.mxu0 0.0
        %2375 = vmatprep.mubr.f32.mxu0 0.0
        %2376 = vmatmul.mubr.f32.gmra.mxu0 %v2167
        %v2377 = vpop.f32.mrf.mxu0
        %v2378 = vadd.f32 0.0, %v2377
        %v2379 = vpop.f32.mrf.mxu0
        %v2380 = vadd.f32 0.0, %v2379
        %2381 = vdwg.mxu0
        %v2382 = vmul.f32 %v2020, %v2236
        %v2383 = vmul.f32 %v2022, %v2238
        %v2384 = vmul.f32 %v2091, %v2307
        %v2385 = vmul.f32 %v2093, %v2309
        %v2386 = vadd.f32 %v2382, %v2384
        %v2387 = vadd.f32 %v2383, %v2385
        %v2388 = vmul.f32 %v2162, %v2378
        %v2389 = vmul.f32 %v2164, %v2380
        %v2390 = vadd.f32 %v2386, %v2388
        %v2391 = vadd.f32 %v2387, %v2389
        %v2392 = vmul.f32 %v2236, %v2236
        %v2393 = vmul.f32 %v2238, %v2238
        %v2394 = vmul.f32 %v2307, %v2307
        %v2395 = vmul.f32 %v2309, %v2309
        %v2396 = vadd.f32 %v2392, %v2394
        %v2397 = vadd.f32 %v2393, %v2395
        %v2398 = vmul.f32 %v2378, %v2378
        %v2399 = vmul.f32 %v2380, %v2380
        %v2400 = vadd.f32 %v2396, %v2398
        %v2401 = vadd.f32 %v2397, %v2399
        %v2402 = vadd.f32 %v2400, 1e-06
        %v2403 = vadd.f32 %v2401, 1e-06
        %vm2404 = vcmp.lt.f32.partialorder %v2390, 0.0
        %vm2405 = vcmp.lt.f32.partialorder %v2391, 0.0
        %v2406 = vrcp.pop %v2402
        %v2407 = vrcp.pop %v2403
        %v2408 = vmul.f32 %v2390, %v2406
        %v2409 = vmul.f32 %v2391, %v2407
        %v2410 = vsel %vm2404, %v2408, 0.0
        %v2411 = vsel %vm2405, %v2409, 0.0
        %v2412 = vmul.f32 %v2410, %v2236
        %v2413 = vmul.f32 %v2411, %v2238
        %v2414 = vmul.f32 %v2410, %v2307
        %v2415 = vmul.f32 %v2411, %v2309
        %v2416 = vmul.f32 %v2410, %v2378
        %v2417 = vmul.f32 %v2411, %v2380
        %v2418 = vsub.f32 %v2020, %v2412
        %v2419 = vsub.f32 %v2022, %v2413
        %v2420 = vsub.f32 %v2091, %v2414
        %v2421 = vsub.f32 %v2093, %v2415
        %v2422 = vsub.f32 %v2162, %v2416
        %v2423 = vsub.f32 %v2164, %v2417
        %v2425 = vsel %vm654, %v1626, 0
        %2427 = vmatprep.subr.mxu0 0.0
        %2428 = vmatpush1.msra.mxu0 0.0
        %2429 = vmatprep.subr.mxu0 0.0
        %2430 = vmatpush1.msra.mxu0 0.0
        %2431 = vmatprep.subr.mxu0 0.0
        %2432 = vmatpush1.msra.mxu0 0.0
        %2433 = vmatprep.subr.mxu0 0.0
        %2434 = vmatpush1.msra.mxu0 0.0
        %2435 = vmatprep.subr.mxu0 0.0
        %2436 = vmatpush1.msra.mxu0 0.0
        %2437 = vmatprep.subr.mxu0 0.0
        %2438 = vmatpush1.msra.mxu0 0.0
        %2439 = vmatprep.subr.mxu0 0.0
        %2440 = vmatpush1.msra.mxu0 0.0
        %2441 = vmatprep.subr.mxu0 0.0
        %2442 = vmatpush1.msra.mxu0 0.0
        %2443 = vmatprep.subr.mxu0 0.0
        %2444 = vmatpush1.msra.mxu0 0.0
        %2445 = vmatprep.subr.mxu0 0.0
        %2446 = vmatpush1.msra.mxu0 0.0
        %2447 = vmatprep.subr.mxu0 0.0
        %2448 = vmatpush1.msra.mxu0 0.0
        %2449 = vmatprep.subr.mxu0 0.0
        %2450 = vmatpush1.msra.mxu0 0.0
        %2451 = vmatprep.subr.mxu0 0.0
        %2452 = vmatpush1.msra.mxu0 0.0
        %2453 = vmatprep.subr.mxu0 0.0
        %2454 = vmatpush1.msra.mxu0 0.0
        %2455 = vmatprep.subr.mxu0 0.0
        %2456 = vmatpush1.msra.mxu0 0.0
        %2457 = vmatprep.subr.mxu0 %v2419
        %2458 = vmatpush1.msra.mxu0 %v2418
        %2459 = vmatprep.subr.mxu0 0.0
        %2460 = vmatpush2.msra.mxu0 0.0
        %2461 = vmatprep.subr.mxu0 0.0
        %2462 = vmatpush2.msra.mxu0 0.0
        %2463 = vmatprep.subr.mxu0 0.0
        %2464 = vmatpush2.msra.mxu0 0.0
        %2465 = vmatprep.subr.mxu0 0.0
        %2466 = vmatpush2.msra.mxu0 0.0
        %2467 = vmatprep.subr.mxu0 0.0
        %2468 = vmatpush2.msra.mxu0 0.0
        %2469 = vmatprep.subr.mxu0 0.0
        %2470 = vmatpush2.msra.mxu0 0.0
        %2471 = vmatprep.subr.mxu0 0.0
        %2472 = vmatpush2.msra.mxu0 0.0
        %2473 = vmatprep.subr.mxu0 0.0
        %2474 = vmatpush2.msra.mxu0 0.0
        %2475 = vmatprep.subr.mxu0 0.0
        %2476 = vmatpush2.msra.mxu0 0.0
        %2477 = vmatprep.subr.mxu0 0.0
        %2478 = vmatpush2.msra.mxu0 0.0
        %2479 = vmatprep.subr.mxu0 0.0
        %2480 = vmatpush2.msra.mxu0 0.0
        %2481 = vmatprep.subr.mxu0 0.0
        %2482 = vmatpush2.msra.mxu0 0.0
        %2483 = vmatprep.subr.mxu0 0.0
        %2484 = vmatpush2.msra.mxu0 0.0
        %2485 = vmatprep.subr.mxu0 0.0
        %2486 = vmatpush2.msra.mxu0 0.0
        %2487 = vmatprep.subr.mxu0 0.0
        %2488 = vmatpush2.msra.mxu0 0.0
        %2489 = vmatprep.subr.mxu0 0.0
        %2490 = vmatpush2.msra.mxu0 0.0
        %2491 = vmatprep.mubr.f32.mxu0 0.0
        %2492 = vmatmul.mubr.f32.gmra.mxu0 %v2425
        %v2493 = vpop.f32.mrf.mxu0
        %v2494 = vadd.f32 0.0, %v2493
        %v2495 = vpop.f32.mrf.mxu0
        %v2496 = vadd.f32 0.0, %v2495
        %2497 = vdwg.mxu0
        %2498 = vmatprep.subr.mxu0 0.0
        %2499 = vmatpush1.msra.mxu0 0.0
        %2500 = vmatprep.subr.mxu0 0.0
        %2501 = vmatpush1.msra.mxu0 0.0
        %2502 = vmatprep.subr.mxu0 0.0
        %2503 = vmatpush1.msra.mxu0 0.0
        %2504 = vmatprep.subr.mxu0 0.0
        %2505 = vmatpush1.msra.mxu0 0.0
        %2506 = vmatprep.subr.mxu0 0.0
        %2507 = vmatpush1.msra.mxu0 0.0
        %2508 = vmatprep.subr.mxu0 0.0
        %2509 = vmatpush1.msra.mxu0 0.0
        %2510 = vmatprep.subr.mxu0 0.0
        %2511 = vmatpush1.msra.mxu0 0.0
        %2512 = vmatprep.subr.mxu0 0.0
        %2513 = vmatpush1.msra.mxu0 0.0
        %2514 = vmatprep.subr.mxu0 0.0
        %2515 = vmatpush1.msra.mxu0 0.0
        %2516 = vmatprep.subr.mxu0 0.0
        %2517 = vmatpush1.msra.mxu0 0.0
        %2518 = vmatprep.subr.mxu0 0.0
        %2519 = vmatpush1.msra.mxu0 0.0
        %2520 = vmatprep.subr.mxu0 0.0
        %2521 = vmatpush1.msra.mxu0 0.0
        %2522 = vmatprep.subr.mxu0 0.0
        %2523 = vmatpush1.msra.mxu0 0.0
        %2524 = vmatprep.subr.mxu0 0.0
        %2525 = vmatpush1.msra.mxu0 0.0
        %2526 = vmatprep.subr.mxu0 0.0
        %2527 = vmatpush1.msra.mxu0 0.0
        %2528 = vmatprep.subr.mxu0 %v2421
        %2529 = vmatpush1.msra.mxu0 %v2420
        %2530 = vmatprep.subr.mxu0 0.0
        %2531 = vmatpush2.msra.mxu0 0.0
        %2532 = vmatprep.subr.mxu0 0.0
        %2533 = vmatpush2.msra.mxu0 0.0
        %2534 = vmatprep.subr.mxu0 0.0
        %2535 = vmatpush2.msra.mxu0 0.0
        %2536 = vmatprep.subr.mxu0 0.0
        %2537 = vmatpush2.msra.mxu0 0.0
        %2538 = vmatprep.subr.mxu0 0.0
        %2539 = vmatpush2.msra.mxu0 0.0
        %2540 = vmatprep.subr.mxu0 0.0
        %2541 = vmatpush2.msra.mxu0 0.0
        %2542 = vmatprep.subr.mxu0 0.0
        %2543 = vmatpush2.msra.mxu0 0.0
        %2544 = vmatprep.subr.mxu0 0.0
        %2545 = vmatpush2.msra.mxu0 0.0
        %2546 = vmatprep.subr.mxu0 0.0
        %2547 = vmatpush2.msra.mxu0 0.0
        %2548 = vmatprep.subr.mxu0 0.0
        %2549 = vmatpush2.msra.mxu0 0.0
        %2550 = vmatprep.subr.mxu0 0.0
        %2551 = vmatpush2.msra.mxu0 0.0
        %2552 = vmatprep.subr.mxu0 0.0
        %2553 = vmatpush2.msra.mxu0 0.0
        %2554 = vmatprep.subr.mxu0 0.0
        %2555 = vmatpush2.msra.mxu0 0.0
        %2556 = vmatprep.subr.mxu0 0.0
        %2557 = vmatpush2.msra.mxu0 0.0
        %2558 = vmatprep.subr.mxu0 0.0
        %2559 = vmatpush2.msra.mxu0 0.0
        %2560 = vmatprep.subr.mxu0 0.0
        %2561 = vmatpush2.msra.mxu0 0.0
        %2562 = vmatprep.mubr.f32.mxu0 0.0
        %2563 = vmatmul.mubr.f32.gmra.mxu0 %v2425
        %v2564 = vpop.f32.mrf.mxu0
        %v2565 = vadd.f32 0.0, %v2564
        %v2566 = vpop.f32.mrf.mxu0
        %v2567 = vadd.f32 0.0, %v2566
        %2568 = vdwg.mxu0
        %2569 = vmatprep.subr.mxu0 0.0
        %2570 = vmatpush1.msra.mxu0 0.0
        %2571 = vmatprep.subr.mxu0 0.0
        %2572 = vmatpush1.msra.mxu0 0.0
        %2573 = vmatprep.subr.mxu0 0.0
        %2574 = vmatpush1.msra.mxu0 0.0
        %2575 = vmatprep.subr.mxu0 0.0
        %2576 = vmatpush1.msra.mxu0 0.0
        %2577 = vmatprep.subr.mxu0 0.0
        %2578 = vmatpush1.msra.mxu0 0.0
        %2579 = vmatprep.subr.mxu0 0.0
        %2580 = vmatpush1.msra.mxu0 0.0
        %2581 = vmatprep.subr.mxu0 0.0
        %2582 = vmatpush1.msra.mxu0 0.0
        %2583 = vmatprep.subr.mxu0 0.0
        %2584 = vmatpush1.msra.mxu0 0.0
        %2585 = vmatprep.subr.mxu0 0.0
        %2586 = vmatpush1.msra.mxu0 0.0
        %2587 = vmatprep.subr.mxu0 0.0
        %2588 = vmatpush1.msra.mxu0 0.0
        %2589 = vmatprep.subr.mxu0 0.0
        %2590 = vmatpush1.msra.mxu0 0.0
        %2591 = vmatprep.subr.mxu0 0.0
        %2592 = vmatpush1.msra.mxu0 0.0
        %2593 = vmatprep.subr.mxu0 0.0
        %2594 = vmatpush1.msra.mxu0 0.0
        %2595 = vmatprep.subr.mxu0 0.0
        %2596 = vmatpush1.msra.mxu0 0.0
        %2597 = vmatprep.subr.mxu0 0.0
        %2598 = vmatpush1.msra.mxu0 0.0
        %2599 = vmatprep.subr.mxu0 %v2423
        %2600 = vmatpush1.msra.mxu0 %v2422
        %2601 = vmatprep.subr.mxu0 0.0
        %2602 = vmatpush2.msra.mxu0 0.0
        %2603 = vmatprep.subr.mxu0 0.0
        %2604 = vmatpush2.msra.mxu0 0.0
        %2605 = vmatprep.subr.mxu0 0.0
        %2606 = vmatpush2.msra.mxu0 0.0
        %2607 = vmatprep.subr.mxu0 0.0
        %2608 = vmatpush2.msra.mxu0 0.0
        %2609 = vmatprep.subr.mxu0 0.0
        %2610 = vmatpush2.msra.mxu0 0.0
        %2611 = vmatprep.subr.mxu0 0.0
        %2612 = vmatpush2.msra.mxu0 0.0
        %2613 = vmatprep.subr.mxu0 0.0
        %2614 = vmatpush2.msra.mxu0 0.0
        %2615 = vmatprep.subr.mxu0 0.0
        %2616 = vmatpush2.msra.mxu0 0.0
        %2617 = vmatprep.subr.mxu0 0.0
        %2618 = vmatpush2.msra.mxu0 0.0
        %2619 = vmatprep.subr.mxu0 0.0
        %2620 = vmatpush2.msra.mxu0 0.0
        %2621 = vmatprep.subr.mxu0 0.0
        %2622 = vmatpush2.msra.mxu0 0.0
        %2623 = vmatprep.subr.mxu0 0.0
        %2624 = vmatpush2.msra.mxu0 0.0
        %2625 = vmatprep.subr.mxu0 0.0
        %2626 = vmatpush2.msra.mxu0 0.0
        %2627 = vmatprep.subr.mxu0 0.0
        %2628 = vmatpush2.msra.mxu0 0.0
        %2629 = vmatprep.subr.mxu0 0.0
        %2630 = vmatpush2.msra.mxu0 0.0
        %2631 = vmatprep.subr.mxu0 0.0
        %2632 = vmatpush2.msra.mxu0 0.0
        %2633 = vmatprep.mubr.f32.mxu0 0.0
        %2634 = vmatmul.mubr.f32.gmra.mxu0 %v2425
        %v2635 = vpop.f32.mrf.mxu0
        %v2636 = vadd.f32 0.0, %v2635
        %v2637 = vpop.f32.mrf.mxu0
        %v2638 = vadd.f32 0.0, %v2637
        %2639 = vdwg.mxu0
        %v2641 = vsel %vm1628, %v1627, 0
        %2643 = vmatprep.subr.mxu0 0.0
        %2644 = vmatpush1.msra.mxu0 0.0
        %2645 = vmatprep.subr.mxu0 0.0
        %2646 = vmatpush1.msra.mxu0 0.0
        %2647 = vmatprep.subr.mxu0 0.0
        %2648 = vmatpush1.msra.mxu0 0.0
        %2649 = vmatprep.subr.mxu0 0.0
        %2650 = vmatpush1.msra.mxu0 0.0
        %2651 = vmatprep.subr.mxu0 0.0
        %2652 = vmatpush1.msra.mxu0 0.0
        %2653 = vmatprep.subr.mxu0 0.0
        %2654 = vmatpush1.msra.mxu0 0.0
        %2655 = vmatprep.subr.mxu0 0.0
        %2656 = vmatpush1.msra.mxu0 0.0
        %2657 = vmatprep.subr.mxu0 0.0
        %2658 = vmatpush1.msra.mxu0 0.0
        %2659 = vmatprep.subr.mxu0 0.0
        %2660 = vmatpush1.msra.mxu0 0.0
        %2661 = vmatprep.subr.mxu0 0.0
        %2662 = vmatpush1.msra.mxu0 0.0
        %2663 = vmatprep.subr.mxu0 0.0
        %2664 = vmatpush1.msra.mxu0 0.0
        %2665 = vmatprep.subr.mxu0 0.0
        %2666 = vmatpush1.msra.mxu0 0.0
        %2667 = vmatprep.subr.mxu0 0.0
        %2668 = vmatpush1.msra.mxu0 0.0
        %2669 = vmatprep.subr.mxu0 0.0
        %2670 = vmatpush1.msra.mxu0 0.0
        %2671 = vmatprep.subr.mxu0 %v1613
        %2672 = vmatpush1.msra.mxu0 %v1613
        %2673 = vmatprep.subr.mxu0 %v1604
        %2674 = vmatpush1.msra.mxu0 %v1603
        %2675 = vmatprep.subr.mxu0 0.0
        %2676 = vmatpush2.msra.mxu0 0.0
        %2677 = vmatprep.subr.mxu0 0.0
        %2678 = vmatpush2.msra.mxu0 0.0
        %2679 = vmatprep.subr.mxu0 0.0
        %2680 = vmatpush2.msra.mxu0 0.0
        %2681 = vmatprep.subr.mxu0 0.0
        %2682 = vmatpush2.msra.mxu0 0.0
        %2683 = vmatprep.subr.mxu0 0.0
        %2684 = vmatpush2.msra.mxu0 0.0
        %2685 = vmatprep.subr.mxu0 0.0
        %2686 = vmatpush2.msra.mxu0 0.0
        %2687 = vmatprep.subr.mxu0 0.0
        %2688 = vmatpush2.msra.mxu0 0.0
        %2689 = vmatprep.subr.mxu0 0.0
        %2690 = vmatpush2.msra.mxu0 0.0
        %2691 = vmatprep.subr.mxu0 0.0
        %2692 = vmatpush2.msra.mxu0 0.0
        %2693 = vmatprep.subr.mxu0 0.0
        %2694 = vmatpush2.msra.mxu0 0.0
        %2695 = vmatprep.subr.mxu0 0.0
        %2696 = vmatpush2.msra.mxu0 0.0
        %2697 = vmatprep.subr.mxu0 0.0
        %2698 = vmatpush2.msra.mxu0 0.0
        %2699 = vmatprep.subr.mxu0 0.0
        %2700 = vmatpush2.msra.mxu0 0.0
        %2701 = vmatprep.subr.mxu0 0.0
        %2702 = vmatpush2.msra.mxu0 0.0
        %2703 = vmatprep.subr.mxu0 0.0
        %2704 = vmatpush2.msra.mxu0 0.0
        %2705 = vmatprep.subr.mxu0 0.0
        %2706 = vmatpush2.msra.mxu0 0.0
        %2707 = vmatprep.mubr.f32.mxu0 0.0
        %2708 = vmatmul.mubr.f32.gmra.mxu0 %v2641
        %v2709 = vpop.f32.mrf.mxu0
        %v2710 = vadd.f32 %v2494, %v2709
        %v2711 = vpop.f32.mrf.mxu0
        %v2712 = vadd.f32 %v2496, %v2711
        %2713 = vdwg.mxu0
        %2714 = vmatprep.subr.mxu0 0.0
        %2715 = vmatpush1.msra.mxu0 0.0
        %2716 = vmatprep.subr.mxu0 0.0
        %2717 = vmatpush1.msra.mxu0 0.0
        %2718 = vmatprep.subr.mxu0 0.0
        %2719 = vmatpush1.msra.mxu0 0.0
        %2720 = vmatprep.subr.mxu0 0.0
        %2721 = vmatpush1.msra.mxu0 0.0
        %2722 = vmatprep.subr.mxu0 0.0
        %2723 = vmatpush1.msra.mxu0 0.0
        %2724 = vmatprep.subr.mxu0 0.0
        %2725 = vmatpush1.msra.mxu0 0.0
        %2726 = vmatprep.subr.mxu0 0.0
        %2727 = vmatpush1.msra.mxu0 0.0
        %2728 = vmatprep.subr.mxu0 0.0
        %2729 = vmatpush1.msra.mxu0 0.0
        %2730 = vmatprep.subr.mxu0 0.0
        %2731 = vmatpush1.msra.mxu0 0.0
        %2732 = vmatprep.subr.mxu0 0.0
        %2733 = vmatpush1.msra.mxu0 0.0
        %2734 = vmatprep.subr.mxu0 0.0
        %2735 = vmatpush1.msra.mxu0 0.0
        %2736 = vmatprep.subr.mxu0 0.0
        %2737 = vmatpush1.msra.mxu0 0.0
        %2738 = vmatprep.subr.mxu0 0.0
        %2739 = vmatpush1.msra.mxu0 0.0
        %2740 = vmatprep.subr.mxu0 0.0
        %2741 = vmatpush1.msra.mxu0 0.0
        %2742 = vmatprep.subr.mxu0 %v1617
        %2743 = vmatpush1.msra.mxu0 %v1617
        %2744 = vmatprep.subr.mxu0 %v1606
        %2745 = vmatpush1.msra.mxu0 %v1605
        %2746 = vmatprep.subr.mxu0 0.0
        %2747 = vmatpush2.msra.mxu0 0.0
        %2748 = vmatprep.subr.mxu0 0.0
        %2749 = vmatpush2.msra.mxu0 0.0
        %2750 = vmatprep.subr.mxu0 0.0
        %2751 = vmatpush2.msra.mxu0 0.0
        %2752 = vmatprep.subr.mxu0 0.0
        %2753 = vmatpush2.msra.mxu0 0.0
        %2754 = vmatprep.subr.mxu0 0.0
        %2755 = vmatpush2.msra.mxu0 0.0
        %2756 = vmatprep.subr.mxu0 0.0
        %2757 = vmatpush2.msra.mxu0 0.0
        %2758 = vmatprep.subr.mxu0 0.0
        %2759 = vmatpush2.msra.mxu0 0.0
        %2760 = vmatprep.subr.mxu0 0.0
        %2761 = vmatpush2.msra.mxu0 0.0
        %2762 = vmatprep.subr.mxu0 0.0
        %2763 = vmatpush2.msra.mxu0 0.0
        %2764 = vmatprep.subr.mxu0 0.0
        %2765 = vmatpush2.msra.mxu0 0.0
        %2766 = vmatprep.subr.mxu0 0.0
        %2767 = vmatpush2.msra.mxu0 0.0
        %2768 = vmatprep.subr.mxu0 0.0
        %2769 = vmatpush2.msra.mxu0 0.0
        %2770 = vmatprep.subr.mxu0 0.0
        %2771 = vmatpush2.msra.mxu0 0.0
        %2772 = vmatprep.subr.mxu0 0.0
        %2773 = vmatpush2.msra.mxu0 0.0
        %2774 = vmatprep.subr.mxu0 0.0
        %2775 = vmatpush2.msra.mxu0 0.0
        %2776 = vmatprep.subr.mxu0 0.0
        %2777 = vmatpush2.msra.mxu0 0.0
        %2778 = vmatprep.mubr.f32.mxu0 0.0
        %2779 = vmatmul.mubr.f32.gmra.mxu0 %v2641
        %v2780 = vpop.f32.mrf.mxu0
        %v2781 = vadd.f32 %v2565, %v2780
        %v2782 = vpop.f32.mrf.mxu0
        %v2783 = vadd.f32 %v2567, %v2782
        %2784 = vdwg.mxu0
        %2785 = vmatprep.subr.mxu0 0.0
        %2786 = vmatpush1.msra.mxu0 0.0
        %2787 = vmatprep.subr.mxu0 0.0
        %2788 = vmatpush1.msra.mxu0 0.0
        %2789 = vmatprep.subr.mxu0 0.0
        %2790 = vmatpush1.msra.mxu0 0.0
        %2791 = vmatprep.subr.mxu0 0.0
        %2792 = vmatpush1.msra.mxu0 0.0
        %2793 = vmatprep.subr.mxu0 0.0
        %2794 = vmatpush1.msra.mxu0 0.0
        %2795 = vmatprep.subr.mxu0 0.0
        %2796 = vmatpush1.msra.mxu0 0.0
        %2797 = vmatprep.subr.mxu0 0.0
        %2798 = vmatpush1.msra.mxu0 0.0
        %2799 = vmatprep.subr.mxu0 0.0
        %2800 = vmatpush1.msra.mxu0 0.0
        %2801 = vmatprep.subr.mxu0 0.0
        %2802 = vmatpush1.msra.mxu0 0.0
        %2803 = vmatprep.subr.mxu0 0.0
        %2804 = vmatpush1.msra.mxu0 0.0
        %2805 = vmatprep.subr.mxu0 0.0
        %2806 = vmatpush1.msra.mxu0 0.0
        %2807 = vmatprep.subr.mxu0 0.0
        %2808 = vmatpush1.msra.mxu0 0.0
        %2809 = vmatprep.subr.mxu0 0.0
        %2810 = vmatpush1.msra.mxu0 0.0
        %2811 = vmatprep.subr.mxu0 0.0
        %2812 = vmatpush1.msra.mxu0 0.0
        %2813 = vmatprep.subr.mxu0 %v1621
        %2814 = vmatpush1.msra.mxu0 %v1621
        %2815 = vmatprep.subr.mxu0 %v1608
        %2816 = vmatpush1.msra.mxu0 %v1607
        %2817 = vmatprep.subr.mxu0 0.0
        %2818 = vmatpush2.msra.mxu0 0.0
        %2819 = vmatprep.subr.mxu0 0.0
        %2820 = vmatpush2.msra.mxu0 0.0
        %2821 = vmatprep.subr.mxu0 0.0
        %2822 = vmatpush2.msra.mxu0 0.0
        %2823 = vmatprep.subr.mxu0 0.0
        %2824 = vmatpush2.msra.mxu0 0.0
        %2825 = vmatprep.subr.mxu0 0.0
        %2826 = vmatpush2.msra.mxu0 0.0
        %2827 = vmatprep.subr.mxu0 0.0
        %2828 = vmatpush2.msra.mxu0 0.0
        %2829 = vmatprep.subr.mxu0 0.0
        %2830 = vmatpush2.msra.mxu0 0.0
        %2831 = vmatprep.subr.mxu0 0.0
        %2832 = vmatpush2.msra.mxu0 0.0
        %2833 = vmatprep.subr.mxu0 0.0
        %2834 = vmatpush2.msra.mxu0 0.0
        %2835 = vmatprep.subr.mxu0 0.0
        %2836 = vmatpush2.msra.mxu0 0.0
        %2837 = vmatprep.subr.mxu0 0.0
        %2838 = vmatpush2.msra.mxu0 0.0
        %2839 = vmatprep.subr.mxu0 0.0
        %2840 = vmatpush2.msra.mxu0 0.0
        %2841 = vmatprep.subr.mxu0 0.0
        %2842 = vmatpush2.msra.mxu0 0.0
        %2843 = vmatprep.subr.mxu0 0.0
        %2844 = vmatpush2.msra.mxu0 0.0
        %2845 = vmatprep.subr.mxu0 0.0
        %2846 = vmatpush2.msra.mxu0 0.0
        %2847 = vmatprep.subr.mxu0 0.0
        %2848 = vmatpush2.msra.mxu0 0.0
        %2849 = vmatprep.mubr.f32.mxu0 0.0
        %2850 = vmatmul.mubr.f32.gmra.mxu0 %v2641
        %v2851 = vpop.f32.mrf.mxu0
        %v2852 = vadd.f32 %v2636, %v2851
        %v2853 = vpop.f32.mrf.mxu0
        %v2854 = vadd.f32 %v2638, %v2853
        %2855 = vdwg.mxu0
        %v2856 = vadd.f32 %v2710, %v2712
        %2857 = vadd.xlane.f32.xlu0 %v2856
        %v2858 = vpop.xlane.xlu0 %2857
        %v2859 = vmul.f32 %v2858, %v1612
        %v2860 = vadd.f32 %v2781, %v2783
        %2861 = vadd.xlane.f32.xlu0 %v2860
        %v2862 = vpop.xlane.xlu0 %2861
        %v2863 = vmul.f32 %v2862, %v1612
        %v2864 = vadd.f32 %v2852, %v2854
        %2865 = vadd.xlane.f32.xlu0 %v2864
        %v2866 = vpop.xlane.xlu0 %2865
        %v2867 = vmul.f32 %v2866, %v1612
        %v2868 = vld [vmem:[%s10] sm:$0xff]
        %v2869 = vld [vmem:[%s10 + $0x8] sm:$0xff]
        %v2870 = vld [vmem:[#allocation18] sm:$0xff]
        %v2871 = vld [vmem:[#allocation18 + $0x8] sm:$0xff]
        %v2872 = vld [vmem:[#allocation19] sm:$0xff]
        %v2873 = vld [vmem:[#allocation19 + $0x8] sm:$0xff]
        %v2874 = vld [vmem:[#allocation21] sm:$0xff]
        %v2875 = vld [vmem:[#allocation21 + $0x8] sm:$0xff]
        %v2877 = vsel %vm1628, %v2868, 0
        %v2880 = vsel %vm1628, %v2869, 0
        %2882 = vmatprep.subr.mxu0 0.0
        %2883 = vmatpush1.msra.mxu0 0.0
        %2884 = vmatprep.subr.mxu0 0.0
        %2885 = vmatpush1.msra.mxu0 0.0
        %2886 = vmatprep.subr.mxu0 0.0
        %2887 = vmatpush1.msra.mxu0 0.0
        %2888 = vmatprep.subr.mxu0 0.0
        %2889 = vmatpush1.msra.mxu0 0.0
        %2890 = vmatprep.subr.mxu0 0.0
        %2891 = vmatpush1.msra.mxu0 0.0
        %2892 = vmatprep.subr.mxu0 0.0
        %2893 = vmatpush1.msra.mxu0 0.0
        %2894 = vmatprep.subr.mxu0 0.0
        %2895 = vmatpush1.msra.mxu0 0.0
        %2896 = vmatprep.subr.mxu0 0.0
        %2897 = vmatpush1.msra.mxu0 0.0
        %2898 = vmatprep.subr.mxu0 0.0
        %2899 = vmatpush1.msra.mxu0 0.0
        %2900 = vmatprep.subr.mxu0 0.0
        %2901 = vmatpush1.msra.mxu0 0.0
        %2902 = vmatprep.subr.mxu0 0.0
        %2903 = vmatpush1.msra.mxu0 0.0
        %2904 = vmatprep.subr.mxu0 0.0
        %2905 = vmatpush1.msra.mxu0 0.0
        %2906 = vmatprep.subr.mxu0 0.0
        %2907 = vmatpush1.msra.mxu0 0.0
        %2908 = vmatprep.subr.mxu0 0.0
        %2909 = vmatpush1.msra.mxu0 0.0
        %2910 = vmatprep.subr.mxu0 %v2859
        %2911 = vmatpush1.msra.mxu0 %v2859
        %2912 = vmatprep.subr.mxu0 %v2712
        %2913 = vmatpush1.msra.mxu0 %v2710
        %2914 = vmatprep.subr.mxu0 0.0
        %2915 = vmatpush2.msra.mxu0 0.0
        %2916 = vmatprep.subr.mxu0 0.0
        %2917 = vmatpush2.msra.mxu0 0.0
        %2918 = vmatprep.subr.mxu0 0.0
        %2919 = vmatpush2.msra.mxu0 0.0
        %2920 = vmatprep.subr.mxu0 0.0
        %2921 = vmatpush2.msra.mxu0 0.0
        %2922 = vmatprep.subr.mxu0 0.0
        %2923 = vmatpush2.msra.mxu0 0.0
        %2924 = vmatprep.subr.mxu0 0.0
        %2925 = vmatpush2.msra.mxu0 0.0
        %2926 = vmatprep.subr.mxu0 0.0
        %2927 = vmatpush2.msra.mxu0 0.0
        %2928 = vmatprep.subr.mxu0 0.0
        %2929 = vmatpush2.msra.mxu0 0.0
        %2930 = vmatprep.subr.mxu0 0.0
        %2931 = vmatpush2.msra.mxu0 0.0
        %2932 = vmatprep.subr.mxu0 0.0
        %2933 = vmatpush2.msra.mxu0 0.0
        %2934 = vmatprep.subr.mxu0 0.0
        %2935 = vmatpush2.msra.mxu0 0.0
        %2936 = vmatprep.subr.mxu0 0.0
        %2937 = vmatpush2.msra.mxu0 0.0
        %2938 = vmatprep.subr.mxu0 0.0
        %2939 = vmatpush2.msra.mxu0 0.0
        %2940 = vmatprep.subr.mxu0 0.0
        %2941 = vmatpush2.msra.mxu0 0.0
        %2942 = vmatprep.subr.mxu0 0.0
        %2943 = vmatpush2.msra.mxu0 0.0
        %2944 = vmatprep.subr.mxu0 0.0
        %2945 = vmatpush2.msra.mxu0 0.0
        %2946 = vmatprep.mubr.f32.mxu0 0.0
        %2947 = vmatmul.mubr.f32.gmra.mxu0 %v2877
        %v2948 = vpop.f32.mrf.mxu0
        %v2949 = vadd.f32 0.0, %v2948
        %v2950 = vpop.f32.mrf.mxu0
        %v2951 = vadd.f32 0.0, %v2950
        %2952 = vmatprep.mubr.f32.mxu0 0.0
        %2953 = vmatmul.mubr.f32.gmra.mxu0 %v2880
        %v2954 = vpop.f32.mrf.mxu0
        %v2955 = vadd.f32 0.0, %v2954
        %v2956 = vpop.f32.mrf.mxu0
        %v2957 = vadd.f32 0.0, %v2956
        %2958 = vdwg.mxu0
        %2959 = vmatprep.subr.mxu0 0.0
        %2960 = vmatpush1.msra.mxu0 0.0
        %2961 = vmatprep.subr.mxu0 0.0
        %2962 = vmatpush1.msra.mxu0 0.0
        %2963 = vmatprep.subr.mxu0 0.0
        %2964 = vmatpush1.msra.mxu0 0.0
        %2965 = vmatprep.subr.mxu0 0.0
        %2966 = vmatpush1.msra.mxu0 0.0
        %2967 = vmatprep.subr.mxu0 0.0
        %2968 = vmatpush1.msra.mxu0 0.0
        %2969 = vmatprep.subr.mxu0 0.0
        %2970 = vmatpush1.msra.mxu0 0.0
        %2971 = vmatprep.subr.mxu0 0.0
        %2972 = vmatpush1.msra.mxu0 0.0
        %2973 = vmatprep.subr.mxu0 0.0
        %2974 = vmatpush1.msra.mxu0 0.0
        %2975 = vmatprep.subr.mxu0 0.0
        %2976 = vmatpush1.msra.mxu0 0.0
        %2977 = vmatprep.subr.mxu0 0.0
        %2978 = vmatpush1.msra.mxu0 0.0
        %2979 = vmatprep.subr.mxu0 0.0
        %2980 = vmatpush1.msra.mxu0 0.0
        %2981 = vmatprep.subr.mxu0 0.0
        %2982 = vmatpush1.msra.mxu0 0.0
        %2983 = vmatprep.subr.mxu0 0.0
        %2984 = vmatpush1.msra.mxu0 0.0
        %2985 = vmatprep.subr.mxu0 0.0
        %2986 = vmatpush1.msra.mxu0 0.0
        %2987 = vmatprep.subr.mxu0 %v2863
        %2988 = vmatpush1.msra.mxu0 %v2863
        %2989 = vmatprep.subr.mxu0 %v2783
        %2990 = vmatpush1.msra.mxu0 %v2781
        %2991 = vmatprep.subr.mxu0 0.0
        %2992 = vmatpush2.msra.mxu0 0.0
        %2993 = vmatprep.subr.mxu0 0.0
        %2994 = vmatpush2.msra.mxu0 0.0
        %2995 = vmatprep.subr.mxu0 0.0
        %2996 = vmatpush2.msra.mxu0 0.0
        %2997 = vmatprep.subr.mxu0 0.0
        %2998 = vmatpush2.msra.mxu0 0.0
        %2999 = vmatprep.subr.mxu0 0.0
        %3000 = vmatpush2.msra.mxu0 0.0
        %3001 = vmatprep.subr.mxu0 0.0
        %3002 = vmatpush2.msra.mxu0 0.0
        %3003 = vmatprep.subr.mxu0 0.0
        %3004 = vmatpush2.msra.mxu0 0.0
        %3005 = vmatprep.subr.mxu0 0.0
        %3006 = vmatpush2.msra.mxu0 0.0
        %3007 = vmatprep.subr.mxu0 0.0
        %3008 = vmatpush2.msra.mxu0 0.0
        %3009 = vmatprep.subr.mxu0 0.0
        %3010 = vmatpush2.msra.mxu0 0.0
        %3011 = vmatprep.subr.mxu0 0.0
        %3012 = vmatpush2.msra.mxu0 0.0
        %3013 = vmatprep.subr.mxu0 0.0
        %3014 = vmatpush2.msra.mxu0 0.0
        %3015 = vmatprep.subr.mxu0 0.0
        %3016 = vmatpush2.msra.mxu0 0.0
        %3017 = vmatprep.subr.mxu0 0.0
        %3018 = vmatpush2.msra.mxu0 0.0
        %3019 = vmatprep.subr.mxu0 0.0
        %3020 = vmatpush2.msra.mxu0 0.0
        %3021 = vmatprep.subr.mxu0 0.0
        %3022 = vmatpush2.msra.mxu0 0.0
        %3023 = vmatprep.mubr.f32.mxu0 0.0
        %3024 = vmatmul.mubr.f32.gmra.mxu0 %v2877
        %v3025 = vpop.f32.mrf.mxu0
        %v3026 = vadd.f32 0.0, %v3025
        %v3027 = vpop.f32.mrf.mxu0
        %v3028 = vadd.f32 0.0, %v3027
        %3029 = vmatprep.mubr.f32.mxu0 0.0
        %3030 = vmatmul.mubr.f32.gmra.mxu0 %v2880
        %v3031 = vpop.f32.mrf.mxu0
        %v3032 = vadd.f32 0.0, %v3031
        %v3033 = vpop.f32.mrf.mxu0
        %v3034 = vadd.f32 0.0, %v3033
        %3035 = vdwg.mxu0
        %3036 = vmatprep.subr.mxu0 0.0
        %3037 = vmatpush1.msra.mxu0 0.0
        %3038 = vmatprep.subr.mxu0 0.0
        %3039 = vmatpush1.msra.mxu0 0.0
        %3040 = vmatprep.subr.mxu0 0.0
        %3041 = vmatpush1.msra.mxu0 0.0
        %3042 = vmatprep.subr.mxu0 0.0
        %3043 = vmatpush1.msra.mxu0 0.0
        %3044 = vmatprep.subr.mxu0 0.0
        %3045 = vmatpush1.msra.mxu0 0.0
        %3046 = vmatprep.subr.mxu0 0.0
        %3047 = vmatpush1.msra.mxu0 0.0
        %3048 = vmatprep.subr.mxu0 0.0
        %3049 = vmatpush1.msra.mxu0 0.0
        %3050 = vmatprep.subr.mxu0 0.0
        %3051 = vmatpush1.msra.mxu0 0.0
        %3052 = vmatprep.subr.mxu0 0.0
        %3053 = vmatpush1.msra.mxu0 0.0
        %3054 = vmatprep.subr.mxu0 0.0
        %3055 = vmatpush1.msra.mxu0 0.0
        %3056 = vmatprep.subr.mxu0 0.0
        %3057 = vmatpush1.msra.mxu0 0.0
        %3058 = vmatprep.subr.mxu0 0.0
        %3059 = vmatpush1.msra.mxu0 0.0
        %3060 = vmatprep.subr.mxu0 0.0
        %3061 = vmatpush1.msra.mxu0 0.0
        %3062 = vmatprep.subr.mxu0 0.0
        %3063 = vmatpush1.msra.mxu0 0.0
        %3064 = vmatprep.subr.mxu0 %v2867
        %3065 = vmatpush1.msra.mxu0 %v2867
        %3066 = vmatprep.subr.mxu0 %v2854
        %3067 = vmatpush1.msra.mxu0 %v2852
        %3068 = vmatprep.subr.mxu0 0.0
        %3069 = vmatpush2.msra.mxu0 0.0
        %3070 = vmatprep.subr.mxu0 0.0
        %3071 = vmatpush2.msra.mxu0 0.0
        %3072 = vmatprep.subr.mxu0 0.0
        %3073 = vmatpush2.msra.mxu0 0.0
        %3074 = vmatprep.subr.mxu0 0.0
        %3075 = vmatpush2.msra.mxu0 0.0
        %3076 = vmatprep.subr.mxu0 0.0
        %3077 = vmatpush2.msra.mxu0 0.0
        %3078 = vmatprep.subr.mxu0 0.0
        %3079 = vmatpush2.msra.mxu0 0.0
        %3080 = vmatprep.subr.mxu0 0.0
        %3081 = vmatpush2.msra.mxu0 0.0
        %3082 = vmatprep.subr.mxu0 0.0
        %3083 = vmatpush2.msra.mxu0 0.0
        %3084 = vmatprep.subr.mxu0 0.0
        %3085 = vmatpush2.msra.mxu0 0.0
        %3086 = vmatprep.subr.mxu0 0.0
        %3087 = vmatpush2.msra.mxu0 0.0
        %3088 = vmatprep.subr.mxu0 0.0
        %3089 = vmatpush2.msra.mxu0 0.0
        %3090 = vmatprep.subr.mxu0 0.0
        %3091 = vmatpush2.msra.mxu0 0.0
        %3092 = vmatprep.subr.mxu0 0.0
        %3093 = vmatpush2.msra.mxu0 0.0
        %3094 = vmatprep.subr.mxu0 0.0
        %3095 = vmatpush2.msra.mxu0 0.0
        %3096 = vmatprep.subr.mxu0 0.0
        %3097 = vmatpush2.msra.mxu0 0.0
        %3098 = vmatprep.subr.mxu0 0.0
        %3099 = vmatpush2.msra.mxu0 0.0
        %3100 = vmatprep.mubr.f32.mxu0 0.0
        %3101 = vmatmul.mubr.f32.gmra.mxu0 %v2877
        %v3102 = vpop.f32.mrf.mxu0
        %v3103 = vadd.f32 0.0, %v3102
        %v3104 = vpop.f32.mrf.mxu0
        %v3105 = vadd.f32 0.0, %v3104
        %3106 = vmatprep.mubr.f32.mxu0 0.0
        %3107 = vmatmul.mubr.f32.gmra.mxu0 %v2880
        %v3108 = vpop.f32.mrf.mxu0
        %v3109 = vadd.f32 0.0, %v3108
        %v3110 = vpop.f32.mrf.mxu0
        %v3111 = vadd.f32 0.0, %v3110
        %3112 = vdwg.mxu0
        %v3113 = vmul.f32 %v2710, %v2949
        %v3114 = vmul.f32 %v2712, %v2951
        %v3115 = vmul.f32 %v2859, %v2955
        %v3116 = vmul.f32 %v2859, %v2957
        %v3117 = vmul.f32 %v2781, %v3026
        %v3118 = vmul.f32 %v2783, %v3028
        %v3119 = vmul.f32 %v2863, %v3032
        %v3120 = vmul.f32 %v2863, %v3034
        %v3121 = vadd.f32 %v3113, %v3117
        %v3122 = vadd.f32 %v3114, %v3118
        %v3123 = vadd.f32 %v3115, %v3119
        %v3124 = vadd.f32 %v3116, %v3120
        %v3125 = vmul.f32 %v2852, %v3103
        %v3126 = vmul.f32 %v2854, %v3105
        %v3127 = vmul.f32 %v2867, %v3109
        %v3128 = vmul.f32 %v2867, %v3111
        %v3129 = vadd.f32 %v3121, %v3125
        %v3130 = vadd.f32 %v3122, %v3126
        %v3131 = vadd.f32 %v3123, %v3127
        %v3132 = vadd.f32 %v3124, %v3128
        %v3133 = vmul.f32 %v2949, %v2949
        %v3134 = vmul.f32 %v2951, %v2951
        %v3135 = vmul.f32 %v2955, %v2955
        %v3136 = vmul.f32 %v2957, %v2957
        %v3137 = vmul.f32 %v3026, %v3026
        %v3138 = vmul.f32 %v3028, %v3028
        %v3139 = vmul.f32 %v3032, %v3032
        %v3140 = vmul.f32 %v3034, %v3034
        %v3141 = vadd.f32 %v3133, %v3137
        %v3142 = vadd.f32 %v3134, %v3138
        %v3143 = vadd.f32 %v3135, %v3139
        %v3144 = vadd.f32 %v3136, %v3140
        %v3145 = vmul.f32 %v3103, %v3103
        %v3146 = vmul.f32 %v3105, %v3105
        %v3147 = vmul.f32 %v3109, %v3109
        %v3148 = vmul.f32 %v3111, %v3111
        %v3149 = vadd.f32 %v3141, %v3145
        %v3150 = vadd.f32 %v3142, %v3146
        %v3151 = vadd.f32 %v3143, %v3147
        %v3152 = vadd.f32 %v3144, %v3148
        %v3153 = vadd.f32 %v3149, 1e-06
        %v3154 = vadd.f32 %v3150, 1e-06
        %v3155 = vadd.f32 %v3151, 1e-06
        %v3156 = vadd.f32 %v3152, 1e-06
        %vm3157 = vcmp.lt.f32.partialorder %v3129, 0.0
        %vm3158 = vcmp.lt.f32.partialorder %v3130, 0.0
        %vm3159 = vcmp.lt.f32.partialorder %v3131, 0.0
        %vm3160 = vcmp.lt.f32.partialorder %v3132, 0.0
        %v3161 = vrcp.pop %v3153
        %v3162 = vrcp.pop %v3154
        %v3163 = vrcp.pop %v3155
        %v3164 = vrcp.pop %v3156
        %v3165 = vmul.f32 %v3129, %v3161
        %v3166 = vmul.f32 %v3130, %v3162
        %v3167 = vmul.f32 %v3131, %v3163
        %v3168 = vmul.f32 %v3132, %v3164
        %v3169 = vsel %vm3157, %v3165, 0.0
        %v3170 = vsel %vm3158, %v3166, 0.0
        %v3171 = vsel %vm3159, %v3167, 0.0
        %v3172 = vsel %vm3160, %v3168, 0.0
        %v3173 = vmul.f32 %v3169, %v2949
        %v3174 = vmul.f32 %v3170, %v2951
        %v3175 = vmul.f32 %v3169, %v3026
        %v3176 = vmul.f32 %v3170, %v3028
        %v3177 = vmul.f32 %v3169, %v3103
        %v3178 = vmul.f32 %v3170, %v3105
        %v3179 = vmul.f32 %v3171, %v2955
        %v3180 = vmul.f32 %v3172, %v2957
        %v3181 = vmul.f32 %v3171, %v3032
        %v3182 = vmul.f32 %v3172, %v3034
        %v3183 = vmul.f32 %v3171, %v3109
        %v3184 = vmul.f32 %v3172, %v3111
        %v3185 = vsub.f32 %v2710, %v3173
        %v3186 = vsub.f32 %v2712, %v3174
        %v3187 = vsub.f32 %v2781, %v3175
        %v3188 = vsub.f32 %v2783, %v3176
        %v3189 = vsub.f32 %v2852, %v3177
        %v3190 = vsub.f32 %v2854, %v3178
        %v3191 = vsub.f32 %v2859, %v3179
        %v3192 = vsub.f32 %v2859, %v3180
        %v3193 = vsub.f32 %v2863, %v3181
        %v3194 = vsub.f32 %v2863, %v3182
        %v3195 = vsub.f32 %v2867, %v3183
        %v3196 = vsub.f32 %v2867, %v3184
        %v3198 = vsel %vm1628, %v2870, 0
        %v3201 = vsel %vm1628, %v2871, 0
        %3203 = vmatprep.subr.mxu0 0.0
        %3204 = vmatpush1.msra.mxu0 0.0
        %3205 = vmatprep.subr.mxu0 0.0
        %3206 = vmatpush1.msra.mxu0 0.0
        %3207 = vmatprep.subr.mxu0 0.0
        %3208 = vmatpush1.msra.mxu0 0.0
        %3209 = vmatprep.subr.mxu0 0.0
        %3210 = vmatpush1.msra.mxu0 0.0
        %3211 = vmatprep.subr.mxu0 0.0
        %3212 = vmatpush1.msra.mxu0 0.0
        %3213 = vmatprep.subr.mxu0 0.0
        %3214 = vmatpush1.msra.mxu0 0.0
        %3215 = vmatprep.subr.mxu0 0.0
        %3216 = vmatpush1.msra.mxu0 0.0
        %3217 = vmatprep.subr.mxu0 0.0
        %3218 = vmatpush1.msra.mxu0 0.0
        %3219 = vmatprep.subr.mxu0 0.0
        %3220 = vmatpush1.msra.mxu0 0.0
        %3221 = vmatprep.subr.mxu0 0.0
        %3222 = vmatpush1.msra.mxu0 0.0
        %3223 = vmatprep.subr.mxu0 0.0
        %3224 = vmatpush1.msra.mxu0 0.0
        %3225 = vmatprep.subr.mxu0 0.0
        %3226 = vmatpush1.msra.mxu0 0.0
        %3227 = vmatprep.subr.mxu0 0.0
        %3228 = vmatpush1.msra.mxu0 0.0
        %3229 = vmatprep.subr.mxu0 0.0
        %3230 = vmatpush1.msra.mxu0 0.0
        %3231 = vmatprep.subr.mxu0 %v3192
        %3232 = vmatpush1.msra.mxu0 %v3191
        %3233 = vmatprep.subr.mxu0 %v3186
        %3234 = vmatpush1.msra.mxu0 %v3185
        %3235 = vmatprep.subr.mxu0 0.0
        %3236 = vmatpush2.msra.mxu0 0.0
        %3237 = vmatprep.subr.mxu0 0.0
        %3238 = vmatpush2.msra.mxu0 0.0
        %3239 = vmatprep.subr.mxu0 0.0
        %3240 = vmatpush2.msra.mxu0 0.0
        %3241 = vmatprep.subr.mxu0 0.0
        %3242 = vmatpush2.msra.mxu0 0.0
        %3243 = vmatprep.subr.mxu0 0.0
        %3244 = vmatpush2.msra.mxu0 0.0
        %3245 = vmatprep.subr.mxu0 0.0
        %3246 = vmatpush2.msra.mxu0 0.0
        %3247 = vmatprep.subr.mxu0 0.0
        %3248 = vmatpush2.msra.mxu0 0.0
        %3249 = vmatprep.subr.mxu0 0.0
        %3250 = vmatpush2.msra.mxu0 0.0
        %3251 = vmatprep.subr.mxu0 0.0
        %3252 = vmatpush2.msra.mxu0 0.0
        %3253 = vmatprep.subr.mxu0 0.0
        %3254 = vmatpush2.msra.mxu0 0.0
        %3255 = vmatprep.subr.mxu0 0.0
        %3256 = vmatpush2.msra.mxu0 0.0
        %3257 = vmatprep.subr.mxu0 0.0
        %3258 = vmatpush2.msra.mxu0 0.0
        %3259 = vmatprep.subr.mxu0 0.0
        %3260 = vmatpush2.msra.mxu0 0.0
        %3261 = vmatprep.subr.mxu0 0.0
        %3262 = vmatpush2.msra.mxu0 0.0
        %3263 = vmatprep.subr.mxu0 0.0
        %3264 = vmatpush2.msra.mxu0 0.0
        %3265 = vmatprep.subr.mxu0 0.0
        %3266 = vmatpush2.msra.mxu0 0.0
        %3267 = vmatprep.mubr.f32.mxu0 0.0
        %3268 = vmatmul.mubr.f32.gmra.mxu0 %v3198
        %v3269 = vpop.f32.mrf.mxu0
        %v3270 = vadd.f32 0.0, %v3269
        %v3271 = vpop.f32.mrf.mxu0
        %v3272 = vadd.f32 0.0, %v3271
        %3273 = vmatprep.mubr.f32.mxu0 0.0
        %3274 = vmatmul.mubr.f32.gmra.mxu0 %v3201
        %v3275 = vpop.f32.mrf.mxu0
        %v3276 = vadd.f32 0.0, %v3275
        %v3277 = vpop.f32.mrf.mxu0
        %v3278 = vadd.f32 0.0, %v3277
        %3279 = vdwg.mxu0
        %3280 = vmatprep.subr.mxu0 0.0
        %3281 = vmatpush1.msra.mxu0 0.0
        %3282 = vmatprep.subr.mxu0 0.0
        %3283 = vmatpush1.msra.mxu0 0.0
        %3284 = vmatprep.subr.mxu0 0.0
        %3285 = vmatpush1.msra.mxu0 0.0
        %3286 = vmatprep.subr.mxu0 0.0
        %3287 = vmatpush1.msra.mxu0 0.0
        %3288 = vmatprep.subr.mxu0 0.0
        %3289 = vmatpush1.msra.mxu0 0.0
        %3290 = vmatprep.subr.mxu0 0.0
        %3291 = vmatpush1.msra.mxu0 0.0
        %3292 = vmatprep.subr.mxu0 0.0
        %3293 = vmatpush1.msra.mxu0 0.0
        %3294 = vmatprep.subr.mxu0 0.0
        %3295 = vmatpush1.msra.mxu0 0.0
        %3296 = vmatprep.subr.mxu0 0.0
        %3297 = vmatpush1.msra.mxu0 0.0
        %3298 = vmatprep.subr.mxu0 0.0
        %3299 = vmatpush1.msra.mxu0 0.0
        %3300 = vmatprep.subr.mxu0 0.0
        %3301 = vmatpush1.msra.mxu0 0.0
        %3302 = vmatprep.subr.mxu0 0.0
        %3303 = vmatpush1.msra.mxu0 0.0
        %3304 = vmatprep.subr.mxu0 0.0
        %3305 = vmatpush1.msra.mxu0 0.0
        %3306 = vmatprep.subr.mxu0 0.0
        %3307 = vmatpush1.msra.mxu0 0.0
        %3308 = vmatprep.subr.mxu0 %v3194
        %3309 = vmatpush1.msra.mxu0 %v3193
        %3310 = vmatprep.subr.mxu0 %v3188
        %3311 = vmatpush1.msra.mxu0 %v3187
        %3312 = vmatprep.subr.mxu0 0.0
        %3313 = vmatpush2.msra.mxu0 0.0
        %3314 = vmatprep.subr.mxu0 0.0
        %3315 = vmatpush2.msra.mxu0 0.0
        %3316 = vmatprep.subr.mxu0 0.0
        %3317 = vmatpush2.msra.mxu0 0.0
        %3318 = vmatprep.subr.mxu0 0.0
        %3319 = vmatpush2.msra.mxu0 0.0
        %3320 = vmatprep.subr.mxu0 0.0
        %3321 = vmatpush2.msra.mxu0 0.0
        %3322 = vmatprep.subr.mxu0 0.0
        %3323 = vmatpush2.msra.mxu0 0.0
        %3324 = vmatprep.subr.mxu0 0.0
        %3325 = vmatpush2.msra.mxu0 0.0
        %3326 = vmatprep.subr.mxu0 0.0
        %3327 = vmatpush2.msra.mxu0 0.0
        %3328 = vmatprep.subr.mxu0 0.0
        %3329 = vmatpush2.msra.mxu0 0.0
        %3330 = vmatprep.subr.mxu0 0.0
        %3331 = vmatpush2.msra.mxu0 0.0
        %3332 = vmatprep.subr.mxu0 0.0
        %3333 = vmatpush2.msra.mxu0 0.0
        %3334 = vmatprep.subr.mxu0 0.0
        %3335 = vmatpush2.msra.mxu0 0.0
        %3336 = vmatprep.subr.mxu0 0.0
        %3337 = vmatpush2.msra.mxu0 0.0
        %3338 = vmatprep.subr.mxu0 0.0
        %3339 = vmatpush2.msra.mxu0 0.0
        %3340 = vmatprep.subr.mxu0 0.0
        %3341 = vmatpush2.msra.mxu0 0.0
        %3342 = vmatprep.subr.mxu0 0.0
        %3343 = vmatpush2.msra.mxu0 0.0
        %3344 = vmatprep.mubr.f32.mxu0 0.0
        %3345 = vmatmul.mubr.f32.gmra.mxu0 %v3198
        %v3346 = vpop.f32.mrf.mxu0
        %v3347 = vadd.f32 0.0, %v3346
        %v3348 = vpop.f32.mrf.mxu0
        %v3349 = vadd.f32 0.0, %v3348
        %3350 = vmatprep.mubr.f32.mxu0 0.0
        %3351 = vmatmul.mubr.f32.gmra.mxu0 %v3201
        %v3352 = vpop.f32.mrf.mxu0
        %v3353 = vadd.f32 0.0, %v3352
        %v3354 = vpop.f32.mrf.mxu0
        %v3355 = vadd.f32 0.0, %v3354
        %3356 = vdwg.mxu0
        %3357 = vmatprep.subr.mxu0 0.0
        %3358 = vmatpush1.msra.mxu0 0.0
        %3359 = vmatprep.subr.mxu0 0.0
        %3360 = vmatpush1.msra.mxu0 0.0
        %3361 = vmatprep.subr.mxu0 0.0
        %3362 = vmatpush1.msra.mxu0 0.0
        %3363 = vmatprep.subr.mxu0 0.0
        %3364 = vmatpush1.msra.mxu0 0.0
        %3365 = vmatprep.subr.mxu0 0.0
        %3366 = vmatpush1.msra.mxu0 0.0
        %3367 = vmatprep.subr.mxu0 0.0
        %3368 = vmatpush1.msra.mxu0 0.0
        %3369 = vmatprep.subr.mxu0 0.0
        %3370 = vmatpush1.msra.mxu0 0.0
        %3371 = vmatprep.subr.mxu0 0.0
        %3372 = vmatpush1.msra.mxu0 0.0
        %3373 = vmatprep.subr.mxu0 0.0
        %3374 = vmatpush1.msra.mxu0 0.0
        %3375 = vmatprep.subr.mxu0 0.0
        %3376 = vmatpush1.msra.mxu0 0.0
        %3377 = vmatprep.subr.mxu0 0.0
        %3378 = vmatpush1.msra.mxu0 0.0
        %3379 = vmatprep.subr.mxu0 0.0
        %3380 = vmatpush1.msra.mxu0 0.0
        %3381 = vmatprep.subr.mxu0 0.0
        %3382 = vmatpush1.msra.mxu0 0.0
        %3383 = vmatprep.subr.mxu0 0.0
        %3384 = vmatpush1.msra.mxu0 0.0
        %3385 = vmatprep.subr.mxu0 %v3196
        %3386 = vmatpush1.msra.mxu0 %v3195
        %3387 = vmatprep.subr.mxu0 %v3190
        %3388 = vmatpush1.msra.mxu0 %v3189
        %3389 = vmatprep.subr.mxu0 0.0
        %3390 = vmatpush2.msra.mxu0 0.0
        %3391 = vmatprep.subr.mxu0 0.0
        %3392 = vmatpush2.msra.mxu0 0.0
        %3393 = vmatprep.subr.mxu0 0.0
        %3394 = vmatpush2.msra.mxu0 0.0
        %3395 = vmatprep.subr.mxu0 0.0
        %3396 = vmatpush2.msra.mxu0 0.0
        %3397 = vmatprep.subr.mxu0 0.0
        %3398 = vmatpush2.msra.mxu0 0.0
        %3399 = vmatprep.subr.mxu0 0.0
        %3400 = vmatpush2.msra.mxu0 0.0
        %3401 = vmatprep.subr.mxu0 0.0
        %3402 = vmatpush2.msra.mxu0 0.0
        %3403 = vmatprep.subr.mxu0 0.0
        %3404 = vmatpush2.msra.mxu0 0.0
        %3405 = vmatprep.subr.mxu0 0.0
        %3406 = vmatpush2.msra.mxu0 0.0
        %3407 = vmatprep.subr.mxu0 0.0
        %3408 = vmatpush2.msra.mxu0 0.0
        %3409 = vmatprep.subr.mxu0 0.0
        %3410 = vmatpush2.msra.mxu0 0.0
        %3411 = vmatprep.subr.mxu0 0.0
        %3412 = vmatpush2.msra.mxu0 0.0
        %3413 = vmatprep.subr.mxu0 0.0
        %3414 = vmatpush2.msra.mxu0 0.0
        %3415 = vmatprep.subr.mxu0 0.0
        %3416 = vmatpush2.msra.mxu0 0.0
        %3417 = vmatprep.subr.mxu0 0.0
        %3418 = vmatpush2.msra.mxu0 0.0
        %3419 = vmatprep.subr.mxu0 0.0
        %3420 = vmatpush2.msra.mxu0 0.0
        %3421 = vmatprep.mubr.f32.mxu0 0.0
        %3422 = vmatmul.mubr.f32.gmra.mxu0 %v3198
        %v3423 = vpop.f32.mrf.mxu0
        %v3424 = vadd.f32 0.0, %v3423
        %v3425 = vpop.f32.mrf.mxu0
        %v3426 = vadd.f32 0.0, %v3425
        %3427 = vmatprep.mubr.f32.mxu0 0.0
        %3428 = vmatmul.mubr.f32.gmra.mxu0 %v3201
        %v3429 = vpop.f32.mrf.mxu0
        %v3430 = vadd.f32 0.0, %v3429
        %v3431 = vpop.f32.mrf.mxu0
        %v3432 = vadd.f32 0.0, %v3431
        %3433 = vdwg.mxu0
        %v3435 = vsel %vm1628, %v2872, 0
        %v3438 = vsel %vm1628, %v2873, 0
        %3440 = vmatprep.subr.mxu0 0.0
        %3441 = vmatpush1.msra.mxu0 0.0
        %3442 = vmatprep.subr.mxu0 0.0
        %3443 = vmatpush1.msra.mxu0 0.0
        %3444 = vmatprep.subr.mxu0 0.0
        %3445 = vmatpush1.msra.mxu0 0.0
        %3446 = vmatprep.subr.mxu0 0.0
        %3447 = vmatpush1.msra.mxu0 0.0
        %3448 = vmatprep.subr.mxu0 0.0
        %3449 = vmatpush1.msra.mxu0 0.0
        %3450 = vmatprep.subr.mxu0 0.0
        %3451 = vmatpush1.msra.mxu0 0.0
        %3452 = vmatprep.subr.mxu0 0.0
        %3453 = vmatpush1.msra.mxu0 0.0
        %3454 = vmatprep.subr.mxu0 0.0
        %3455 = vmatpush1.msra.mxu0 0.0
        %3456 = vmatprep.subr.mxu0 0.0
        %3457 = vmatpush1.msra.mxu0 0.0
        %3458 = vmatprep.subr.mxu0 0.0
        %3459 = vmatpush1.msra.mxu0 0.0
        %3460 = vmatprep.subr.mxu0 0.0
        %3461 = vmatpush1.msra.mxu0 0.0
        %3462 = vmatprep.subr.mxu0 0.0
        %3463 = vmatpush1.msra.mxu0 0.0
        %3464 = vmatprep.subr.mxu0 0.0
        %3465 = vmatpush1.msra.mxu0 0.0
        %3466 = vmatprep.subr.mxu0 0.0
        %3467 = vmatpush1.msra.mxu0 0.0
        %3468 = vmatprep.subr.mxu0 %v3278
        %3469 = vmatpush1.msra.mxu0 %v3276
        %3470 = vmatprep.subr.mxu0 %v3272
        %3471 = vmatpush1.msra.mxu0 %v3270
        %3472 = vmatprep.subr.mxu0 0.0
        %3473 = vmatpush2.msra.mxu0 0.0
        %3474 = vmatprep.subr.mxu0 0.0
        %3475 = vmatpush2.msra.mxu0 0.0
        %3476 = vmatprep.subr.mxu0 0.0
        %3477 = vmatpush2.msra.mxu0 0.0
        %3478 = vmatprep.subr.mxu0 0.0
        %3479 = vmatpush2.msra.mxu0 0.0
        %3480 = vmatprep.subr.mxu0 0.0
        %3481 = vmatpush2.msra.mxu0 0.0
        %3482 = vmatprep.subr.mxu0 0.0
        %3483 = vmatpush2.msra.mxu0 0.0
        %3484 = vmatprep.subr.mxu0 0.0
        %3485 = vmatpush2.msra.mxu0 0.0
        %3486 = vmatprep.subr.mxu0 0.0
        %3487 = vmatpush2.msra.mxu0 0.0
        %3488 = vmatprep.subr.mxu0 0.0
        %3489 = vmatpush2.msra.mxu0 0.0
        %3490 = vmatprep.subr.mxu0 0.0
        %3491 = vmatpush2.msra.mxu0 0.0
        %3492 = vmatprep.subr.mxu0 0.0
        %3493 = vmatpush2.msra.mxu0 0.0
        %3494 = vmatprep.subr.mxu0 0.0
        %3495 = vmatpush2.msra.mxu0 0.0
        %3496 = vmatprep.subr.mxu0 0.0
        %3497 = vmatpush2.msra.mxu0 0.0
        %3498 = vmatprep.subr.mxu0 0.0
        %3499 = vmatpush2.msra.mxu0 0.0
        %3500 = vmatprep.subr.mxu0 0.0
        %3501 = vmatpush2.msra.mxu0 0.0
        %3502 = vmatprep.subr.mxu0 0.0
        %3503 = vmatpush2.msra.mxu0 0.0
        %3504 = vmatprep.mubr.f32.mxu0 0.0
        %3505 = vmatmul.mubr.f32.gmra.mxu0 %v3435
        %v3506 = vpop.f32.mrf.mxu0
        %v3507 = vadd.f32 0.0, %v3506
        %v3508 = vpop.f32.mrf.mxu0
        %v3509 = vadd.f32 0.0, %v3508
        %3510 = vmatprep.mubr.f32.mxu0 0.0
        %3511 = vmatmul.mubr.f32.gmra.mxu0 %v3438
        %v3512 = vpop.f32.mrf.mxu0
        %v3513 = vadd.f32 0.0, %v3512
        %v3514 = vpop.f32.mrf.mxu0
        %v3515 = vadd.f32 0.0, %v3514
        %3516 = vdwg.mxu0
        %3517 = vmatprep.subr.mxu0 0.0
        %3518 = vmatpush1.msra.mxu0 0.0
        %3519 = vmatprep.subr.mxu0 0.0
        %3520 = vmatpush1.msra.mxu0 0.0
        %3521 = vmatprep.subr.mxu0 0.0
        %3522 = vmatpush1.msra.mxu0 0.0
        %3523 = vmatprep.subr.mxu0 0.0
        %3524 = vmatpush1.msra.mxu0 0.0
        %3525 = vmatprep.subr.mxu0 0.0
        %3526 = vmatpush1.msra.mxu0 0.0
        %3527 = vmatprep.subr.mxu0 0.0
        %3528 = vmatpush1.msra.mxu0 0.0
        %3529 = vmatprep.subr.mxu0 0.0
        %3530 = vmatpush1.msra.mxu0 0.0
        %3531 = vmatprep.subr.mxu0 0.0
        %3532 = vmatpush1.msra.mxu0 0.0
        %3533 = vmatprep.subr.mxu0 0.0
        %3534 = vmatpush1.msra.mxu0 0.0
        %3535 = vmatprep.subr.mxu0 0.0
        %3536 = vmatpush1.msra.mxu0 0.0
        %3537 = vmatprep.subr.mxu0 0.0
        %3538 = vmatpush1.msra.mxu0 0.0
        %3539 = vmatprep.subr.mxu0 0.0
        %3540 = vmatpush1.msra.mxu0 0.0
        %3541 = vmatprep.subr.mxu0 0.0
        %3542 = vmatpush1.msra.mxu0 0.0
        %3543 = vmatprep.subr.mxu0 0.0
        %3544 = vmatpush1.msra.mxu0 0.0
        %3545 = vmatprep.subr.mxu0 %v3355
        %3546 = vmatpush1.msra.mxu0 %v3353
        %3547 = vmatprep.subr.mxu0 %v3349
        %3548 = vmatpush1.msra.mxu0 %v3347
        %3549 = vmatprep.subr.mxu0 0.0
        %3550 = vmatpush2.msra.mxu0 0.0
        %3551 = vmatprep.subr.mxu0 0.0
        %3552 = vmatpush2.msra.mxu0 0.0
        %3553 = vmatprep.subr.mxu0 0.0
        %3554 = vmatpush2.msra.mxu0 0.0
        %3555 = vmatprep.subr.mxu0 0.0
        %3556 = vmatpush2.msra.mxu0 0.0
        %3557 = vmatprep.subr.mxu0 0.0
        %3558 = vmatpush2.msra.mxu0 0.0
        %3559 = vmatprep.subr.mxu0 0.0
        %3560 = vmatpush2.msra.mxu0 0.0
        %3561 = vmatprep.subr.mxu0 0.0
        %3562 = vmatpush2.msra.mxu0 0.0
        %3563 = vmatprep.subr.mxu0 0.0
        %3564 = vmatpush2.msra.mxu0 0.0
        %3565 = vmatprep.subr.mxu0 0.0
        %3566 = vmatpush2.msra.mxu0 0.0
        %3567 = vmatprep.subr.mxu0 0.0
        %3568 = vmatpush2.msra.mxu0 0.0
        %3569 = vmatprep.subr.mxu0 0.0
        %3570 = vmatpush2.msra.mxu0 0.0
        %3571 = vmatprep.subr.mxu0 0.0
        %3572 = vmatpush2.msra.mxu0 0.0
        %3573 = vmatprep.subr.mxu0 0.0
        %3574 = vmatpush2.msra.mxu0 0.0
        %3575 = vmatprep.subr.mxu0 0.0
        %3576 = vmatpush2.msra.mxu0 0.0
        %3577 = vmatprep.subr.mxu0 0.0
        %3578 = vmatpush2.msra.mxu0 0.0
        %3579 = vmatprep.subr.mxu0 0.0
        %3580 = vmatpush2.msra.mxu0 0.0
        %3581 = vmatprep.mubr.f32.mxu0 0.0
        %3582 = vmatmul.mubr.f32.gmra.mxu0 %v3435
        %v3583 = vpop.f32.mrf.mxu0
        %v3584 = vadd.f32 0.0, %v3583
        %v3585 = vpop.f32.mrf.mxu0
        %v3586 = vadd.f32 0.0, %v3585
        %3587 = vmatprep.mubr.f32.mxu0 0.0
        %3588 = vmatmul.mubr.f32.gmra.mxu0 %v3438
        %v3589 = vpop.f32.mrf.mxu0
        %v3590 = vadd.f32 0.0, %v3589
        %v3591 = vpop.f32.mrf.mxu0
        %v3592 = vadd.f32 0.0, %v3591
        %3593 = vdwg.mxu0
        %3594 = vmatprep.subr.mxu0 0.0
        %3595 = vmatpush1.msra.mxu0 0.0
        %3596 = vmatprep.subr.mxu0 0.0
        %3597 = vmatpush1.msra.mxu0 0.0
        %3598 = vmatprep.subr.mxu0 0.0
        %3599 = vmatpush1.msra.mxu0 0.0
        %3600 = vmatprep.subr.mxu0 0.0
        %3601 = vmatpush1.msra.mxu0 0.0
        %3602 = vmatprep.subr.mxu0 0.0
        %3603 = vmatpush1.msra.mxu0 0.0
        %3604 = vmatprep.subr.mxu0 0.0
        %3605 = vmatpush1.msra.mxu0 0.0
        %3606 = vmatprep.subr.mxu0 0.0
        %3607 = vmatpush1.msra.mxu0 0.0
        %3608 = vmatprep.subr.mxu0 0.0
        %3609 = vmatpush1.msra.mxu0 0.0
        %3610 = vmatprep.subr.mxu0 0.0
        %3611 = vmatpush1.msra.mxu0 0.0
        %3612 = vmatprep.subr.mxu0 0.0
        %3613 = vmatpush1.msra.mxu0 0.0
        %3614 = vmatprep.subr.mxu0 0.0
        %3615 = vmatpush1.msra.mxu0 0.0
        %3616 = vmatprep.subr.mxu0 0.0
        %3617 = vmatpush1.msra.mxu0 0.0
        %3618 = vmatprep.subr.mxu0 0.0
        %3619 = vmatpush1.msra.mxu0 0.0
        %3620 = vmatprep.subr.mxu0 0.0
        %3621 = vmatpush1.msra.mxu0 0.0
        %3622 = vmatprep.subr.mxu0 %v3432
        %3623 = vmatpush1.msra.mxu0 %v3430
        %3624 = vmatprep.subr.mxu0 %v3426
        %3625 = vmatpush1.msra.mxu0 %v3424
        %3626 = vmatprep.subr.mxu0 0.0
        %3627 = vmatpush2.msra.mxu0 0.0
        %3628 = vmatprep.subr.mxu0 0.0
        %3629 = vmatpush2.msra.mxu0 0.0
        %3630 = vmatprep.subr.mxu0 0.0
        %3631 = vmatpush2.msra.mxu0 0.0
        %3632 = vmatprep.subr.mxu0 0.0
        %3633 = vmatpush2.msra.mxu0 0.0
        %3634 = vmatprep.subr.mxu0 0.0
        %3635 = vmatpush2.msra.mxu0 0.0
        %3636 = vmatprep.subr.mxu0 0.0
        %3637 = vmatpush2.msra.mxu0 0.0
        %3638 = vmatprep.subr.mxu0 0.0
        %3639 = vmatpush2.msra.mxu0 0.0
        %3640 = vmatprep.subr.mxu0 0.0
        %3641 = vmatpush2.msra.mxu0 0.0
        %3642 = vmatprep.subr.mxu0 0.0
        %3643 = vmatpush2.msra.mxu0 0.0
        %3644 = vmatprep.subr.mxu0 0.0
        %3645 = vmatpush2.msra.mxu0 0.0
        %3646 = vmatprep.subr.mxu0 0.0
        %3647 = vmatpush2.msra.mxu0 0.0
        %3648 = vmatprep.subr.mxu0 0.0
        %3649 = vmatpush2.msra.mxu0 0.0
        %3650 = vmatprep.subr.mxu0 0.0
        %3651 = vmatpush2.msra.mxu0 0.0
        %3652 = vmatprep.subr.mxu0 0.0
        %3653 = vmatpush2.msra.mxu0 0.0
        %3654 = vmatprep.subr.mxu0 0.0
        %3655 = vmatpush2.msra.mxu0 0.0
        %3656 = vmatprep.subr.mxu0 0.0
        %3657 = vmatpush2.msra.mxu0 0.0
        %3658 = vmatprep.mubr.f32.mxu0 0.0
        %3659 = vmatmul.mubr.f32.gmra.mxu0 %v3435
        %v3660 = vpop.f32.mrf.mxu0
        %v3661 = vadd.f32 0.0, %v3660
        %v3662 = vpop.f32.mrf.mxu0
        %v3663 = vadd.f32 0.0, %v3662
        %3664 = vmatprep.mubr.f32.mxu0 0.0
        %3665 = vmatmul.mubr.f32.gmra.mxu0 %v3438
        %v3666 = vpop.f32.mrf.mxu0
        %v3667 = vadd.f32 0.0, %v3666
        %v3668 = vpop.f32.mrf.mxu0
        %v3669 = vadd.f32 0.0, %v3668
        %3670 = vdwg.mxu0
        %v3671 = vmul.f32 %v3270, %v3507
        %v3672 = vmul.f32 %v3272, %v3509
        %v3673 = vmul.f32 %v3276, %v3513
        %v3674 = vmul.f32 %v3278, %v3515
        %v3675 = vmul.f32 %v3347, %v3584
        %v3676 = vmul.f32 %v3349, %v3586
        %v3677 = vmul.f32 %v3353, %v3590
        %v3678 = vmul.f32 %v3355, %v3592
        %v3679 = vadd.f32 %v3671, %v3675
        %v3680 = vadd.f32 %v3672, %v3676
        %v3681 = vadd.f32 %v3673, %v3677
        %v3682 = vadd.f32 %v3674, %v3678
        %v3683 = vmul.f32 %v3424, %v3661
        %v3684 = vmul.f32 %v3426, %v3663
        %v3685 = vmul.f32 %v3430, %v3667
        %v3686 = vmul.f32 %v3432, %v3669
        %v3687 = vadd.f32 %v3679, %v3683
        %v3688 = vadd.f32 %v3680, %v3684
        %v3689 = vadd.f32 %v3681, %v3685
        %v3690 = vadd.f32 %v3682, %v3686
        %v3691 = vmul.f32 %v3507, %v3507
        %v3692 = vmul.f32 %v3509, %v3509
        %v3693 = vmul.f32 %v3513, %v3513
        %v3694 = vmul.f32 %v3515, %v3515
        %v3695 = vmul.f32 %v3584, %v3584
        %v3696 = vmul.f32 %v3586, %v3586
        %v3697 = vmul.f32 %v3590, %v3590
        %v3698 = vmul.f32 %v3592, %v3592
        %v3699 = vadd.f32 %v3691, %v3695
        %v3700 = vadd.f32 %v3692, %v3696
        %v3701 = vadd.f32 %v3693, %v3697
        %v3702 = vadd.f32 %v3694, %v3698
        %v3703 = vmul.f32 %v3661, %v3661
        %v3704 = vmul.f32 %v3663, %v3663
        %v3705 = vmul.f32 %v3667, %v3667
        %v3706 = vmul.f32 %v3669, %v3669
        %v3707 = vadd.f32 %v3699, %v3703
        %v3708 = vadd.f32 %v3700, %v3704
        %v3709 = vadd.f32 %v3701, %v3705
        %v3710 = vadd.f32 %v3702, %v3706
        %v3711 = vadd.f32 %v3707, 1e-06
        %v3712 = vadd.f32 %v3708, 1e-06
        %v3713 = vadd.f32 %v3709, 1e-06
        %v3714 = vadd.f32 %v3710, 1e-06
        %vm3715 = vcmp.lt.f32.partialorder %v3687, 0.0
        %vm3716 = vcmp.lt.f32.partialorder %v3688, 0.0
        %vm3717 = vcmp.lt.f32.partialorder %v3689, 0.0
        %vm3718 = vcmp.lt.f32.partialorder %v3690, 0.0
        %v3719 = vrcp.pop %v3711
        %v3720 = vrcp.pop %v3712
        %v3721 = vrcp.pop %v3713
        %v3722 = vrcp.pop %v3714
        %v3723 = vmul.f32 %v3687, %v3719
        %v3724 = vmul.f32 %v3688, %v3720
        %v3725 = vmul.f32 %v3689, %v3721
        %v3726 = vmul.f32 %v3690, %v3722
        %v3727 = vsel %vm3715, %v3723, 0.0
        %v3728 = vsel %vm3716, %v3724, 0.0
        %v3729 = vsel %vm3717, %v3725, 0.0
        %v3730 = vsel %vm3718, %v3726, 0.0
        %v3731 = vmul.f32 %v3727, %v3507
        %v3732 = vmul.f32 %v3728, %v3509
        %v3733 = vmul.f32 %v3727, %v3584
        %v3734 = vmul.f32 %v3728, %v3586
        %v3735 = vmul.f32 %v3727, %v3661
        %v3736 = vmul.f32 %v3728, %v3663
        %v3737 = vmul.f32 %v3729, %v3513
        %v3738 = vmul.f32 %v3730, %v3515
        %v3739 = vmul.f32 %v3729, %v3590
        %v3740 = vmul.f32 %v3730, %v3592
        %v3741 = vmul.f32 %v3729, %v3667
        %v3742 = vmul.f32 %v3730, %v3669
        %v3743 = vsub.f32 %v3270, %v3731
        %v3744 = vsub.f32 %v3272, %v3732
        %v3745 = vsub.f32 %v3347, %v3733
        %v3746 = vsub.f32 %v3349, %v3734
        %v3747 = vsub.f32 %v3424, %v3735
        %v3748 = vsub.f32 %v3426, %v3736
        %v3749 = vsub.f32 %v3276, %v3737
        %v3750 = vsub.f32 %v3278, %v3738
        %v3751 = vsub.f32 %v3353, %v3739
        %v3752 = vsub.f32 %v3355, %v3740
        %v3753 = vsub.f32 %v3430, %v3741
        %v3754 = vsub.f32 %v3432, %v3742
        %v3756 = vsel %vm1628, %v2874, 0
        %v3759 = vsel %vm1628, %v2875, 0
        %3761 = vmatprep.subr.mxu0 0.0
        %3762 = vmatpush1.msra.mxu0 0.0
        %3763 = vmatprep.subr.mxu0 0.0
        %3764 = vmatpush1.msra.mxu0 0.0
        %3765 = vmatprep.subr.mxu0 0.0
        %3766 = vmatpush1.msra.mxu0 0.0
        %3767 = vmatprep.subr.mxu0 0.0
        %3768 = vmatpush1.msra.mxu0 0.0
        %3769 = vmatprep.subr.mxu0 0.0
        %3770 = vmatpush1.msra.mxu0 0.0
        %3771 = vmatprep.subr.mxu0 0.0
        %3772 = vmatpush1.msra.mxu0 0.0
        %3773 = vmatprep.subr.mxu0 0.0
        %3774 = vmatpush1.msra.mxu0 0.0
        %3775 = vmatprep.subr.mxu0 0.0
        %3776 = vmatpush1.msra.mxu0 0.0
        %3777 = vmatprep.subr.mxu0 0.0
        %3778 = vmatpush1.msra.mxu0 0.0
        %3779 = vmatprep.subr.mxu0 0.0
        %3780 = vmatpush1.msra.mxu0 0.0
        %3781 = vmatprep.subr.mxu0 0.0
        %3782 = vmatpush1.msra.mxu0 0.0
        %3783 = vmatprep.subr.mxu0 0.0
        %3784 = vmatpush1.msra.mxu0 0.0
        %3785 = vmatprep.subr.mxu0 0.0
        %3786 = vmatpush1.msra.mxu0 0.0
        %3787 = vmatprep.subr.mxu0 0.0
        %3788 = vmatpush1.msra.mxu0 0.0
        %3789 = vmatprep.subr.mxu0 %v3750
        %3790 = vmatpush1.msra.mxu0 %v3749
        %3791 = vmatprep.subr.mxu0 %v3744
        %3792 = vmatpush1.msra.mxu0 %v3743
        %3793 = vmatprep.subr.mxu0 0.0
        %3794 = vmatpush2.msra.mxu0 0.0
        %3795 = vmatprep.subr.mxu0 0.0
        %3796 = vmatpush2.msra.mxu0 0.0
        %3797 = vmatprep.subr.mxu0 0.0
        %3798 = vmatpush2.msra.mxu0 0.0
        %3799 = vmatprep.subr.mxu0 0.0
        %3800 = vmatpush2.msra.mxu0 0.0
        %3801 = vmatprep.subr.mxu0 0.0
        %3802 = vmatpush2.msra.mxu0 0.0
        %3803 = vmatprep.subr.mxu0 0.0
        %3804 = vmatpush2.msra.mxu0 0.0
        %3805 = vmatprep.subr.mxu0 0.0
        %3806 = vmatpush2.msra.mxu0 0.0
        %3807 = vmatprep.subr.mxu0 0.0
        %3808 = vmatpush2.msra.mxu0 0.0
        %3809 = vmatprep.subr.mxu0 0.0
        %3810 = vmatpush2.msra.mxu0 0.0
        %3811 = vmatprep.subr.mxu0 0.0
        %3812 = vmatpush2.msra.mxu0 0.0
        %3813 = vmatprep.subr.mxu0 0.0
        %3814 = vmatpush2.msra.mxu0 0.0
        %3815 = vmatprep.subr.mxu0 0.0
        %3816 = vmatpush2.msra.mxu0 0.0
        %3817 = vmatprep.subr.mxu0 0.0
        %3818 = vmatpush2.msra.mxu0 0.0
        %3819 = vmatprep.subr.mxu0 0.0
        %3820 = vmatpush2.msra.mxu0 0.0
        %3821 = vmatprep.subr.mxu0 0.0
        %3822 = vmatpush2.msra.mxu0 0.0
        %3823 = vmatprep.subr.mxu0 0.0
        %3824 = vmatpush2.msra.mxu0 0.0
        %3825 = vmatprep.mubr.f32.mxu0 0.0
        %3826 = vmatmul.mubr.f32.gmra.mxu0 %v3756
        %v3827 = vpop.f32.mrf.mxu0
        %v3828 = vadd.f32 0.0, %v3827
        %v3829 = vpop.f32.mrf.mxu0
        %v3830 = vadd.f32 0.0, %v3829
        %3831 = vmatprep.mubr.f32.mxu0 0.0
        %3832 = vmatmul.mubr.f32.gmra.mxu0 %v3759
        %v3833 = vpop.f32.mrf.mxu0
        %v3834 = vadd.f32 0.0, %v3833
        %v3835 = vpop.f32.mrf.mxu0
        %v3836 = vadd.f32 0.0, %v3835
        %3837 = vdwg.mxu0
        %3838 = vmatprep.subr.mxu0 0.0
        %3839 = vmatpush1.msra.mxu0 0.0
        %3840 = vmatprep.subr.mxu0 0.0
        %3841 = vmatpush1.msra.mxu0 0.0
        %3842 = vmatprep.subr.mxu0 0.0
        %3843 = vmatpush1.msra.mxu0 0.0
        %3844 = vmatprep.subr.mxu0 0.0
        %3845 = vmatpush1.msra.mxu0 0.0
        %3846 = vmatprep.subr.mxu0 0.0
        %3847 = vmatpush1.msra.mxu0 0.0
        %3848 = vmatprep.subr.mxu0 0.0
        %3849 = vmatpush1.msra.mxu0 0.0
        %3850 = vmatprep.subr.mxu0 0.0
        %3851 = vmatpush1.msra.mxu0 0.0
        %3852 = vmatprep.subr.mxu0 0.0
        %3853 = vmatpush1.msra.mxu0 0.0
        %3854 = vmatprep.subr.mxu0 0.0
        %3855 = vmatpush1.msra.mxu0 0.0
        %3856 = vmatprep.subr.mxu0 0.0
        %3857 = vmatpush1.msra.mxu0 0.0
        %3858 = vmatprep.subr.mxu0 0.0
        %3859 = vmatpush1.msra.mxu0 0.0
        %3860 = vmatprep.subr.mxu0 0.0
        %3861 = vmatpush1.msra.mxu0 0.0
        %3862 = vmatprep.subr.mxu0 0.0
        %3863 = vmatpush1.msra.mxu0 0.0
        %3864 = vmatprep.subr.mxu0 0.0
        %3865 = vmatpush1.msra.mxu0 0.0
        %3866 = vmatprep.subr.mxu0 %v3752
        %3867 = vmatpush1.msra.mxu0 %v3751
        %3868 = vmatprep.subr.mxu0 %v3746
        %3869 = vmatpush1.msra.mxu0 %v3745
        %3870 = vmatprep.subr.mxu0 0.0
        %3871 = vmatpush2.msra.mxu0 0.0
        %3872 = vmatprep.subr.mxu0 0.0
        %3873 = vmatpush2.msra.mxu0 0.0
        %3874 = vmatprep.subr.mxu0 0.0
        %3875 = vmatpush2.msra.mxu0 0.0
        %3876 = vmatprep.subr.mxu0 0.0
        %3877 = vmatpush2.msra.mxu0 0.0
        %3878 = vmatprep.subr.mxu0 0.0
        %3879 = vmatpush2.msra.mxu0 0.0
        %3880 = vmatprep.subr.mxu0 0.0
        %3881 = vmatpush2.msra.mxu0 0.0
        %3882 = vmatprep.subr.mxu0 0.0
        %3883 = vmatpush2.msra.mxu0 0.0
        %3884 = vmatprep.subr.mxu0 0.0
        %3885 = vmatpush2.msra.mxu0 0.0
        %3886 = vmatprep.subr.mxu0 0.0
        %3887 = vmatpush2.msra.mxu0 0.0
        %3888 = vmatprep.subr.mxu0 0.0
        %3889 = vmatpush2.msra.mxu0 0.0
        %3890 = vmatprep.subr.mxu0 0.0
        %3891 = vmatpush2.msra.mxu0 0.0
        %3892 = vmatprep.subr.mxu0 0.0
        %3893 = vmatpush2.msra.mxu0 0.0
        %3894 = vmatprep.subr.mxu0 0.0
        %3895 = vmatpush2.msra.mxu0 0.0
        %3896 = vmatprep.subr.mxu0 0.0
        %3897 = vmatpush2.msra.mxu0 0.0
        %3898 = vmatprep.subr.mxu0 0.0
        %3899 = vmatpush2.msra.mxu0 0.0
        %3900 = vmatprep.subr.mxu0 0.0
        %3901 = vmatpush2.msra.mxu0 0.0
        %3902 = vmatprep.mubr.f32.mxu0 0.0
        %3903 = vmatmul.mubr.f32.gmra.mxu0 %v3756
        %v3904 = vpop.f32.mrf.mxu0
        %v3905 = vadd.f32 0.0, %v3904
        %v3906 = vpop.f32.mrf.mxu0
        %v3907 = vadd.f32 0.0, %v3906
        %3908 = vmatprep.mubr.f32.mxu0 0.0
        %3909 = vmatmul.mubr.f32.gmra.mxu0 %v3759
        %v3910 = vpop.f32.mrf.mxu0
        %v3911 = vadd.f32 0.0, %v3910
        %v3912 = vpop.f32.mrf.mxu0
        %v3913 = vadd.f32 0.0, %v3912
        %3914 = vdwg.mxu0
        %3915 = vmatprep.subr.mxu0 0.0
        %3916 = vmatpush1.msra.mxu0 0.0
        %3917 = vmatprep.subr.mxu0 0.0
        %3918 = vmatpush1.msra.mxu0 0.0
        %3919 = vmatprep.subr.mxu0 0.0
        %3920 = vmatpush1.msra.mxu0 0.0
        %3921 = vmatprep.subr.mxu0 0.0
        %3922 = vmatpush1.msra.mxu0 0.0
        %3923 = vmatprep.subr.mxu0 0.0
        %3924 = vmatpush1.msra.mxu0 0.0
        %3925 = vmatprep.subr.mxu0 0.0
        %3926 = vmatpush1.msra.mxu0 0.0
        %3927 = vmatprep.subr.mxu0 0.0
        %3928 = vmatpush1.msra.mxu0 0.0
        %3929 = vmatprep.subr.mxu0 0.0
        %3930 = vmatpush1.msra.mxu0 0.0
        %3931 = vmatprep.subr.mxu0 0.0
        %3932 = vmatpush1.msra.mxu0 0.0
        %3933 = vmatprep.subr.mxu0 0.0
        %3934 = vmatpush1.msra.mxu0 0.0
        %3935 = vmatprep.subr.mxu0 0.0
        %3936 = vmatpush1.msra.mxu0 0.0
        %3937 = vmatprep.subr.mxu0 0.0
        %3938 = vmatpush1.msra.mxu0 0.0
        %3939 = vmatprep.subr.mxu0 0.0
        %3940 = vmatpush1.msra.mxu0 0.0
        %3941 = vmatprep.subr.mxu0 0.0
        %3942 = vmatpush1.msra.mxu0 0.0
        %3943 = vmatprep.subr.mxu0 %v3754
        %3944 = vmatpush1.msra.mxu0 %v3753
        %3945 = vmatprep.subr.mxu0 %v3748
        %3946 = vmatpush1.msra.mxu0 %v3747
        %3947 = vmatprep.subr.mxu0 0.0
        %3948 = vmatpush2.msra.mxu0 0.0
        %3949 = vmatprep.subr.mxu0 0.0
        %3950 = vmatpush2.msra.mxu0 0.0
        %3951 = vmatprep.subr.mxu0 0.0
        %3952 = vmatpush2.msra.mxu0 0.0
        %3953 = vmatprep.subr.mxu0 0.0
        %3954 = vmatpush2.msra.mxu0 0.0
        %3955 = vmatprep.subr.mxu0 0.0
        %3956 = vmatpush2.msra.mxu0 0.0
        %3957 = vmatprep.subr.mxu0 0.0
        %3958 = vmatpush2.msra.mxu0 0.0
        %3959 = vmatprep.subr.mxu0 0.0
        %3960 = vmatpush2.msra.mxu0 0.0
        %3961 = vmatprep.subr.mxu0 0.0
        %3962 = vmatpush2.msra.mxu0 0.0
        %3963 = vmatprep.subr.mxu0 0.0
        %3964 = vmatpush2.msra.mxu0 0.0
        %3965 = vmatprep.subr.mxu0 0.0
        %3966 = vmatpush2.msra.mxu0 0.0
        %3967 = vmatprep.subr.mxu0 0.0
        %3968 = vmatpush2.msra.mxu0 0.0
        %3969 = vmatprep.subr.mxu0 0.0
        %3970 = vmatpush2.msra.mxu0 0.0
        %3971 = vmatprep.subr.mxu0 0.0
        %3972 = vmatpush2.msra.mxu0 0.0
        %3973 = vmatprep.subr.mxu0 0.0
        %3974 = vmatpush2.msra.mxu0 0.0
        %3975 = vmatprep.subr.mxu0 0.0
        %3976 = vmatpush2.msra.mxu0 0.0
        %3977 = vmatprep.subr.mxu0 0.0
        %3978 = vmatpush2.msra.mxu0 0.0
        %3979 = vmatprep.mubr.f32.mxu0 0.0
        %3980 = vmatmul.mubr.f32.gmra.mxu0 %v3756
        %v3981 = vpop.f32.mrf.mxu0
        %v3982 = vadd.f32 0.0, %v3981
        %v3983 = vpop.f32.mrf.mxu0
        %v3984 = vadd.f32 0.0, %v3983
        %3985 = vmatprep.mubr.f32.mxu0 0.0
        %3986 = vmatmul.mubr.f32.gmra.mxu0 %v3759
        %v3987 = vpop.f32.mrf.mxu0
        %v3988 = vadd.f32 0.0, %v3987
        %v3989 = vpop.f32.mrf.mxu0
        %v3990 = vadd.f32 0.0, %v3989
        %3991 = vdwg.mxu0
        %v3992 = vadd.f32 %v2710, %v3828
        %v3993 = vadd.f32 %v2712, %v3830
        %v3994 = vadd.f32 %v2781, %v3905
        %v3995 = vadd.f32 %v2783, %v3907
        %v3996 = vadd.f32 %v2852, %v3982
        %v3997 = vadd.f32 %v2854, %v3984
        %v3998 = vadd.f32 %v2859, %v3834
        %v3999 = vadd.f32 %v2859, %v3836
        %v4000 = vadd.f32 %v2863, %v3911
        %v4001 = vadd.f32 %v2863, %v3913
        %v4002 = vadd.f32 %v2867, %v3988
        %v4003 = vadd.f32 %v2867, %v3990
        %4004 = vst [vmem:[%s643] sm:$0xff] %v3992
        %4005 = vst [vmem:[%s643 + $0x8] sm:$0xff] %v3993
        %4006 = vst [vmem:[%s643 + $0x10] sm:$0xff] %v3994
        %4007 = vst [vmem:[%s643 + $0x18] sm:$0xff] %v3995
        %4008 = vst [vmem:[%s643 + $0x20] sm:$0xff] %v3996
        %4009 = vst [vmem:[%s643 + $0x28] sm:$0xff] %v3997
        %4010 = vst [vmem:[%s643 + $0x30] sm:$0xff] %v3998
        %4011 = vst [vmem:[%s643 + $0x38] sm:$0xff] %v3999
        %4012 = vst [vmem:[%s643 + $0x40] sm:$0xff] %v4000
        %4013 = vst [vmem:[%s643 + $0x48] sm:$0xff] %v4001
        %4014 = vst [vmem:[%s643 + $0x50] sm:$0xff] %v4002
        %4015 = vst [vmem:[%s643 + $0x58] sm:$0xff] %v4003
        %p4016 = scmp.lt.s32.totalorder %s34, 1
        %s4017 = scalar_select %p4016, %s34, 1
        %s4018 = smul.addr %s4017, 12
        %s4019 = smul.addr %s4018, 8
        %s4020 = scalar_lea.vmem %s14, %s4019
        // Predicated region
        $region129: #{vn_resnet_pointnet_forward.1} parent=75 // pred_check
          %p4021 = pneg %p351
        $region130: #{vn_resnet_pointnet_forward.1} parent=75 // pred_check_branch
          %4023 = sbr.rel (%p4021) target = $region132
        $region131: #{vn_resnet_pointnet_forward.1} parent=75 // pred_region
          _
        $region132: #{vn_resnet_pointnet_forward.1} parent=75 // pred_fallthru
          _
      $region76: #{vn_resnet_pointnet_forward.1} parent=5 // pred_fallthru
        _
      %p4024 = scmp.le.s32.totalorder 2, %s29
      // Predicated region
      $region133: #{vn_resnet_pointnet_forward.1} parent=5 // pred_check
        %p4025 = pneg %p4024
      $region134: #{vn_resnet_pointnet_forward.1} parent=5 // pred_check_branch
        %4027 = sbr.rel (%p4025) target = $region136
      $region135: #{vn_resnet_pointnet_forward.1} parent=5 // pred_region
        %s4028 = ssub.s32 %s29, 2
        // Predicated region
        $region137: #{vn_resnet_pointnet_forward.1} parent=135 // pred_check
          %p4029 = pneg %p357
        $region138: #{vn_resnet_pointnet_forward.1} parent=135 // pred_check_branch
          %4031 = sbr.rel (%p4029) target = $region140
        $region139: #{vn_resnet_pointnet_forward.1} parent=135 // pred_region
          %p4032 = scmp.lt.s32.totalorder %s35, 1
          %s4033 = scalar_select %p4032, %s35, 1
          %s4034 = smul.addr %s4033, 12
          %s4035 = smul.addr %s4034, 8
          %s4036 = scalar_lea.vmem %s14, %s4035
        $region140: #{vn_resnet_pointnet_forward.1} parent=135 // pred_fallthru
          _
      $region136: #{vn_resnet_pointnet_forward.1} parent=5 // pred_fallthru
        _
    $region6: #{vn_resnet_pointnet_forward.1} parent=1 // loop_footer
      %s33 = sadd.s32 1, %s29
    $region7: #{vn_resnet_pointnet_forward.1} parent=1 // loop_footer_branch
      %28 = sbr.rel target = $region3
    $region8: #{vn_resnet_pointnet_forward.1} parent=1 // loop_exit
      _
    %4037 = vsyncpa [#allocation3], 1
    %s4038 = scalar_lea.sflag [#allocation3], 1
    %4039 = vsyncpa %s4038, 1
    %4040 = vsyncpa [#allocation5], 1
    %4041 = vsyncpa [#allocation8], 1
    %4042 = vsyncpa [#allocation11], 1
    %4043 = vsyncpa [#allocation14], 1
    %4044 = vsyncpa [#allocation17], 1
    %4045 = vsyncpa [#allocation20], 1

</llo_original>
